<compile_context>
chip_gen: v7x
topology: tpu7x:2x2x1
jax: 0.10.0
libtpu: 0.0.40
codegen_flags: <defaults>
</compile_context>

<pallas_src>
import functools

import jax
import jax.numpy as jnp
from jax.experimental import pallas as pl
from jax.experimental.pallas import tpu as pltpu

C_PAD = 32                       # padded channel count (sublane dim), all layers
C_IN_HBM = 8                     # RGBD channels padded to 8 for the HBM input
K_PAD = 9 * C_PAD                # folded 3x3 taps * padded channels (MXU K depth)
AP_MAP = (0, 1, 2, 16, 17, 18)   # amp -> rows 0..2, phs -> rows 16..18 (aligned)


# ----------------------------------------------------------------------------
# Fused 6-layer conv-stack kernel (one grid step per batch element)
# ----------------------------------------------------------------------------
def _generator_kernel(x_ref, w_ref, b_ref, mask_ref, o_ref, *, S, Wp, amp_scale):
    # x_ref   : (1, 8, S)    bf16  RGBD, flat zero-haloed spatial in lanes
    # w_ref   : (6, 32, 288) bf16  packed per-layer weights (Cout, 9*Cin)
    # b_ref   : (6, 32, 1)   f32   packed per-layer biases
    # mask_ref: (1, S)       f32   1.0 at interior pixels, 0.0 at halo / tail
    # o_ref   : (1, 8, S)    f32   final POH phase in rows 0..2
    # Hoist the mask broadcast once (JAX does not CSE broadcast_in_dim).
    mask = jnp.broadcast_to(mask_ref[...], (C_PAD, S))            # (32, S)

    def conv_acc(h, layer):
        # h: (32, S) f32 with zero halo.  Returns 3x3-conv accum (32, S) f32.
        slabs = []
        for dy in range(3):
            for dx in range(3):
                off = (dy - 1) * Wp + (dx - 1)          # flat tap offset
                sh = (-off) % S                         # static lane-roll amount
                s = pltpu.roll(h, sh, axis=1) if sh else h   # XLU rotate
                slabs.append(s.astype(jnp.bfloat16))
        k = jnp.concatenate(slabs, axis=0)              # (9*32, S) bf16, K=288
        return jnp.dot(w_ref[layer], k,
                       preferred_element_type=jnp.float32) + b_ref[layer]

    h = jnp.concatenate(
        [x_ref[0].astype(jnp.float32),
         jnp.zeros((C_PAD - C_IN_HBM, S), jnp.float32)], axis=0)  # (32, S)

    # --- part1: RGBD2AP ---
    h = jnp.maximum(conv_acc(h, 0), 0.0) * mask
    h = jnp.maximum(conv_acc(h, 1), 0.0) * mask
    a = conv_acc(h, 2)
    h = jnp.concatenate(                                 # aligned 16-row halves
        [amp_scale * jax.nn.sigmoid(a[:C_PAD // 2]),     # amplitude rows 0..15
         jnp.pi * jnp.tanh(a[C_PAD // 2:])],             # phase rows 16..31
        axis=0) * mask

    # --- part2: AP2POH (conv stack; ASM propagation omitted, see TODO above) ---
    h = jnp.maximum(conv_acc(h, 3), 0.0) * mask
    h = jnp.maximum(conv_acc(h, 4), 0.0) * mask
    a = conv_acc(h, 5)
    o_ref[0] = (jnp.pi * jnp.tanh(a[:8])) * mask[:8]     # rows 0..2 are real


# ----------------------------------------------------------------------------
# Forward wrapper
# ----------------------------------------------------------------------------
def generator_forward(packed_w, packed_b, rgbd_nchw, amplitude_scaler=1.1):
    """rgbd_nchw: (N, 4, H, W) f32  ->  phase-only hologram (N, 3, H, W) f32."""
    N, C, H, W = rgbd_nchw.shape
    Hp, Wp = H + 2, W + 2
    S_img = Hp * Wp
    S = ((S_img + 127) // 128) * 128            # lane-dense flat spatial length

    # One-time prep (replaces six per-layer jnp.pads + slice/concat HBM trips):
    # channel pad 4->8, 1-pixel zero halo, flatten spatial, bf16 for HBM/MXU.
    x = jnp.pad(rgbd_nchw, ((0, 0), (0, C_IN_HBM - C), (1, 1), (1, 1)))
    x = x.reshape(N, C_IN_HBM, S_img)
    x = jnp.pad(x, ((0, 0), (0, 0), (0, S - S_img))).astype(jnp.bfloat16)
    mask = jnp.pad(jnp.pad(jnp.ones((H, W), jnp.float32), 1).reshape(1, S_img),
                   ((0, 0), (0, S - S_img)))

    kern = functools.partial(_generator_kernel, S=S, Wp=Wp,
                             amp_scale=amplitude_scaler)
    out = pl.pallas_call(
        kern,
        out_shape=jax.ShapeDtypeStruct((N, 8, S), jnp.float32),
        grid=(N,),
        in_specs=[
            pl.BlockSpec((1, C_IN_HBM, S), lambda n: (n, 0, 0)),
            pl.BlockSpec((6, C_PAD, K_PAD), lambda n: (0, 0, 0)),  # VMEM-resident
            pl.BlockSpec((6, C_PAD, 1), lambda n: (0, 0, 0)),
            pl.BlockSpec((1, S), lambda n: (0, 0)),
        ],
        out_specs=pl.BlockSpec((1, 8, S), lambda n: (n, 0, 0)),
        compiler_params=pltpu.CompilerParams(
            dimension_semantics=("parallel",)),        # shard batch over cores
    )(x, packed_w, packed_b, mask)

    # Un-flatten / un-pad the small final output.
    return out[:, :, :S_img].reshape(N, 8, Hp, Wp)[:, :3, 1:-1, 1:-1]


# ----------------------------------------------------------------------------
# Deterministic parameter construction + packing
# ----------------------------------------------------------------------------
def _init_conv(key, cin, cout):
    kw, kb = jax.random.split(key)
    fan_in = 3 * 3 * cin
    w = jax.random.normal(kw, (3, 3, cin, cout), jnp.float32) * jnp.sqrt(2.0 / fan_in)
    b = jax.random.normal(kb, (cout,), jnp.float32) * 0.01
    return w, b


def make_generator_params(key, hidden=32):
    assert hidden <= C_PAD
    ks = jax.random.split(key, 6)
    return {
        # part1: RGBD2AP  (4 -> hidden -> hidden -> 6)
        "p1_c1": _init_conv(ks[0], 4, hidden),
        "p1_c2": _init_conv(ks[1], hidden, hidden),
        "p1_c3": _init_conv(ks[2], hidden, 6),
        # part2: AP2POH   (6 -> hidden -> hidden -> 3)
        "p2_c1": _init_conv(ks[3], 6, hidden),
        "p2_c2": _init_conv(ks[4], hidden, hidden),
        "p2_c3": _init_conv(ks[5], hidden, 3),
    }


def _pack_layer(w_hwio, b, cin_rows=None, cout_rows=None):
    """(3,3,Cin,Cout) HWIO + (Cout,) bias -> (32, 288) bf16, (32, 1) f32.

    K index order = (dy*3 + dx)*32 + cin, matching the kernel's tap stacking.
    """
    cin, cout = w_hwio.shape[2], w_hwio.shape[3]
    cin_rows = jnp.arange(cin) if cin_rows is None else jnp.asarray(cin_rows)
    cout_rows = jnp.arange(cout) if cout_rows is None else jnp.asarray(cout_rows)
    w_t = jnp.transpose(w_hwio.reshape(9, cin, cout), (2, 0, 1))   # (Cout, 9, Cin)
    p = jnp.zeros((C_PAD, 9, C_PAD), jnp.float32)
    p = p.at[cout_rows[:, None, None],
             jnp.arange(9)[None, :, None],
             cin_rows[None, None, :]].set(w_t)
    bias = jnp.zeros((C_PAD,), jnp.float32).at[cout_rows].set(b)
    return p.reshape(C_PAD, K_PAD).astype(jnp.bfloat16), bias.reshape(C_PAD, 1)


def pack_generator_params(params):
    """Pack all six layers into (6,32,288) bf16 weights + (6,32,1) f32 biases."""
    specs = [("p1_c1", None, None), ("p1_c2", None, None), ("p1_c3", None, AP_MAP),
             ("p2_c1", AP_MAP, None), ("p2_c2", None, None), ("p2_c3", None, None)]
    ws, bs = [], []
    for name, cin_rows, cout_rows in specs:
        w, b = _pack_layer(*params[name], cin_rows=cin_rows, cout_rows=cout_rows)
        ws.append(w)
        bs.append(b)
    return jnp.stack(ws), jnp.stack(bs)


# ----------------------------------------------------------------------------
# Pure-JAX reference (bf16-rounded weights/activations, f32 accumulation) for
# validation; rounding matches the kernel's bf16 MXU inputs so the comparison
# isolates kernel bugs rather than precision drift.
# ----------------------------------------------------------------------------
def _conv3x3_ref(x_nhwc, w_hwio, b):
    x = x_nhwc.astype(jnp.bfloat16).astype(jnp.float32)   # same rounding as kernel
    H, W = x.shape[1:3]
    xp = jnp.pad(x, ((0, 0), (1, 1), (1, 1), (0, 0)))
    acc = jnp.zeros(x.shape[:3] + (w_hwio.shape[-1],), jnp.float32)
    for dy in range(3):
        for dx in range(3):
            acc = acc + jnp.einsum("nhwc,co->nhwo",
                                   xp[:, dy:dy + H, dx:dx + W, :], w_hwio[dy, dx])
    return acc + b


def generator_reference(params, rgbd_nchw, amplitude_scaler=1.1):
    r = lambda a: a.astype(jnp.bfloat16).astype(jnp.float32)
    wb = lambda name: (r(params[name][0]), params[name][1])
    x = jnp.transpose(rgbd_nchw, (0, 2, 3, 1))
    h = jnp.maximum(_conv3x3_ref(x, *wb("p1_c1")), 0.0)
    h = jnp.maximum(_conv3x3_ref(h, *wb("p1_c2")), 0.0)
    ap = _conv3x3_ref(h, *wb("p1_c3"))
    y = jnp.concatenate([amplitude_scaler * jax.nn.sigmoid(ap[..., :3]),
                         jnp.pi * jnp.tanh(ap[..., 3:])], axis=-1)
    h = jnp.maximum(_conv3x3_ref(y, *wb("p2_c1")), 0.0)
    h = jnp.maximum(_conv3x3_ref(h, *wb("p2_c2")), 0.0)
    poh = jnp.pi * jnp.tanh(_conv3x3_ref(h, *wb("p2_c3")))
    return jnp.transpose(poh, (0, 3, 1, 2))


# ----------------------------------------------------------------------------
# Demo
# ----------------------------------------------------------------------------
if __name__ == "__main__":
    key = jax.random.PRNGKey(0)
    k_param, k_in = jax.random.split(key)

    params = make_generator_params(k_param, hidden=32)
    packed_w, packed_b = pack_generator_params(params)

    # Small RGBD input: batch=2, 4 channels (RGB + depth), 16x16 spatial (NCHW).
    rgbd = jax.random.uniform(k_in, (2, 4, 16, 16), jnp.float32)

    fwd = jax.jit(generator_forward)
    phs = fwd(packed_w, packed_b, rgbd)
    jax.block_until_ready(phs)

    assert phs.shape == (2, 3, 16, 16), phs.shape
    assert bool(jnp.all(jnp.isfinite(phs)))
    # output is a phase map, bounded by pi*tanh
    assert bool(jnp.all(jnp.abs(phs) <= jnp.pi + 1e-5))

    # Cross-check against the pure-JAX reference (both use bf16-rounded
    # matmul inputs with f32 accumulation -> tight agreement expected).
    ref = generator_reference(params, rgbd)
    max_err = float(jnp.max(jnp.abs(phs - ref)))
    assert max_err < 0.05, max_err

    print("KERNEL_OK")
</pallas_src>

<mosaic_0001>
module attributes {stable_mosaic.version = 11 : i64} {
  func.func @_generator_kernel(%arg0: i32, %arg1: memref<1x8x384xbf16, #tpu.memory_space<vmem>>, %arg2: memref<6x32x288xbf16, #tpu.memory_space<vmem>>, %arg3: memref<6x32x1xf32, #tpu.memory_space<vmem>>, %arg4: memref<1x384xf32, #tpu.memory_space<vmem>>, %arg5: memref<1x8x384xf32, #tpu.memory_space<vmem>>) attributes {dimension_semantics = [#tpu.dimension_semantics<parallel>], iteration_bounds = array<i64: 2>, scalar_prefetch = 0 : i64, scratch_operands = 0 : i64, tpu.core_type = #tpu.core_type<tc>, window_params = [{transform_indices = @transform_0, window_bounds = array<i64: 1, 8, 384>}, {pipeline_mode = #tpu.pipeline_mode<synchronous>, transform_indices = @transform_1, window_bounds = array<i64: 6, 32, 288>}, {pipeline_mode = #tpu.pipeline_mode<synchronous>, transform_indices = @transform_2, window_bounds = array<i64: 6, 32, 1>}, {pipeline_mode = #tpu.pipeline_mode<synchronous>, transform_indices = @transform_3, window_bounds = array<i64: 1, 384>}, {transform_indices = @transform_4, window_bounds = array<i64: 1, 8, 384>}]} {
    %c0 = arith.constant 0 : index
    %c0_0 = arith.constant 0 : index
    %0 = vector.load %arg4[%c0, %c0_0] : memref<1x384xf32, #tpu.memory_space<vmem>>, vector<1x384xf32>
    %1 = vector.shape_cast %0 : vector<1x384xf32> to vector<1x384xf32>
    %2 = vector.broadcast %1 : vector<1x384xf32> to vector<32x384xf32>
    %c0_1 = arith.constant 0 : index
    %c0_2 = arith.constant 0 : index
    %c0_3 = arith.constant 0 : index
    %3 = vector.load %arg1[%c0_1, %c0_2, %c0_3] : memref<1x8x384xbf16, #tpu.memory_space<vmem>>, vector<1x8x384xbf16>
    %4 = vector.shape_cast %3 : vector<1x8x384xbf16> to vector<8x384xbf16>
    %5 = arith.extf %4 : vector<8x384xbf16> to vector<8x384xf32>
    %cst = arith.constant 0.000000e+00 : f32
    %6 = vector.broadcast %cst : f32 to vector<24x384xf32>
    %7 = tpu.concatenate %5, %6 in 0 : vector<8x384xf32>, vector<24x384xf32> -> vector<32x384xf32>
    %c19_i32 = arith.constant 19 : i32
    %8 = tpu.dynamic_rotate %7 by %c19_i32 dim 1 : vector<32x384xf32>, i32 -> vector<32x384xf32>
    %9 = arith.truncf %8 : vector<32x384xf32> to vector<32x384xbf16>
    %c18_i32 = arith.constant 18 : i32
    %10 = tpu.dynamic_rotate %7 by %c18_i32 dim 1 : vector<32x384xf32>, i32 -> vector<32x384xf32>
    %11 = arith.truncf %10 : vector<32x384xf32> to vector<32x384xbf16>
    %c17_i32 = arith.constant 17 : i32
    %12 = tpu.dynamic_rotate %7 by %c17_i32 dim 1 : vector<32x384xf32>, i32 -> vector<32x384xf32>
    %13 = arith.truncf %12 : vector<32x384xf32> to vector<32x384xbf16>
    %c1_i32 = arith.constant 1 : i32
    %14 = tpu.dynamic_rotate %7 by %c1_i32 dim 1 : vector<32x384xf32>, i32 -> vector<32x384xf32>
    %15 = arith.truncf %14 : vector<32x384xf32> to vector<32x384xbf16>
    %16 = arith.truncf %7 : vector<32x384xf32> to vector<32x384xbf16>
    %c383_i32 = arith.constant 383 : i32
    %17 = tpu.dynamic_rotate %7 by %c383_i32 dim 1 : vector<32x384xf32>, i32 -> vector<32x384xf32>
    %18 = arith.truncf %17 : vector<32x384xf32> to vector<32x384xbf16>
    %c367_i32 = arith.constant 367 : i32
    %19 = tpu.dynamic_rotate %7 by %c367_i32 dim 1 : vector<32x384xf32>, i32 -> vector<32x384xf32>
    %20 = arith.truncf %19 : vector<32x384xf32> to vector<32x384xbf16>
    %c366_i32 = arith.constant 366 : i32
    %21 = tpu.dynamic_rotate %7 by %c366_i32 dim 1 : vector<32x384xf32>, i32 -> vector<32x384xf32>
    %22 = arith.truncf %21 : vector<32x384xf32> to vector<32x384xbf16>
    %c365_i32 = arith.constant 365 : i32
    %23 = tpu.dynamic_rotate %7 by %c365_i32 dim 1 : vector<32x384xf32>, i32 -> vector<32x384xf32>
    %24 = arith.truncf %23 : vector<32x384xf32> to vector<32x384xbf16>
    %25 = tpu.concatenate %9, %11, %13, %15, %16, %18, %20, %22, %24 in 0 : vector<32x384xbf16>, vector<32x384xbf16>, vector<32x384xbf16>, vector<32x384xbf16>, vector<32x384xbf16>, vector<32x384xbf16>, vector<32x384xbf16>, vector<32x384xbf16>, vector<32x384xbf16> -> vector<288x384xbf16>
    %c0_4 = arith.constant 0 : index
    %c0_5 = arith.constant 0 : index
    %c0_6 = arith.constant 0 : index
    %26 = vector.load %arg2[%c0_4, %c0_5, %c0_6] : memref<6x32x288xbf16, #tpu.memory_space<vmem>>, vector<1x32x288xbf16>
    %27 = vector.shape_cast %26 : vector<1x32x288xbf16> to vector<32x288xbf16>
    %cst_7 = arith.constant dense<0.000000e+00> : vector<32x384xf32>
    %28 = tpu.matmul %27, %25, %cst_7 {dimension_numbers = #tpu.dot_dimension_numbers<[1], [0], [0], [1], [0, 0, 1, 1], [], []>} : vector<32x288xbf16>, vector<288x384xbf16>, vector<32x384xf32> -> vector<32x384xf32>
    %c0_8 = arith.constant 0 : index
    %c0_9 = arith.constant 0 : index
    %c0_10 = arith.constant 0 : index
    %29 = vector.load %arg3[%c0_8, %c0_9, %c0_10] : memref<6x32x1xf32, #tpu.memory_space<vmem>>, vector<1x32x1xf32>
    %30 = vector.shape_cast %29 : vector<1x32x1xf32> to vector<32x1xf32>
    %31 = vector.broadcast %30 : vector<32x1xf32> to vector<32x384xf32>
    %32 = arith.addf %28, %31 : vector<32x384xf32>
    %cst_11 = arith.constant 0.000000e+00 : f32
    %33 = vector.broadcast %cst_11 : f32 to vector<32x384xf32>
    %34 = arith.maximumf %32, %33 : vector<32x384xf32>
    %35 = arith.mulf %34, %2 : vector<32x384xf32>
    %c19_i32_12 = arith.constant 19 : i32
    %36 = tpu.dynamic_rotate %35 by %c19_i32_12 dim 1 : vector<32x384xf32>, i32 -> vector<32x384xf32>
    %37 = arith.truncf %36 : vector<32x384xf32> to vector<32x384xbf16>
    %c18_i32_13 = arith.constant 18 : i32
    %38 = tpu.dynamic_rotate %35 by %c18_i32_13 dim 1 : vector<32x384xf32>, i32 -> vector<32x384xf32>
    %39 = arith.truncf %38 : vector<32x384xf32> to vector<32x384xbf16>
    %c17_i32_14 = arith.constant 17 : i32
    %40 = tpu.dynamic_rotate %35 by %c17_i32_14 dim 1 : vector<32x384xf32>, i32 -> vector<32x384xf32>
    %41 = arith.truncf %40 : vector<32x384xf32> to vector<32x384xbf16>
    %c1_i32_15 = arith.constant 1 : i32
    %42 = tpu.dynamic_rotate %35 by %c1_i32_15 dim 1 : vector<32x384xf32>, i32 -> vector<32x384xf32>
    %43 = arith.truncf %42 : vector<32x384xf32> to vector<32x384xbf16>
    %44 = arith.truncf %35 : vector<32x384xf32> to vector<32x384xbf16>
    %c383_i32_16 = arith.constant 383 : i32
    %45 = tpu.dynamic_rotate %35 by %c383_i32_16 dim 1 : vector<32x384xf32>, i32 -> vector<32x384xf32>
    %46 = arith.truncf %45 : vector<32x384xf32> to vector<32x384xbf16>
    %c367_i32_17 = arith.constant 367 : i32
    %47 = tpu.dynamic_rotate %35 by %c367_i32_17 dim 1 : vector<32x384xf32>, i32 -> vector<32x384xf32>
    %48 = arith.truncf %47 : vector<32x384xf32> to vector<32x384xbf16>
    %c366_i32_18 = arith.constant 366 : i32
    %49 = tpu.dynamic_rotate %35 by %c366_i32_18 dim 1 : vector<32x384xf32>, i32 -> vector<32x384xf32>
    %50 = arith.truncf %49 : vector<32x384xf32> to vector<32x384xbf16>
    %c365_i32_19 = arith.constant 365 : i32
    %51 = tpu.dynamic_rotate %35 by %c365_i32_19 dim 1 : vector<32x384xf32>, i32 -> vector<32x384xf32>
    %52 = arith.truncf %51 : vector<32x384xf32> to vector<32x384xbf16>
    %53 = tpu.concatenate %37, %39, %41, %43, %44, %46, %48, %50, %52 in 0 : vector<32x384xbf16>, vector<32x384xbf16>, vector<32x384xbf16>, vector<32x384xbf16>, vector<32x384xbf16>, vector<32x384xbf16>, vector<32x384xbf16>, vector<32x384xbf16>, vector<32x384xbf16> -> vector<288x384xbf16>
    %c1 = arith.constant 1 : index
    %c0_20 = arith.constant 0 : index
    %c0_21 = arith.constant 0 : index
    %54 = vector.load %arg2[%c1, %c0_20, %c0_21] : memref<6x32x288xbf16, #tpu.memory_space<vmem>>, vector<1x32x288xbf16>
    %55 = vector.shape_cast %54 : vector<1x32x288xbf16> to vector<32x288xbf16>
    %cst_22 = arith.constant dense<0.000000e+00> : vector<32x384xf32>
    %56 = tpu.matmul %55, %53, %cst_22 {dimension_numbers = #tpu.dot_dimension_numbers<[1], [0], [0], [1], [0, 0, 1, 1], [], []>} : vector<32x288xbf16>, vector<288x384xbf16>, vector<32x384xf32> -> vector<32x384xf32>
    %c1_23 = arith.constant 1 : index
    %c0_24 = arith.constant 0 : index
    %c0_25 = arith.constant 0 : index
    %57 = vector.load %arg3[%c1_23, %c0_24, %c0_25] : memref<6x32x1xf32, #tpu.memory_space<vmem>>, vector<1x32x1xf32>
    %58 = vector.shape_cast %57 : vector<1x32x1xf32> to vector<32x1xf32>
    %59 = vector.broadcast %58 : vector<32x1xf32> to vector<32x384xf32>
    %60 = arith.addf %56, %59 : vector<32x384xf32>
    %cst_26 = arith.constant 0.000000e+00 : f32
    %61 = vector.broadcast %cst_26 : f32 to vector<32x384xf32>
    %62 = arith.maximumf %60, %61 : vector<32x384xf32>
    %63 = arith.mulf %62, %2 : vector<32x384xf32>
    %c19_i32_27 = arith.constant 19 : i32
    %64 = tpu.dynamic_rotate %63 by %c19_i32_27 dim 1 : vector<32x384xf32>, i32 -> vector<32x384xf32>
    %65 = arith.truncf %64 : vector<32x384xf32> to vector<32x384xbf16>
    %c18_i32_28 = arith.constant 18 : i32
    %66 = tpu.dynamic_rotate %63 by %c18_i32_28 dim 1 : vector<32x384xf32>, i32 -> vector<32x384xf32>
    %67 = arith.truncf %66 : vector<32x384xf32> to vector<32x384xbf16>
    %c17_i32_29 = arith.constant 17 : i32
    %68 = tpu.dynamic_rotate %63 by %c17_i32_29 dim 1 : vector<32x384xf32>, i32 -> vector<32x384xf32>
    %69 = arith.truncf %68 : vector<32x384xf32> to vector<32x384xbf16>
    %c1_i32_30 = arith.constant 1 : i32
    %70 = tpu.dynamic_rotate %63 by %c1_i32_30 dim 1 : vector<32x384xf32>, i32 -> vector<32x384xf32>
    %71 = arith.truncf %70 : vector<32x384xf32> to vector<32x384xbf16>
    %72 = arith.truncf %63 : vector<32x384xf32> to vector<32x384xbf16>
    %c383_i32_31 = arith.constant 383 : i32
    %73 = tpu.dynamic_rotate %63 by %c383_i32_31 dim 1 : vector<32x384xf32>, i32 -> vector<32x384xf32>
    %74 = arith.truncf %73 : vector<32x384xf32> to vector<32x384xbf16>
    %c367_i32_32 = arith.constant 367 : i32
    %75 = tpu.dynamic_rotate %63 by %c367_i32_32 dim 1 : vector<32x384xf32>, i32 -> vector<32x384xf32>
    %76 = arith.truncf %75 : vector<32x384xf32> to vector<32x384xbf16>
    %c366_i32_33 = arith.constant 366 : i32
    %77 = tpu.dynamic_rotate %63 by %c366_i32_33 dim 1 : vector<32x384xf32>, i32 -> vector<32x384xf32>
    %78 = arith.truncf %77 : vector<32x384xf32> to vector<32x384xbf16>
    %c365_i32_34 = arith.constant 365 : i32
    %79 = tpu.dynamic_rotate %63 by %c365_i32_34 dim 1 : vector<32x384xf32>, i32 -> vector<32x384xf32>
    %80 = arith.truncf %79 : vector<32x384xf32> to vector<32x384xbf16>
    %81 = tpu.concatenate %65, %67, %69, %71, %72, %74, %76, %78, %80 in 0 : vector<32x384xbf16>, vector<32x384xbf16>, vector<32x384xbf16>, vector<32x384xbf16>, vector<32x384xbf16>, vector<32x384xbf16>, vector<32x384xbf16>, vector<32x384xbf16>, vector<32x384xbf16> -> vector<288x384xbf16>
    %c2 = arith.constant 2 : index
    %c0_35 = arith.constant 0 : index
    %c0_36 = arith.constant 0 : index
    %82 = vector.load %arg2[%c2, %c0_35, %c0_36] : memref<6x32x288xbf16, #tpu.memory_space<vmem>>, vector<1x32x288xbf16>
    %83 = vector.shape_cast %82 : vector<1x32x288xbf16> to vector<32x288xbf16>
    %cst_37 = arith.constant dense<0.000000e+00> : vector<32x384xf32>
    %84 = tpu.matmul %83, %81, %cst_37 {dimension_numbers = #tpu.dot_dimension_numbers<[1], [0], [0], [1], [0, 0, 1, 1], [], []>} : vector<32x288xbf16>, vector<288x384xbf16>, vector<32x384xf32> -> vector<32x384xf32>
    %c2_38 = arith.constant 2 : index
    %c0_39 = arith.constant 0 : index
    %c0_40 = arith.constant 0 : index
    %85 = vector.load %arg3[%c2_38, %c0_39, %c0_40] : memref<6x32x1xf32, #tpu.memory_space<vmem>>, vector<1x32x1xf32>
    %86 = vector.shape_cast %85 : vector<1x32x1xf32> to vector<32x1xf32>
    %87 = vector.broadcast %86 : vector<32x1xf32> to vector<32x384xf32>
    %88 = arith.addf %84, %87 : vector<32x384xf32>
    %89 = vector.extract_strided_slice %88 {offsets = [0, 0], sizes = [16, 384], strides = [1, 1]} : vector<32x384xf32> to vector<16x384xf32>
    %90 = arith.negf %89 : vector<16x384xf32>
    %91 = math.exp %90 : vector<16x384xf32>
    %cst_41 = arith.constant 1.000000e+00 : f32
    %92 = vector.broadcast %cst_41 : f32 to vector<16x384xf32>
    %93 = arith.addf %92, %91 : vector<16x384xf32>
    %94 = arith.divf %92, %93 : vector<16x384xf32>
    %cst_42 = arith.constant 1.100000e+00 : f32
    %95 = vector.broadcast %cst_42 : f32 to vector<16x384xf32>
    %96 = arith.mulf %95, %94 : vector<16x384xf32>
    %97 = vector.extract_strided_slice %88 {offsets = [16, 0], sizes = [16, 384], strides = [1, 1]} : vector<32x384xf32> to vector<16x384xf32>
    %98 = math.tanh %97 : vector<16x384xf32>
    %cst_43 = arith.constant 3.14159274 : f32
    %99 = vector.broadcast %cst_43 : f32 to vector<16x384xf32>
    %100 = arith.mulf %99, %98 : vector<16x384xf32>
    %101 = tpu.concatenate %96, %100 in 0 : vector<16x384xf32>, vector<16x384xf32> -> vector<32x384xf32>
    %102 = arith.mulf %101, %2 : vector<32x384xf32>
    %c19_i32_44 = arith.constant 19 : i32
    %103 = tpu.dynamic_rotate %102 by %c19_i32_44 dim 1 : vector<32x384xf32>, i32 -> vector<32x384xf32>
    %104 = arith.truncf %103 : vector<32x384xf32> to vector<32x384xbf16>
    %c18_i32_45 = arith.constant 18 : i32
    %105 = tpu.dynamic_rotate %102 by %c18_i32_45 dim 1 : vector<32x384xf32>, i32 -> vector<32x384xf32>
    %106 = arith.truncf %105 : vector<32x384xf32> to vector<32x384xbf16>
    %c17_i32_46 = arith.constant 17 : i32
    %107 = tpu.dynamic_rotate %102 by %c17_i32_46 dim 1 : vector<32x384xf32>, i32 -> vector<32x384xf32>
    %108 = arith.truncf %107 : vector<32x384xf32> to vector<32x384xbf16>
    %c1_i32_47 = arith.constant 1 : i32
    %109 = tpu.dynamic_rotate %102 by %c1_i32_47 dim 1 : vector<32x384xf32>, i32 -> vector<32x384xf32>
    %110 = arith.truncf %109 : vector<32x384xf32> to vector<32x384xbf16>
    %111 = arith.truncf %102 : vector<32x384xf32> to vector<32x384xbf16>
    %c383_i32_48 = arith.constant 383 : i32
    %112 = tpu.dynamic_rotate %102 by %c383_i32_48 dim 1 : vector<32x384xf32>, i32 -> vector<32x384xf32>
    %113 = arith.truncf %112 : vector<32x384xf32> to vector<32x384xbf16>
    %c367_i32_49 = arith.constant 367 : i32
    %114 = tpu.dynamic_rotate %102 by %c367_i32_49 dim 1 : vector<32x384xf32>, i32 -> vector<32x384xf32>
    %115 = arith.truncf %114 : vector<32x384xf32> to vector<32x384xbf16>
    %c366_i32_50 = arith.constant 366 : i32
    %116 = tpu.dynamic_rotate %102 by %c366_i32_50 dim 1 : vector<32x384xf32>, i32 -> vector<32x384xf32>
    %117 = arith.truncf %116 : vector<32x384xf32> to vector<32x384xbf16>
    %c365_i32_51 = arith.constant 365 : i32
    %118 = tpu.dynamic_rotate %102 by %c365_i32_51 dim 1 : vector<32x384xf32>, i32 -> vector<32x384xf32>
    %119 = arith.truncf %118 : vector<32x384xf32> to vector<32x384xbf16>
    %120 = tpu.concatenate %104, %106, %108, %110, %111, %113, %115, %117, %119 in 0 : vector<32x384xbf16>, vector<32x384xbf16>, vector<32x384xbf16>, vector<32x384xbf16>, vector<32x384xbf16>, vector<32x384xbf16>, vector<32x384xbf16>, vector<32x384xbf16>, vector<32x384xbf16> -> vector<288x384xbf16>
    %c3 = arith.constant 3 : index
    %c0_52 = arith.constant 0 : index
    %c0_53 = arith.constant 0 : index
    %121 = vector.load %arg2[%c3, %c0_52, %c0_53] : memref<6x32x288xbf16, #tpu.memory_space<vmem>>, vector<1x32x288xbf16>
    %122 = vector.shape_cast %121 : vector<1x32x288xbf16> to vector<32x288xbf16>
    %cst_54 = arith.constant dense<0.000000e+00> : vector<32x384xf32>
    %123 = tpu.matmul %122, %120, %cst_54 {dimension_numbers = #tpu.dot_dimension_numbers<[1], [0], [0], [1], [0, 0, 1, 1], [], []>} : vector<32x288xbf16>, vector<288x384xbf16>, vector<32x384xf32> -> vector<32x384xf32>
    %c3_55 = arith.constant 3 : index
    %c0_56 = arith.constant 0 : index
    %c0_57 = arith.constant 0 : index
    %124 = vector.load %arg3[%c3_55, %c0_56, %c0_57] : memref<6x32x1xf32, #tpu.memory_space<vmem>>, vector<1x32x1xf32>
    %125 = vector.shape_cast %124 : vector<1x32x1xf32> to vector<32x1xf32>
    %126 = vector.broadcast %125 : vector<32x1xf32> to vector<32x384xf32>
    %127 = arith.addf %123, %126 : vector<32x384xf32>
    %cst_58 = arith.constant 0.000000e+00 : f32
    %128 = vector.broadcast %cst_58 : f32 to vector<32x384xf32>
    %129 = arith.maximumf %127, %128 : vector<32x384xf32>
    %130 = arith.mulf %129, %2 : vector<32x384xf32>
    %c19_i32_59 = arith.constant 19 : i32
    %131 = tpu.dynamic_rotate %130 by %c19_i32_59 dim 1 : vector<32x384xf32>, i32 -> vector<32x384xf32>
    %132 = arith.truncf %131 : vector<32x384xf32> to vector<32x384xbf16>
    %c18_i32_60 = arith.constant 18 : i32
    %133 = tpu.dynamic_rotate %130 by %c18_i32_60 dim 1 : vector<32x384xf32>, i32 -> vector<32x384xf32>
    %134 = arith.truncf %133 : vector<32x384xf32> to vector<32x384xbf16>
    %c17_i32_61 = arith.constant 17 : i32
    %135 = tpu.dynamic_rotate %130 by %c17_i32_61 dim 1 : vector<32x384xf32>, i32 -> vector<32x384xf32>
    %136 = arith.truncf %135 : vector<32x384xf32> to vector<32x384xbf16>
    %c1_i32_62 = arith.constant 1 : i32
    %137 = tpu.dynamic_rotate %130 by %c1_i32_62 dim 1 : vector<32x384xf32>, i32 -> vector<32x384xf32>
    %138 = arith.truncf %137 : vector<32x384xf32> to vector<32x384xbf16>
    %139 = arith.truncf %130 : vector<32x384xf32> to vector<32x384xbf16>
    %c383_i32_63 = arith.constant 383 : i32
    %140 = tpu.dynamic_rotate %130 by %c383_i32_63 dim 1 : vector<32x384xf32>, i32 -> vector<32x384xf32>
    %141 = arith.truncf %140 : vector<32x384xf32> to vector<32x384xbf16>
    %c367_i32_64 = arith.constant 367 : i32
    %142 = tpu.dynamic_rotate %130 by %c367_i32_64 dim 1 : vector<32x384xf32>, i32 -> vector<32x384xf32>
    %143 = arith.truncf %142 : vector<32x384xf32> to vector<32x384xbf16>
    %c366_i32_65 = arith.constant 366 : i32
    %144 = tpu.dynamic_rotate %130 by %c366_i32_65 dim 1 : vector<32x384xf32>, i32 -> vector<32x384xf32>
    %145 = arith.truncf %144 : vector<32x384xf32> to vector<32x384xbf16>
    %c365_i32_66 = arith.constant 365 : i32
    %146 = tpu.dynamic_rotate %130 by %c365_i32_66 dim 1 : vector<32x384xf32>, i32 -> vector<32x384xf32>
    %147 = arith.truncf %146 : vector<32x384xf32> to vector<32x384xbf16>
    %148 = tpu.concatenate %132, %134, %136, %138, %139, %141, %143, %145, %147 in 0 : vector<32x384xbf16>, vector<32x384xbf16>, vector<32x384xbf16>, vector<32x384xbf16>, vector<32x384xbf16>, vector<32x384xbf16>, vector<32x384xbf16>, vector<32x384xbf16>, vector<32x384xbf16> -> vector<288x384xbf16>
    %c4 = arith.constant 4 : index
    %c0_67 = arith.constant 0 : index
    %c0_68 = arith.constant 0 : index
    %149 = vector.load %arg2[%c4, %c0_67, %c0_68] : memref<6x32x288xbf16, #tpu.memory_space<vmem>>, vector<1x32x288xbf16>
    %150 = vector.shape_cast %149 : vector<1x32x288xbf16> to vector<32x288xbf16>
    %cst_69 = arith.constant dense<0.000000e+00> : vector<32x384xf32>
    %151 = tpu.matmul %150, %148, %cst_69 {dimension_numbers = #tpu.dot_dimension_numbers<[1], [0], [0], [1], [0, 0, 1, 1], [], []>} : vector<32x288xbf16>, vector<288x384xbf16>, vector<32x384xf32> -> vector<32x384xf32>
    %c4_70 = arith.constant 4 : index
    %c0_71 = arith.constant 0 : index
    %c0_72 = arith.constant 0 : index
    %152 = vector.load %arg3[%c4_70, %c0_71, %c0_72] : memref<6x32x1xf32, #tpu.memory_space<vmem>>, vector<1x32x1xf32>
    %153 = vector.shape_cast %152 : vector<1x32x1xf32> to vector<32x1xf32>
    %154 = vector.broadcast %153 : vector<32x1xf32> to vector<32x384xf32>
    %155 = arith.addf %151, %154 : vector<32x384xf32>
    %cst_73 = arith.constant 0.000000e+00 : f32
    %156 = vector.broadcast %cst_73 : f32 to vector<32x384xf32>
    %157 = arith.maximumf %155, %156 : vector<32x384xf32>
    %158 = arith.mulf %157, %2 : vector<32x384xf32>
    %c19_i32_74 = arith.constant 19 : i32
    %159 = tpu.dynamic_rotate %158 by %c19_i32_74 dim 1 : vector<32x384xf32>, i32 -> vector<32x384xf32>
    %160 = arith.truncf %159 : vector<32x384xf32> to vector<32x384xbf16>
    %c18_i32_75 = arith.constant 18 : i32
    %161 = tpu.dynamic_rotate %158 by %c18_i32_75 dim 1 : vector<32x384xf32>, i32 -> vector<32x384xf32>
    %162 = arith.truncf %161 : vector<32x384xf32> to vector<32x384xbf16>
    %c17_i32_76 = arith.constant 17 : i32
    %163 = tpu.dynamic_rotate %158 by %c17_i32_76 dim 1 : vector<32x384xf32>, i32 -> vector<32x384xf32>
    %164 = arith.truncf %163 : vector<32x384xf32> to vector<32x384xbf16>
    %c1_i32_77 = arith.constant 1 : i32
    %165 = tpu.dynamic_rotate %158 by %c1_i32_77 dim 1 : vector<32x384xf32>, i32 -> vector<32x384xf32>
    %166 = arith.truncf %165 : vector<32x384xf32> to vector<32x384xbf16>
    %167 = arith.truncf %158 : vector<32x384xf32> to vector<32x384xbf16>
    %c383_i32_78 = arith.constant 383 : i32
    %168 = tpu.dynamic_rotate %158 by %c383_i32_78 dim 1 : vector<32x384xf32>, i32 -> vector<32x384xf32>
    %169 = arith.truncf %168 : vector<32x384xf32> to vector<32x384xbf16>
    %c367_i32_79 = arith.constant 367 : i32
    %170 = tpu.dynamic_rotate %158 by %c367_i32_79 dim 1 : vector<32x384xf32>, i32 -> vector<32x384xf32>
    %171 = arith.truncf %170 : vector<32x384xf32> to vector<32x384xbf16>
    %c366_i32_80 = arith.constant 366 : i32
    %172 = tpu.dynamic_rotate %158 by %c366_i32_80 dim 1 : vector<32x384xf32>, i32 -> vector<32x384xf32>
    %173 = arith.truncf %172 : vector<32x384xf32> to vector<32x384xbf16>
    %c365_i32_81 = arith.constant 365 : i32
    %174 = tpu.dynamic_rotate %158 by %c365_i32_81 dim 1 : vector<32x384xf32>, i32 -> vector<32x384xf32>
    %175 = arith.truncf %174 : vector<32x384xf32> to vector<32x384xbf16>
    %176 = tpu.concatenate %160, %162, %164, %166, %167, %169, %171, %173, %175 in 0 : vector<32x384xbf16>, vector<32x384xbf16>, vector<32x384xbf16>, vector<32x384xbf16>, vector<32x384xbf16>, vector<32x384xbf16>, vector<32x384xbf16>, vector<32x384xbf16>, vector<32x384xbf16> -> vector<288x384xbf16>
    %c5 = arith.constant 5 : index
    %c0_82 = arith.constant 0 : index
    %c0_83 = arith.constant 0 : index
    %177 = vector.load %arg2[%c5, %c0_82, %c0_83] : memref<6x32x288xbf16, #tpu.memory_space<vmem>>, vector<1x32x288xbf16>
    %178 = vector.shape_cast %177 : vector<1x32x288xbf16> to vector<32x288xbf16>
    %cst_84 = arith.constant dense<0.000000e+00> : vector<32x384xf32>
    %179 = tpu.matmul %178, %176, %cst_84 {dimension_numbers = #tpu.dot_dimension_numbers<[1], [0], [0], [1], [0, 0, 1, 1], [], []>} : vector<32x288xbf16>, vector<288x384xbf16>, vector<32x384xf32> -> vector<32x384xf32>
    %c5_85 = arith.constant 5 : index
    %c0_86 = arith.constant 0 : index
    %c0_87 = arith.constant 0 : index
    %180 = vector.load %arg3[%c5_85, %c0_86, %c0_87] : memref<6x32x1xf32, #tpu.memory_space<vmem>>, vector<1x32x1xf32>
    %181 = vector.shape_cast %180 : vector<1x32x1xf32> to vector<32x1xf32>
    %182 = vector.broadcast %181 : vector<32x1xf32> to vector<32x384xf32>
    %183 = arith.addf %179, %182 : vector<32x384xf32>
    %184 = vector.extract_strided_slice %183 {offsets = [0, 0], sizes = [8, 384], strides = [1, 1]} : vector<32x384xf32> to vector<8x384xf32>
    %185 = math.tanh %184 : vector<8x384xf32>
    %cst_88 = arith.constant 3.14159274 : f32
    %186 = vector.broadcast %cst_88 : f32 to vector<8x384xf32>
    %187 = arith.mulf %186, %185 : vector<8x384xf32>
    %188 = vector.extract_strided_slice %2 {offsets = [0, 0], sizes = [8, 384], strides = [1, 1]} : vector<32x384xf32> to vector<8x384xf32>
    %189 = arith.mulf %187, %188 : vector<8x384xf32>
    %c0_89 = arith.constant 0 : index
    %c0_90 = arith.constant 0 : index
    %c0_91 = arith.constant 0 : index
    %190 = vector.load %arg5[%c0_89, %c0_90, %c0_91] : memref<1x8x384xf32, #tpu.memory_space<vmem>>, vector<1x8x384xf32>
    %191 = vector.shape_cast %190 : vector<1x8x384xf32> to vector<8x384xf32>
    %192 = vector.shape_cast %189 : vector<8x384xf32> to vector<1x8x384xf32>
    tpu.vector_store %arg5[%c0_89, %c0_90, %c0_91], %192 {strides = array<i32>} : memref<1x8x384xf32, #tpu.memory_space<vmem>>, vector<1x8x384xf32>,
    return
  }
  func.func @transform_0(%arg0: i32) -> (i32, i32, i32) {
    %c0_i32 = arith.constant 0 : i32
    %c0_i32_0 = arith.constant 0 : i32
    %c0_i32_1 = arith.constant 0 : i32
    return %arg0, %c0_i32, %c0_i32_0 : i32, i32, i32
  }
  func.func @transform_1(%arg0: i32) -> (i32, i32, i32) {
    %c0_i32 = arith.constant 0 : i32
    %c0_i32_0 = arith.constant 0 : i32
    %c0_i32_1 = arith.constant 0 : i32
    %c0_i32_2 = arith.constant 0 : i32
    return %c0_i32, %c0_i32_0, %c0_i32_1 : i32, i32, i32
  }
  func.func @transform_2(%arg0: i32) -> (i32, i32, i32) {
    %c0_i32 = arith.constant 0 : i32
    %c0_i32_0 = arith.constant 0 : i32
    %c0_i32_1 = arith.constant 0 : i32
    %c0_i32_2 = arith.constant 0 : i32
    return %c0_i32, %c0_i32_0, %c0_i32_1 : i32, i32, i32
  }
  func.func @transform_3(%arg0: i32) -> (i32, i32) {
    %c0_i32 = arith.constant 0 : i32
    %c0_i32_0 = arith.constant 0 : i32
    %c0_i32_1 = arith.constant 0 : i32
    return %c0_i32, %c0_i32_0 : i32, i32
  }
  func.func @transform_4(%arg0: i32) -> (i32, i32, i32) {
    %c0_i32 = arith.constant 0 : i32
    %c0_i32_0 = arith.constant 0 : i32
    %c0_i32_1 = arith.constant 0 : i32
    return %arg0, %c0_i32, %c0_i32_0 : i32, i32, i32
  }
}

</mosaic_0001>

<llo_original>
// kernel: generator_forward.1
$region0: #{generator_forward.1}
  #allocation0 [shape = 'u32[]', space=smem, size = 0x4, offset = 0x4, fixed_abs, tag = 'smem constant byte address 0x4 - core index']
  #allocation1 [shape = 'u32[144,128]{1,0:T(1,128)}', space=vmem, size = 0x12000, scoped, tag = 'internal scratch']
  %s0 = inlined_call_operand.vmem [shape: bf16[2,8,384], index: 0, kind: input, shape index: {}]
  %s1 = inlined_call_operand.vmem [shape: bf16[6,32,288], index: 1, kind: input, shape index: {}]
  %s2 = inlined_call_operand.vmem [shape: f32[6,32,1], index: 2, kind: input, shape index: {}]
  %s3 = inlined_call_operand.vmem [shape: f32[1,384], index: 3, kind: input, shape index: {}]
  %s4 = inlined_call_operand.vmem [shape: f32[2,8,384], index: 4, kind: output, shape index: {}]
  %s5 = sld [smem:[#allocation0]]
  $region49: #{generator_forward.1} parent=0
    _
  %s7 = ssub.s32 1, %s5
  %s8 = scalar_select 0, %s7, %s5
  loop: start=0, step=1, limit=4
  $region2: #{generator_forward.1} parent=0 // loop_pre_header
    _
  $region3: #{generator_forward.1} parent=0 // loop_header
    %s10 = sphi 0, %s14
    %p11 = scmp.ge.s32.totalorder %s10, 4
    %s20 = sphi 0, %s22
    %s23 = sphi 0, %s20
    %s24 = sphi 0, %s23
    %s40 = sphi 0, %s24
    %s44 = sphi 0, %s44
    %s46 = sphi 0, %s44
    %s47 = sphi 0, %s46
    %s61 = sphi 0, %s47
    %s65 = sphi 0, %s65
    %s67 = sphi 0, %s65
    %s68 = sphi 0, %s67
    %s82 = sphi 0, %s68
    %s86 = sphi 0, %s86
    %s88 = sphi 0, %s86
    %s89 = sphi 0, %s88
    %s103 = sphi 0, %s89
    %s109 = sphi 0, %s111
    %s112 = sphi 0, %s109
    %s113 = sphi 0, %s112
    %s129 = sphi 0, %s113
  $region4: #{generator_forward.1} parent=0 // loop_header_branch
    %13 = sbr.rel (%p11) target = $region8
  $region5: #{generator_forward.1} parent=0 // loop_body
    %s15 = ssub.s32 %s10, 1
    %s16 = ssub.s32 %s10, 2
    %s17 = sadd.s32 %s10, 1
    %s18 = ssub.s32 %s10, %s17
    %p19 = scmp.eq.s32.totalorder %s18, 0
    %s21 = sadd.s32 %s20, 1
    %s22 = scalar_select %p19, %s20, %s21
    %p25 = pneg %p19
    %p26 = scmp.eq.s32.totalorder %s10, 1
    %p27 = por %p25, %p26
    %p28 = scmp.ne.s32.totalorder %s20, %s23
    %p29 = scmp.eq.s32.totalorder %s10, 0
    %p30 = por %p28, %p29
    %p31 = scmp.ne.s32.totalorder %s20, %s23
    %p32 = scmp.eq.s32.totalorder %s15, 1
    %p33 = por %p31, %p32
    %p34 = scmp.ne.s32.totalorder %s23, %s24
    %p35 = scmp.eq.s32.totalorder %s15, 0
    %p36 = por %p34, %p35
    %p37 = scmp.ne.s32.totalorder %s23, %s24
    %p38 = scmp.eq.s32.totalorder %s16, 1
    %p39 = por %p37, %p38
    %p41 = scmp.ne.s32.totalorder %s24, %s40
    %p42 = scmp.eq.s32.totalorder %s16, 0
    %p43 = por %p41, %p42
    %s45 = sadd.s32 %s44, 1
    %p48 = scmp.eq.s32.totalorder %s10, 1
    %p49 = scmp.ne.s32.totalorder %s44, %s46
    %p50 = scmp.eq.s32.totalorder %s10, 0
    %p51 = por %p49, %p50
    %p52 = scmp.ne.s32.totalorder %s44, %s46
    %p53 = scmp.eq.s32.totalorder %s15, 1
    %p54 = por %p52, %p53
    %p55 = scmp.ne.s32.totalorder %s46, %s47
    %p56 = scmp.eq.s32.totalorder %s15, 0
    %p57 = por %p55, %p56
    %p58 = scmp.ne.s32.totalorder %s46, %s47
    %p59 = scmp.eq.s32.totalorder %s16, 1
    %p60 = por %p58, %p59
    %p62 = scmp.ne.s32.totalorder %s47, %s61
    %p63 = scmp.eq.s32.totalorder %s16, 0
    %p64 = por %p62, %p63
    %s66 = sadd.s32 %s65, 1
    %p69 = scmp.eq.s32.totalorder %s10, 1
    %p70 = scmp.ne.s32.totalorder %s65, %s67
    %p71 = scmp.eq.s32.totalorder %s10, 0
    %p72 = por %p70, %p71
    %p73 = scmp.ne.s32.totalorder %s65, %s67
    %p74 = scmp.eq.s32.totalorder %s15, 1
    %p75 = por %p73, %p74
    %p76 = scmp.ne.s32.totalorder %s67, %s68
    %p77 = scmp.eq.s32.totalorder %s15, 0
    %p78 = por %p76, %p77
    %p79 = scmp.ne.s32.totalorder %s67, %s68
    %p80 = scmp.eq.s32.totalorder %s16, 1
    %p81 = por %p79, %p80
    %p83 = scmp.ne.s32.totalorder %s68, %s82
    %p84 = scmp.eq.s32.totalorder %s16, 0
    %p85 = por %p83, %p84
    %s87 = sadd.s32 %s86, 1
    %p90 = scmp.eq.s32.totalorder %s10, 1
    %p91 = scmp.ne.s32.totalorder %s86, %s88
    %p92 = scmp.eq.s32.totalorder %s10, 0
    %p93 = por %p91, %p92
    %p94 = scmp.ne.s32.totalorder %s86, %s88
    %p95 = scmp.eq.s32.totalorder %s15, 1
    %p96 = por %p94, %p95
    %p97 = scmp.ne.s32.totalorder %s88, %s89
    %p98 = scmp.eq.s32.totalorder %s15, 0
    %p99 = por %p97, %p98
    %p100 = scmp.ne.s32.totalorder %s88, %s89
    %p101 = scmp.eq.s32.totalorder %s16, 1
    %p102 = por %p100, %p101
    %p104 = scmp.ne.s32.totalorder %s89, %s103
    %p105 = scmp.eq.s32.totalorder %s16, 0
    %p106 = por %p104, %p105
    %s107 = ssub.s32 %s10, %s17
    %p108 = scmp.eq.s32.totalorder %s107, 0
    %s110 = sadd.s32 %s109, 1
    %s111 = scalar_select %p108, %s109, %s110
    %p114 = pneg %p108
    %p115 = scmp.eq.s32.totalorder %s10, 1
    %p116 = por %p114, %p115
    %p117 = scmp.ne.s32.totalorder %s109, %s112
    %p118 = scmp.eq.s32.totalorder %s10, 0
    %p119 = por %p117, %p118
    %p120 = scmp.ne.s32.totalorder %s109, %s112
    %p121 = scmp.eq.s32.totalorder %s15, 1
    %p122 = por %p120, %p121
    %p123 = scmp.ne.s32.totalorder %s112, %s113
    %p124 = scmp.eq.s32.totalorder %s15, 0
    %p125 = por %p123, %p124
    %p126 = scmp.ne.s32.totalorder %s112, %s113
    %p127 = scmp.eq.s32.totalorder %s16, 1
    %p128 = por %p126, %p127
    %p130 = scmp.ne.s32.totalorder %s113, %s129
    %p131 = scmp.eq.s32.totalorder %s16, 0
    %p132 = por %p130, %p131
    %p133 = scmp.le.s32.totalorder 1, %s10
    %p134 = scmp.lt.s32.totalorder %s10, 3
    %p135 = pnand %p133, %p134
    %p136 = pneg %p135
    // Predicated region
    $region9: #{generator_forward.1} parent=5 // pred_check
      _
    $region10: #{generator_forward.1} parent=5 // pred_check_branch
      %138 = sbr.rel (%p135) target = $region12
    $region11: #{generator_forward.1} parent=5 // pred_region
      %s139 = ssub.s32 %s10, 1
      // Predicated region
      $region13: #{generator_forward.1} parent=11 // pred_check
        %p140 = pneg %p57
      $region14: #{generator_forward.1} parent=11 // pred_check_branch
        %142 = sbr.rel (%p140) target = $region16
      $region15: #{generator_forward.1} parent=11 // pred_region
        _
      $region16: #{generator_forward.1} parent=11 // pred_fallthru
        _
      // Predicated region
      $region17: #{generator_forward.1} parent=11 // pred_check
        %p143 = pneg %p78
      $region18: #{generator_forward.1} parent=11 // pred_check_branch
        %145 = sbr.rel (%p143) target = $region20
      $region19: #{generator_forward.1} parent=11 // pred_region
        _
      $region20: #{generator_forward.1} parent=11 // pred_fallthru
        _
      // Predicated region
      $region21: #{generator_forward.1} parent=11 // pred_check
        %p146 = pneg %p99
      $region22: #{generator_forward.1} parent=11 // pred_check_branch
        %148 = sbr.rel (%p146) target = $region24
      $region23: #{generator_forward.1} parent=11 // pred_region
        _
      $region24: #{generator_forward.1} parent=11 // pred_fallthru
        _
    $region12: #{generator_forward.1} parent=5 // pred_fallthru
      _
    %p149 = scmp.lt.s32.totalorder %s10, 2
    // Predicated region
    $region25: #{generator_forward.1} parent=5 // pred_check
      %p150 = pneg %p149
    $region26: #{generator_forward.1} parent=5 // pred_check_branch
      %152 = sbr.rel (%p150) target = $region28
    $region27: #{generator_forward.1} parent=5 // pred_region
      // Predicated region
      $region29: #{generator_forward.1} parent=27 // pred_check
        %p153 = pneg %p30
      $region30: #{generator_forward.1} parent=27 // pred_check_branch
        %155 = sbr.rel (%p153) target = $region32
      $region31: #{generator_forward.1} parent=27 // pred_region
        %p156 = scmp.lt.s32.totalorder %s10, 1
        %s157 = scalar_select %p156, %s10, 1
        %s158 = smul.addr %s157, 3
        %s159 = smul.addr %s158, 4
        %s160 = scalar_lea.vmem %s0, %s159
      $region32: #{generator_forward.1} parent=27 // pred_fallthru
        _
    $region28: #{generator_forward.1} parent=5 // pred_fallthru
      _
    %p161 = scmp.le.s32.totalorder 1, %s10
    %p162 = scmp.lt.s32.totalorder %s10, 3
    %p163 = pnand %p161, %p162
    %p164 = pneg %p163
    // Predicated region
    $region33: #{generator_forward.1} parent=5 // pred_check
      _
    $region34: #{generator_forward.1} parent=5 // pred_check_branch
      %166 = sbr.rel (%p163) target = $region36
    $region35: #{generator_forward.1} parent=5 // pred_region
      %s167 = ssub.s32 %s10, 1
      %p168 = scmp.lt.s32.totalorder %s15, 1
      %s169 = scalar_select %p168, %s15, 1
      %s170 = smul.addr %s169, 3
      %s171 = smul.addr %s170, 4
      %s172 = scalar_lea.vmem %s0, %s171
      %p173 = pneg %p36
      %p174 = pneg %p33
      %p175 = pneg %p57
      %p176 = pneg %p54
      %p177 = pneg %p78
      %p178 = pneg %p75
      %p179 = pneg %p99
      %p180 = pneg %p96
      %p181 = pneg %p125
      %p182 = pneg %p122
      %p183 = scmp.lt.s32.totalorder %s15, 1
      %s184 = scalar_select %p183, %s15, 1
      %s185 = smul.addr %s184, 3
      %s186 = smul.addr %s185, 8
      %s187 = scalar_lea.vmem %s4, %s186
      %p188 = scmp.lt.s32.totalorder %s15, 1
      %s189 = scalar_select %p188, %s15, 1
      %s190 = smul.addr %s189, 3
      %s191 = smul.addr %s190, 4
      %s192 = scalar_lea.vmem %s0, %s191
      %p193 = scmp.lt.s32.totalorder %s15, 1
      %s194 = scalar_select %p193, %s15, 1
      %s195 = smul.addr %s194, 3
      %s196 = smul.addr %s195, 8
      %s197 = scalar_lea.vmem %s4, %s196
      %v199 = vld [vmem:[%s3] sm:$0x7]
      %v201 = vlaneseq
      %v202 = vshrl.u32 %v201, 7
      %v203 = vsub.s32 0, %v202
      %v204 = vrot.slane %v199, %v203
      %v205 = vlaneseq
      %v206 = vshrl.u32 %v205, 7
      %v207 = vsub.s32 1, %v206
      %v208 = vrot.slane %v199, %v207
      %v209 = vlaneseq
      %v210 = vshrl.u32 %v209, 7
      %v211 = vsub.s32 2, %v210
      %v212 = vrot.slane %v199, %v211
      %v216 = vld [vmem:[%s192] sm:$0xff]
      %v217 = vld [vmem:[%s192 + $0x8] sm:$0xf]
      %v218 = vunpack.c.l.bf16 %v216
      %v219 = vunpack.c.h.bf16 %v216
      %v220 = vunpack.c.l.bf16 %v217
      %221 = vrot.lane.b32.xlu0 %v218, 19
      %v222 = vpop.permute.xlu0 %221
      %223 = vrot.lane.b32.xlu0 0.0, 19
      %v224 = vpop.permute.xlu0 %223
      %225 = vrot.lane.b32.xlu0 %v219, 19
      %v226 = vpop.permute.xlu0 %225
      %227 = vrot.lane.b32.xlu0 %v220, 19
      %v228 = vpop.permute.xlu0 %227
      %v229 = vlaneseq
      %v230 = vand.u32 %v229, 127
      %vm231 = vcmp.lt.s32.totalorder %v230, 19
      %v232 = vsel %vm231, %v226, %v228
      %v233 = vsel %vm231, %v222, %v226
      %v234 = vsel %vm231, %v228, %v222
      %v235 = vpack.c.bf16 %v224, %v234
      %v236 = vpack.c.bf16 %v224, %v233
      %v237 = vpack.c.bf16 %v224, %v232
      %v238 = vpack.c.bf16 %v224, %v224
      %239 = vrot.lane.b32.xlu0 %v218, 18
      %v240 = vpop.permute.xlu0 %239
      %241 = vrot.lane.b32.xlu0 0.0, 18
      %v242 = vpop.permute.xlu0 %241
      %243 = vrot.lane.b32.xlu0 %v219, 18
      %v244 = vpop.permute.xlu0 %243
      %245 = vrot.lane.b32.xlu0 %v220, 18
      %v246 = vpop.permute.xlu0 %245
      %vm247 = vcmp.lt.s32.totalorder %v230, 18
      %v248 = vsel %vm247, %v244, %v246
      %v249 = vsel %vm247, %v240, %v244
      %v250 = vsel %vm247, %v246, %v240
      %v251 = vpack.c.bf16 %v242, %v250
      %v252 = vpack.c.bf16 %v242, %v249
      %v253 = vpack.c.bf16 %v242, %v248
      %v254 = vpack.c.bf16 %v242, %v242
      %255 = vrot.lane.b32.xlu0 %v218, 17
      %v256 = vpop.permute.xlu0 %255
      %257 = vrot.lane.b32.xlu0 0.0, 17
      %v258 = vpop.permute.xlu0 %257
      %259 = vrot.lane.b32.xlu0 %v219, 17
      %v260 = vpop.permute.xlu0 %259
      %261 = vrot.lane.b32.xlu0 %v220, 17
      %v262 = vpop.permute.xlu0 %261
      %vm263 = vcmp.lt.s32.totalorder %v230, 17
      %v264 = vsel %vm263, %v260, %v262
      %v265 = vsel %vm263, %v256, %v260
      %v266 = vsel %vm263, %v262, %v256
      %v267 = vpack.c.bf16 %v258, %v266
      %v268 = vpack.c.bf16 %v258, %v265
      %v269 = vpack.c.bf16 %v258, %v264
      %v270 = vpack.c.bf16 %v258, %v258
      %271 = vrot.lane.b32.xlu0 %v218, 1
      %v272 = vpop.permute.xlu0 %271
      %273 = vrot.lane.b32.xlu0 0.0, 1
      %v274 = vpop.permute.xlu0 %273
      %275 = vrot.lane.b32.xlu0 %v219, 1
      %v276 = vpop.permute.xlu0 %275
      %277 = vrot.lane.b32.xlu0 %v220, 1
      %v278 = vpop.permute.xlu0 %277
      %vm279 = vcmp.lt.s32.totalorder %v230, 1
      %v280 = vsel %vm279, %v276, %v278
      %v281 = vsel %vm279, %v272, %v276
      %v282 = vsel %vm279, %v278, %v272
      %v283 = vpack.c.bf16 %v274, %v282
      %v284 = vpack.c.bf16 %v274, %v281
      %v285 = vpack.c.bf16 %v274, %v280
      %v286 = vpack.c.bf16 %v274, %v274
      %v287 = vpack.c.bf16 0.0, %v218
      %v288 = vpack.c.bf16 0.0, %v219
      %v289 = vpack.c.bf16 0.0, %v220
      %v290 = vpack.c.bf16 0.0, 0.0
      %291 = vrot.lane.b32.xlu0 %v218, 127
      %v292 = vpop.permute.xlu0 %291
      %293 = vrot.lane.b32.xlu0 0.0, 127
      %v294 = vpop.permute.xlu0 %293
      %295 = vrot.lane.b32.xlu0 %v219, 127
      %v296 = vpop.permute.xlu0 %295
      %297 = vrot.lane.b32.xlu0 %v220, 127
      %v298 = vpop.permute.xlu0 %297
      %vm299 = vcmp.lt.s32.totalorder %v230, 127
      %v300 = vsel %vm299, %v296, %v298
      %v301 = vsel %vm299, %v292, %v296
      %v302 = vsel %vm299, %v298, %v292
      %v303 = vpack.c.bf16 %v294, %v301
      %v304 = vpack.c.bf16 %v294, %v300
      %v305 = vpack.c.bf16 %v294, %v302
      %v306 = vpack.c.bf16 %v294, %v294
      %307 = vrot.lane.b32.xlu0 %v218, 111
      %v308 = vpop.permute.xlu0 %307
      %309 = vrot.lane.b32.xlu0 0.0, 111
      %v310 = vpop.permute.xlu0 %309
      %311 = vrot.lane.b32.xlu0 %v219, 111
      %v312 = vpop.permute.xlu0 %311
      %313 = vrot.lane.b32.xlu0 %v220, 111
      %v314 = vpop.permute.xlu0 %313
      %vm315 = vcmp.lt.s32.totalorder %v230, 111
      %v316 = vsel %vm315, %v312, %v314
      %v317 = vsel %vm315, %v308, %v312
      %v318 = vsel %vm315, %v314, %v308
      %v319 = vpack.c.bf16 %v310, %v317
      %v320 = vpack.c.bf16 %v310, %v316
      %v321 = vpack.c.bf16 %v310, %v318
      %v322 = vpack.c.bf16 %v310, %v310
      %323 = vrot.lane.b32.xlu0 %v218, 110
      %v324 = vpop.permute.xlu0 %323
      %325 = vrot.lane.b32.xlu0 0.0, 110
      %v326 = vpop.permute.xlu0 %325
      %327 = vrot.lane.b32.xlu0 %v219, 110
      %v328 = vpop.permute.xlu0 %327
      %329 = vrot.lane.b32.xlu0 %v220, 110
      %v330 = vpop.permute.xlu0 %329
      %vm331 = vcmp.lt.s32.totalorder %v230, 110
      %v332 = vsel %vm331, %v328, %v330
      %v333 = vsel %vm331, %v324, %v328
      %v334 = vsel %vm331, %v330, %v324
      %v335 = vpack.c.bf16 %v326, %v333
      %v336 = vpack.c.bf16 %v326, %v332
      %v337 = vpack.c.bf16 %v326, %v334
      %v338 = vpack.c.bf16 %v326, %v326
      %339 = vrot.lane.b32.xlu0 %v218, 109
      %v340 = vpop.permute.xlu0 %339
      %341 = vrot.lane.b32.xlu0 0.0, 109
      %v342 = vpop.permute.xlu0 %341
      %343 = vrot.lane.b32.xlu0 %v219, 109
      %v344 = vpop.permute.xlu0 %343
      %345 = vrot.lane.b32.xlu0 %v220, 109
      %v346 = vpop.permute.xlu0 %345
      %vm347 = vcmp.lt.s32.totalorder %v230, 109
      %v348 = vsel %vm347, %v344, %v346
      %v349 = vsel %vm347, %v340, %v344
      %v350 = vsel %vm347, %v346, %v340
      %v351 = vpack.c.bf16 %v342, %v349
      %v352 = vpack.c.bf16 %v342, %v348
      %v353 = vpack.c.bf16 %v342, %v350
      %v354 = vpack.c.bf16 %v342, %v342
      %v355 = vld [vmem:[%s1] sm:$0xff]
      %v356 = vld [vmem:[%s1 + $0x8] sm:$0xf]
      %v357 = vld [vmem:[%s1 + $0xc] sm:$0xff]
      %v358 = vld [vmem:[%s1 + $0x14] sm:$0xf]
      %v359 = vld [vmem:[%s1 + $0x18] sm:$0xff]
      %v360 = vld [vmem:[%s1 + $0x20] sm:$0xf]
      %v361 = vld [vmem:[%s1 + $0x24] sm:$0xff]
      %v362 = vld [vmem:[%s1 + $0x2c] sm:$0xf]
      %v363 = vld [vmem:[%s2] sm:$0xff]
      %v364 = vld [vmem:[%s2 + $0x8] sm:$0xff]
      %v365 = vld [vmem:[%s2 + $0x10] sm:$0xff]
      %v366 = vld [vmem:[%s2 + $0x18] sm:$0xff]
      %368 = vset.pattern.permute.xlu0 0
      %369 = vperm.xlu0 %368, %v363
      %v370 = vpop.permute.xlu0 %369
      %373 = vset.pattern.permute.xlu0 0
      %374 = vperm.xlu0 %373, %v364
      %v375 = vpop.permute.xlu0 %374
      %378 = vset.pattern.permute.xlu0 0
      %379 = vperm.xlu0 %378, %v365
      %v380 = vpop.permute.xlu0 %379
      %383 = vset.pattern.permute.xlu0 0
      %384 = vperm.xlu0 %383, %v366
      %v385 = vpop.permute.xlu0 %384
      %v395 = vunpack.c.l.b16 %v355
      %v396 = vunpack.c.h.b16 %v355
      %v397 = vunpack.c.l.b16 %v356
      %v398 = vunpack.c.l.b16 %v357
      %v399 = vunpack.c.h.b16 %v357
      %v400 = vunpack.c.l.b16 %v358
      %v401 = vunpack.c.l.b16 %v359
      %v402 = vunpack.c.h.b16 %v359
      %v403 = vunpack.c.l.b16 %v360
      %v404 = vunpack.c.l.b16 %v361
      %v405 = vunpack.c.h.b16 %v361
      %v406 = vunpack.c.l.b16 %v362
      %v407 = vpack.c.b16 %v398, %v395
      %v408 = vpack.c.b16 %v399, %v396
      %v409 = vpack.c.b16 %v400, %v397
      %v410 = vpack.c.b16 %v404, %v401
      %v411 = vpack.c.b16 %v405, %v402
      %v412 = vpack.c.b16 %v406, %v403
      %vm417 = vcmask 261120
      %v419 = vsel %vm417, %v409, 0
      %v422 = vsel %vm417, %v412, 0
      %424 = vmatprep.subr.bf16.mxu0 %v236
      %425 = vmatpush1.bf16.msra.mxu0 %v235
      %426 = vmatprep.subr.bf16.mxu0 %v238
      %427 = vmatpush1.bf16.msra.mxu0 %v238
      %428 = vmatprep.subr.bf16.mxu0 %v252
      %429 = vmatpush1.bf16.msra.mxu0 %v251
      %430 = vmatprep.subr.bf16.mxu0 %v254
      %431 = vmatpush1.bf16.msra.mxu0 %v254
      %432 = vmatprep.subr.bf16.mxu0 %v268
      %433 = vmatpush1.bf16.msra.mxu0 %v267
      %434 = vmatprep.subr.bf16.mxu0 %v270
      %435 = vmatpush1.bf16.msra.mxu0 %v270
      %436 = vmatprep.subr.bf16.mxu0 %v284
      %437 = vmatpush1.bf16.msra.mxu0 %v283
      %438 = vmatprep.subr.bf16.mxu0 %v286
      %439 = vmatpush1.bf16.msra.mxu0 %v286
      %440 = vmatprep.subr.bf16.mxu0 %v288
      %441 = vmatpush1.bf16.msra.mxu0 %v287
      %442 = vmatprep.subr.bf16.mxu0 %v290
      %443 = vmatpush1.bf16.msra.mxu0 %v290
      %444 = vmatprep.subr.bf16.mxu0 %v304
      %445 = vmatpush1.bf16.msra.mxu0 %v303
      %446 = vmatprep.subr.bf16.mxu0 %v306
      %447 = vmatpush1.bf16.msra.mxu0 %v306
      %448 = vmatprep.subr.bf16.mxu0 %v320
      %449 = vmatpush1.bf16.msra.mxu0 %v319
      %450 = vmatprep.subr.bf16.mxu0 %v322
      %451 = vmatpush1.bf16.msra.mxu0 %v322
      %452 = vmatprep.subr.bf16.mxu0 %v336
      %453 = vmatpush1.bf16.msra.mxu0 %v335
      %454 = vmatprep.subr.bf16.mxu0 %v338
      %455 = vmatpush1.bf16.msra.mxu0 %v338
      %456 = vmatprep.mubr.bf16.mxu0 %v408
      %457 = vmatmul.mubr.bf16.gmra.mrb[0].mxu0 %v407
      %v458 = vpop.f32.mrb[0].mxu0
      %v459 = vadd.f32 %v370, %v458
      %v460 = vpop.f32.mrb[0].mxu0
      %v461 = vadd.f32 %v370, %v460
      %v462 = vpop.f32.mrb[0].mxu0
      %v463 = vadd.f32 %v375, %v462
      %v464 = vpop.f32.mrb[0].mxu0
      %v465 = vadd.f32 %v375, %v464
      %466 = vmatprep.mubr.bf16.mxu0 %v411
      %467 = vmatmul.mubr.bf16.gmra.mrb[0].mxu0 %v410
      %v468 = vpop.f32.mrb[0].mxu0
      %v469 = vadd.f32 %v380, %v468
      %v470 = vpop.f32.mrb[0].mxu0
      %v471 = vadd.f32 %v380, %v470
      %v472 = vpop.f32.mrb[0].mxu0
      %v473 = vadd.f32 %v385, %v472
      %v474 = vpop.f32.mrb[0].mxu0
      %v475 = vadd.f32 %v385, %v474
      %476 = vdwg.mxu0
      %477 = vmatprep.subr.bf16.mxu0 %v352
      %478 = vmatpush1.bf16.msra.mxu0 %v351
      %479 = vmatprep.subr.bf16.mxu0 %v354
      %480 = vmatpush1.bf16.msra.mxu0 %v354
      %481 = vmatprep.subr.bf16.mxu0 0
      %482 = vmatpush1.bf16.msra.mxu0 0
      %483 = vmatprep.subr.bf16.mxu0 0
      %484 = vmatpush1.bf16.msra.mxu0 0
      %485 = vmatprep.subr.bf16.mxu0 0
      %486 = vmatpush1.bf16.msra.mxu0 0
      %487 = vmatprep.subr.bf16.mxu0 0
      %488 = vmatpush1.bf16.msra.mxu0 0
      %489 = vmatprep.subr.bf16.mxu0 0
      %490 = vmatpush1.bf16.msra.mxu0 0
      %491 = vmatprep.subr.bf16.mxu0 0
      %492 = vmatpush1.bf16.msra.mxu0 0
      %493 = vmatprep.subr.bf16.mxu0 0
      %494 = vmatpush1.bf16.msra.mxu0 0
      %495 = vmatprep.subr.bf16.mxu0 0
      %496 = vmatpush1.bf16.msra.mxu0 0
      %497 = vmatprep.subr.bf16.mxu0 0
      %498 = vmatpush1.bf16.msra.mxu0 0
      %499 = vmatprep.subr.bf16.mxu0 0
      %500 = vmatpush1.bf16.msra.mxu0 0
      %501 = vmatprep.subr.bf16.mxu0 0
      %502 = vmatpush1.bf16.msra.mxu0 0
      %503 = vmatprep.subr.bf16.mxu0 0
      %504 = vmatpush1.bf16.msra.mxu0 0
      %505 = vmatprep.subr.bf16.mxu0 0
      %506 = vmatpush1.bf16.msra.mxu0 0
      %507 = vmatprep.subr.bf16.mxu0 0
      %508 = vmatpush1.bf16.msra.mxu0 0
      %509 = vmatprep.mubr.bf16.mxu0 0
      %510 = vmatmul.mubr.bf16.gmra.mrb[0].mxu0 %v419
      %v511 = vpop.f32.mrb[0].mxu0
      %v512 = vadd.f32 %v459, %v511
      %v513 = vpop.f32.mrb[0].mxu0
      %v514 = vadd.f32 %v461, %v513
      %v515 = vpop.f32.mrb[0].mxu0
      %v516 = vadd.f32 %v463, %v515
      %v517 = vpop.f32.mrb[0].mxu0
      %v518 = vadd.f32 %v465, %v517
      %519 = vmatprep.mubr.bf16.mxu0 0
      %520 = vmatmul.mubr.bf16.gmra.mrb[0].mxu0 %v422
      %v521 = vpop.f32.mrb[0].mxu0
      %v522 = vadd.f32 %v469, %v521
      %v523 = vpop.f32.mrb[0].mxu0
      %v524 = vadd.f32 %v471, %v523
      %v525 = vpop.f32.mrb[0].mxu0
      %v526 = vadd.f32 %v473, %v525
      %v527 = vpop.f32.mrb[0].mxu0
      %v528 = vadd.f32 %v475, %v527
      %529 = vdwg.mxu0
      %530 = vmatprep.subr.bf16.mxu0 0
      %531 = vmatpush1.bf16.msra.mxu0 %v237
      %532 = vmatprep.subr.bf16.mxu0 0
      %533 = vmatpush1.bf16.msra.mxu0 %v238
      %534 = vmatprep.subr.bf16.mxu0 0
      %535 = vmatpush1.bf16.msra.mxu0 %v253
      %536 = vmatprep.subr.bf16.mxu0 0
      %537 = vmatpush1.bf16.msra.mxu0 %v254
      %538 = vmatprep.subr.bf16.mxu0 0
      %539 = vmatpush1.bf16.msra.mxu0 %v269
      %540 = vmatprep.subr.bf16.mxu0 0
      %541 = vmatpush1.bf16.msra.mxu0 %v270
      %542 = vmatprep.subr.bf16.mxu0 0
      %543 = vmatpush1.bf16.msra.mxu0 %v285
      %544 = vmatprep.subr.bf16.mxu0 0
      %545 = vmatpush1.bf16.msra.mxu0 %v286
      %546 = vmatprep.subr.bf16.mxu0 0
      %547 = vmatpush1.bf16.msra.mxu0 %v289
      %548 = vmatprep.subr.bf16.mxu0 0
      %549 = vmatpush1.bf16.msra.mxu0 %v290
      %550 = vmatprep.subr.bf16.mxu0 0
      %551 = vmatpush1.bf16.msra.mxu0 %v305
      %552 = vmatprep.subr.bf16.mxu0 0
      %553 = vmatpush1.bf16.msra.mxu0 %v306
      %554 = vmatprep.subr.bf16.mxu0 0
      %555 = vmatpush1.bf16.msra.mxu0 %v321
      %556 = vmatprep.subr.bf16.mxu0 0
      %557 = vmatpush1.bf16.msra.mxu0 %v322
      %558 = vmatprep.subr.bf16.mxu0 0
      %559 = vmatpush1.bf16.msra.mxu0 %v337
      %560 = vmatprep.subr.bf16.mxu0 0
      %561 = vmatpush1.bf16.msra.mxu0 %v338
      %562 = vmatprep.mubr.bf16.mxu0 %v408
      %563 = vmatmul.mubr.bf16.gmra.mrb[0].mxu0 %v407
      %v564 = vpop.f32.mrb[0].mxu0
      %v565 = vadd.f32 %v370, %v564
      %v566 = vpop.f32.mrb[0].mxu0
      %v567 = vpop.f32.mrb[0].mxu0
      %v568 = vadd.f32 %v375, %v567
      %v569 = vpop.f32.mrb[0].mxu0
      %570 = vmatprep.mubr.bf16.mxu0 %v411
      %571 = vmatmul.mubr.bf16.gmra.mrb[0].mxu0 %v410
      %v572 = vpop.f32.mrb[0].mxu0
      %v573 = vadd.f32 %v380, %v572
      %v574 = vpop.f32.mrb[0].mxu0
      %v575 = vpop.f32.mrb[0].mxu0
      %v576 = vadd.f32 %v385, %v575
      %v577 = vpop.f32.mrb[0].mxu0
      %578 = vdwg.mxu0
      %579 = vmatprep.subr.bf16.mxu0 0
      %580 = vmatpush1.bf16.msra.mxu0 %v353
      %581 = vmatprep.subr.bf16.mxu0 0
      %582 = vmatpush1.bf16.msra.mxu0 %v354
      %583 = vmatprep.subr.bf16.mxu0 0
      %584 = vmatpush1.bf16.msra.mxu0 0
      %585 = vmatprep.subr.bf16.mxu0 0
      %586 = vmatpush1.bf16.msra.mxu0 0
      %587 = vmatprep.subr.bf16.mxu0 0
      %588 = vmatpush1.bf16.msra.mxu0 0
      %589 = vmatprep.subr.bf16.mxu0 0
      %590 = vmatpush1.bf16.msra.mxu0 0
      %591 = vmatprep.subr.bf16.mxu0 0
      %592 = vmatpush1.bf16.msra.mxu0 0
      %593 = vmatprep.subr.bf16.mxu0 0
      %594 = vmatpush1.bf16.msra.mxu0 0
      %595 = vmatprep.subr.bf16.mxu0 0
      %596 = vmatpush1.bf16.msra.mxu0 0
      %597 = vmatprep.subr.bf16.mxu0 0
      %598 = vmatpush1.bf16.msra.mxu0 0
      %599 = vmatprep.subr.bf16.mxu0 0
      %600 = vmatpush1.bf16.msra.mxu0 0
      %601 = vmatprep.subr.bf16.mxu0 0
      %602 = vmatpush1.bf16.msra.mxu0 0
      %603 = vmatprep.subr.bf16.mxu0 0
      %604 = vmatpush1.bf16.msra.mxu0 0
      %605 = vmatprep.subr.bf16.mxu0 0
      %606 = vmatpush1.bf16.msra.mxu0 0
      %607 = vmatprep.subr.bf16.mxu0 0
      %608 = vmatpush1.bf16.msra.mxu0 0
      %609 = vmatprep.subr.bf16.mxu0 0
      %610 = vmatpush1.bf16.msra.mxu0 0
      %611 = vmatprep.mubr.bf16.mxu0 0
      %612 = vmatmul.mubr.bf16.gmra.mrb[0].mxu0 %v419
      %v613 = vpop.f32.mrb[0].mxu0
      %v614 = vadd.f32 %v565, %v613
      %v615 = vpop.f32.mrb[0].mxu0
      %v616 = vpop.f32.mrb[0].mxu0
      %v617 = vadd.f32 %v568, %v616
      %v618 = vpop.f32.mrb[0].mxu0
      %619 = vmatprep.mubr.bf16.mxu0 0
      %620 = vmatmul.mubr.bf16.gmra.mrb[0].mxu0 %v422
      %v621 = vpop.f32.mrb[0].mxu0
      %v622 = vadd.f32 %v573, %v621
      %v623 = vpop.f32.mrb[0].mxu0
      %v624 = vpop.f32.mrb[0].mxu0
      %v625 = vadd.f32 %v576, %v624
      %v626 = vpop.f32.mrb[0].mxu0
      %627 = vdwg.mxu0
      %v628 = vmax.f32 %v512, 0.0
      %v629 = vmax.f32 %v514, 0.0
      %v630 = vmax.f32 %v614, 0.0
      %v631 = vmax.f32 %v516, 0.0
      %v632 = vmax.f32 %v518, 0.0
      %v633 = vmax.f32 %v617, 0.0
      %v634 = vmax.f32 %v522, 0.0
      %v635 = vmax.f32 %v524, 0.0
      %v636 = vmax.f32 %v622, 0.0
      %v637 = vmax.f32 %v526, 0.0
      %v638 = vmax.f32 %v528, 0.0
      %v639 = vmax.f32 %v625, 0.0
      %v640 = vmul.f32 %v628, %v204
      %v641 = vmul.f32 %v629, %v208
      %v642 = vmul.f32 %v630, %v212
      %v643 = vmul.f32 %v631, %v204
      %v644 = vmul.f32 %v632, %v208
      %v645 = vmul.f32 %v633, %v212
      %v646 = vmul.f32 %v634, %v204
      %v647 = vmul.f32 %v635, %v208
      %v648 = vmul.f32 %v636, %v212
      %v649 = vmul.f32 %v637, %v204
      %v650 = vmul.f32 %v638, %v208
      %v651 = vmul.f32 %v639, %v212
      %652 = vrot.lane.b32.xlu0 %v640, 19
      %v653 = vpop.permute.xlu0 %652
      %654 = vrot.lane.b32.xlu0 %v643, 19
      %v655 = vpop.permute.xlu0 %654
      %656 = vrot.lane.b32.xlu0 %v646, 19
      %v657 = vpop.permute.xlu0 %656
      %658 = vrot.lane.b32.xlu0 %v649, 19
      %v659 = vpop.permute.xlu0 %658
      %660 = vrot.lane.b32.xlu0 %v641, 19
      %v661 = vpop.permute.xlu0 %660
      %662 = vrot.lane.b32.xlu0 %v644, 19
      %v663 = vpop.permute.xlu0 %662
      %664 = vrot.lane.b32.xlu0 %v647, 19
      %v665 = vpop.permute.xlu0 %664
      %666 = vrot.lane.b32.xlu0 %v650, 19
      %v667 = vpop.permute.xlu0 %666
      %668 = vrot.lane.b32.xlu0 %v642, 19
      %v669 = vpop.permute.xlu0 %668
      %670 = vrot.lane.b32.xlu0 %v645, 19
      %v671 = vpop.permute.xlu0 %670
      %672 = vrot.lane.b32.xlu0 %v648, 19
      %v673 = vpop.permute.xlu0 %672
      %674 = vrot.lane.b32.xlu0 %v651, 19
      %v675 = vpop.permute.xlu0 %674
      %v676 = vsel %vm231, %v661, %v669
      %v677 = vsel %vm231, %v663, %v671
      %v678 = vsel %vm231, %v665, %v673
      %v679 = vsel %vm231, %v667, %v675
      %v680 = vsel %vm231, %v653, %v661
      %v681 = vsel %vm231, %v655, %v663
      %v682 = vsel %vm231, %v657, %v665
      %v683 = vsel %vm231, %v659, %v667
      %v684 = vsel %vm231, %v669, %v653
      %v685 = vsel %vm231, %v671, %v655
      %v686 = vsel %vm231, %v673, %v657
      %v687 = vsel %vm231, %v675, %v659
      %v688 = vpack.c.bf16 %v685, %v684
      %v689 = vpack.c.bf16 %v681, %v680
      %v690 = vpack.c.bf16 %v677, %v676
      %v691 = vpack.c.bf16 %v687, %v686
      %v692 = vpack.c.bf16 %v683, %v682
      %v693 = vpack.c.bf16 %v679, %v678
      %694 = vrot.lane.b32.xlu0 %v640, 18
      %v695 = vpop.permute.xlu0 %694
      %696 = vrot.lane.b32.xlu0 %v643, 18
      %v697 = vpop.permute.xlu0 %696
      %698 = vrot.lane.b32.xlu0 %v646, 18
      %v699 = vpop.permute.xlu0 %698
      %700 = vrot.lane.b32.xlu0 %v649, 18
      %v701 = vpop.permute.xlu0 %700
      %702 = vrot.lane.b32.xlu0 %v641, 18
      %v703 = vpop.permute.xlu0 %702
      %704 = vrot.lane.b32.xlu0 %v644, 18
      %v705 = vpop.permute.xlu0 %704
      %706 = vrot.lane.b32.xlu0 %v647, 18
      %v707 = vpop.permute.xlu0 %706
      %708 = vrot.lane.b32.xlu0 %v650, 18
      %v709 = vpop.permute.xlu0 %708
      %710 = vrot.lane.b32.xlu0 %v642, 18
      %v711 = vpop.permute.xlu0 %710
      %712 = vrot.lane.b32.xlu0 %v645, 18
      %v713 = vpop.permute.xlu0 %712
      %714 = vrot.lane.b32.xlu0 %v648, 18
      %v715 = vpop.permute.xlu0 %714
      %716 = vrot.lane.b32.xlu0 %v651, 18
      %v717 = vpop.permute.xlu0 %716
      %v718 = vsel %vm247, %v703, %v711
      %v719 = vsel %vm247, %v705, %v713
      %v720 = vsel %vm247, %v707, %v715
      %v721 = vsel %vm247, %v709, %v717
      %v722 = vsel %vm247, %v695, %v703
      %v723 = vsel %vm247, %v697, %v705
      %v724 = vsel %vm247, %v699, %v707
      %v725 = vsel %vm247, %v701, %v709
      %v726 = vsel %vm247, %v711, %v695
      %v727 = vsel %vm247, %v713, %v697
      %v728 = vsel %vm247, %v715, %v699
      %v729 = vsel %vm247, %v717, %v701
      %v730 = vpack.c.bf16 %v727, %v726
      %v731 = vpack.c.bf16 %v723, %v722
      %v732 = vpack.c.bf16 %v719, %v718
      %v733 = vpack.c.bf16 %v729, %v728
      %v734 = vpack.c.bf16 %v725, %v724
      %v735 = vpack.c.bf16 %v721, %v720
      %736 = vrot.lane.b32.xlu0 %v640, 17
      %v737 = vpop.permute.xlu0 %736
      %738 = vrot.lane.b32.xlu0 %v643, 17
      %v739 = vpop.permute.xlu0 %738
      %740 = vrot.lane.b32.xlu0 %v646, 17
      %v741 = vpop.permute.xlu0 %740
      %742 = vrot.lane.b32.xlu0 %v649, 17
      %v743 = vpop.permute.xlu0 %742
      %744 = vrot.lane.b32.xlu0 %v641, 17
      %v745 = vpop.permute.xlu0 %744
      %746 = vrot.lane.b32.xlu0 %v644, 17
      %v747 = vpop.permute.xlu0 %746
      %748 = vrot.lane.b32.xlu0 %v647, 17
      %v749 = vpop.permute.xlu0 %748
      %750 = vrot.lane.b32.xlu0 %v650, 17
      %v751 = vpop.permute.xlu0 %750
      %752 = vrot.lane.b32.xlu0 %v642, 17
      %v753 = vpop.permute.xlu0 %752
      %754 = vrot.lane.b32.xlu0 %v645, 17
      %v755 = vpop.permute.xlu0 %754
      %756 = vrot.lane.b32.xlu0 %v648, 17
      %v757 = vpop.permute.xlu0 %756
      %758 = vrot.lane.b32.xlu0 %v651, 17
      %v759 = vpop.permute.xlu0 %758
      %v760 = vsel %vm263, %v745, %v753
      %v761 = vsel %vm263, %v747, %v755
      %v762 = vsel %vm263, %v749, %v757
      %v763 = vsel %vm263, %v751, %v759
      %v764 = vsel %vm263, %v737, %v745
      %v765 = vsel %vm263, %v739, %v747
      %v766 = vsel %vm263, %v741, %v749
      %v767 = vsel %vm263, %v743, %v751
      %v768 = vsel %vm263, %v753, %v737
      %v769 = vsel %vm263, %v755, %v739
      %v770 = vsel %vm263, %v757, %v741
      %v771 = vsel %vm263, %v759, %v743
      %v772 = vpack.c.bf16 %v769, %v768
      %v773 = vpack.c.bf16 %v765, %v764
      %v774 = vpack.c.bf16 %v761, %v760
      %v775 = vpack.c.bf16 %v771, %v770
      %v776 = vpack.c.bf16 %v767, %v766
      %v777 = vpack.c.bf16 %v763, %v762
      %778 = vrot.lane.b32.xlu0 %v640, 1
      %v779 = vpop.permute.xlu0 %778
      %780 = vrot.lane.b32.xlu0 %v643, 1
      %v781 = vpop.permute.xlu0 %780
      %782 = vrot.lane.b32.xlu0 %v646, 1
      %v783 = vpop.permute.xlu0 %782
      %784 = vrot.lane.b32.xlu0 %v649, 1
      %v785 = vpop.permute.xlu0 %784
      %786 = vrot.lane.b32.xlu0 %v641, 1
      %v787 = vpop.permute.xlu0 %786
      %788 = vrot.lane.b32.xlu0 %v644, 1
      %v789 = vpop.permute.xlu0 %788
      %790 = vrot.lane.b32.xlu0 %v647, 1
      %v791 = vpop.permute.xlu0 %790
      %792 = vrot.lane.b32.xlu0 %v650, 1
      %v793 = vpop.permute.xlu0 %792
      %794 = vrot.lane.b32.xlu0 %v642, 1
      %v795 = vpop.permute.xlu0 %794
      %796 = vrot.lane.b32.xlu0 %v645, 1
      %v797 = vpop.permute.xlu0 %796
      %798 = vrot.lane.b32.xlu0 %v648, 1
      %v799 = vpop.permute.xlu0 %798
      %800 = vrot.lane.b32.xlu0 %v651, 1
      %v801 = vpop.permute.xlu0 %800
      %v802 = vsel %vm279, %v787, %v795
      %v803 = vsel %vm279, %v789, %v797
      %v804 = vsel %vm279, %v791, %v799
      %v805 = vsel %vm279, %v793, %v801
      %v806 = vsel %vm279, %v779, %v787
      %v807 = vsel %vm279, %v781, %v789
      %v808 = vsel %vm279, %v783, %v791
      %v809 = vsel %vm279, %v785, %v793
      %v810 = vsel %vm279, %v795, %v779
      %v811 = vsel %vm279, %v797, %v781
      %v812 = vsel %vm279, %v799, %v783
      %v813 = vsel %vm279, %v801, %v785
      %v814 = vpack.c.bf16 %v811, %v810
      %v815 = vpack.c.bf16 %v807, %v806
      %v816 = vpack.c.bf16 %v803, %v802
      %v817 = vpack.c.bf16 %v813, %v812
      %v818 = vpack.c.bf16 %v809, %v808
      %v819 = vpack.c.bf16 %v805, %v804
      %v820 = vpack.c.bf16 %v643, %v640
      %v821 = vpack.c.bf16 %v644, %v641
      %v822 = vpack.c.bf16 %v645, %v642
      %v823 = vpack.c.bf16 %v649, %v646
      %v824 = vpack.c.bf16 %v650, %v647
      %v825 = vpack.c.bf16 %v651, %v648
      %826 = vrot.lane.b32.xlu0 %v640, 127
      %v827 = vpop.permute.xlu0 %826
      %828 = vrot.lane.b32.xlu0 %v643, 127
      %v829 = vpop.permute.xlu0 %828
      %830 = vrot.lane.b32.xlu0 %v646, 127
      %v831 = vpop.permute.xlu0 %830
      %832 = vrot.lane.b32.xlu0 %v649, 127
      %v833 = vpop.permute.xlu0 %832
      %834 = vrot.lane.b32.xlu0 %v641, 127
      %v835 = vpop.permute.xlu0 %834
      %836 = vrot.lane.b32.xlu0 %v644, 127
      %v837 = vpop.permute.xlu0 %836
      %838 = vrot.lane.b32.xlu0 %v647, 127
      %v839 = vpop.permute.xlu0 %838
      %840 = vrot.lane.b32.xlu0 %v650, 127
      %v841 = vpop.permute.xlu0 %840
      %842 = vrot.lane.b32.xlu0 %v642, 127
      %v843 = vpop.permute.xlu0 %842
      %844 = vrot.lane.b32.xlu0 %v645, 127
      %v845 = vpop.permute.xlu0 %844
      %846 = vrot.lane.b32.xlu0 %v648, 127
      %v847 = vpop.permute.xlu0 %846
      %848 = vrot.lane.b32.xlu0 %v651, 127
      %v849 = vpop.permute.xlu0 %848
      %v850 = vsel %vm299, %v835, %v843
      %v851 = vsel %vm299, %v837, %v845
      %v852 = vsel %vm299, %v839, %v847
      %v853 = vsel %vm299, %v841, %v849
      %v854 = vsel %vm299, %v827, %v835
      %v855 = vsel %vm299, %v829, %v837
      %v856 = vsel %vm299, %v831, %v839
      %v857 = vsel %vm299, %v833, %v841
      %v858 = vsel %vm299, %v843, %v827
      %v859 = vsel %vm299, %v845, %v829
      %v860 = vsel %vm299, %v847, %v831
      %v861 = vsel %vm299, %v849, %v833
      %v862 = vpack.c.bf16 %v855, %v854
      %v863 = vpack.c.bf16 %v851, %v850
      %v864 = vpack.c.bf16 %v859, %v858
      %v865 = vpack.c.bf16 %v857, %v856
      %v866 = vpack.c.bf16 %v853, %v852
      %v867 = vpack.c.bf16 %v861, %v860
      %868 = vrot.lane.b32.xlu0 %v640, 111
      %v869 = vpop.permute.xlu0 %868
      %870 = vrot.lane.b32.xlu0 %v643, 111
      %v871 = vpop.permute.xlu0 %870
      %872 = vrot.lane.b32.xlu0 %v646, 111
      %v873 = vpop.permute.xlu0 %872
      %874 = vrot.lane.b32.xlu0 %v649, 111
      %v875 = vpop.permute.xlu0 %874
      %876 = vrot.lane.b32.xlu0 %v641, 111
      %v877 = vpop.permute.xlu0 %876
      %878 = vrot.lane.b32.xlu0 %v644, 111
      %v879 = vpop.permute.xlu0 %878
      %880 = vrot.lane.b32.xlu0 %v647, 111
      %v881 = vpop.permute.xlu0 %880
      %882 = vrot.lane.b32.xlu0 %v650, 111
      %v883 = vpop.permute.xlu0 %882
      %884 = vrot.lane.b32.xlu0 %v642, 111
      %v885 = vpop.permute.xlu0 %884
      %886 = vrot.lane.b32.xlu0 %v645, 111
      %v887 = vpop.permute.xlu0 %886
      %888 = vrot.lane.b32.xlu0 %v648, 111
      %v889 = vpop.permute.xlu0 %888
      %890 = vrot.lane.b32.xlu0 %v651, 111
      %v891 = vpop.permute.xlu0 %890
      %v892 = vsel %vm315, %v877, %v885
      %v893 = vsel %vm315, %v879, %v887
      %v894 = vsel %vm315, %v881, %v889
      %v895 = vsel %vm315, %v883, %v891
      %v896 = vsel %vm315, %v869, %v877
      %v897 = vsel %vm315, %v871, %v879
      %v898 = vsel %vm315, %v873, %v881
      %v899 = vsel %vm315, %v875, %v883
      %v900 = vsel %vm315, %v885, %v869
      %v901 = vsel %vm315, %v887, %v871
      %v902 = vsel %vm315, %v889, %v873
      %v903 = vsel %vm315, %v891, %v875
      %v904 = vpack.c.bf16 %v897, %v896
      %v905 = vpack.c.bf16 %v893, %v892
      %v906 = vpack.c.bf16 %v901, %v900
      %v907 = vpack.c.bf16 %v899, %v898
      %v908 = vpack.c.bf16 %v895, %v894
      %v909 = vpack.c.bf16 %v903, %v902
      %910 = vrot.lane.b32.xlu0 %v640, 110
      %v911 = vpop.permute.xlu0 %910
      %912 = vrot.lane.b32.xlu0 %v643, 110
      %v913 = vpop.permute.xlu0 %912
      %914 = vrot.lane.b32.xlu0 %v646, 110
      %v915 = vpop.permute.xlu0 %914
      %916 = vrot.lane.b32.xlu0 %v649, 110
      %v917 = vpop.permute.xlu0 %916
      %918 = vrot.lane.b32.xlu0 %v641, 110
      %v919 = vpop.permute.xlu0 %918
      %920 = vrot.lane.b32.xlu0 %v644, 110
      %v921 = vpop.permute.xlu0 %920
      %922 = vrot.lane.b32.xlu0 %v647, 110
      %v923 = vpop.permute.xlu0 %922
      %924 = vrot.lane.b32.xlu0 %v650, 110
      %v925 = vpop.permute.xlu0 %924
      %926 = vrot.lane.b32.xlu0 %v642, 110
      %v927 = vpop.permute.xlu0 %926
      %928 = vrot.lane.b32.xlu0 %v645, 110
      %v929 = vpop.permute.xlu0 %928
      %930 = vrot.lane.b32.xlu0 %v648, 110
      %v931 = vpop.permute.xlu0 %930
      %932 = vrot.lane.b32.xlu0 %v651, 110
      %v933 = vpop.permute.xlu0 %932
      %v934 = vsel %vm331, %v919, %v927
      %v935 = vsel %vm331, %v921, %v929
      %v936 = vsel %vm331, %v923, %v931
      %v937 = vsel %vm331, %v925, %v933
      %v938 = vsel %vm331, %v911, %v919
      %v939 = vsel %vm331, %v913, %v921
      %v940 = vsel %vm331, %v915, %v923
      %v941 = vsel %vm331, %v917, %v925
      %v942 = vsel %vm331, %v927, %v911
      %v943 = vsel %vm331, %v929, %v913
      %v944 = vsel %vm331, %v931, %v915
      %v945 = vsel %vm331, %v933, %v917
      %v946 = vpack.c.bf16 %v939, %v938
      %v947 = vpack.c.bf16 %v935, %v934
      %v948 = vpack.c.bf16 %v943, %v942
      %v949 = vpack.c.bf16 %v941, %v940
      %v950 = vpack.c.bf16 %v937, %v936
      %v951 = vpack.c.bf16 %v945, %v944
      %952 = vrot.lane.b32.xlu0 %v640, 109
      %v953 = vpop.permute.xlu0 %952
      %954 = vrot.lane.b32.xlu0 %v643, 109
      %v955 = vpop.permute.xlu0 %954
      %956 = vrot.lane.b32.xlu0 %v646, 109
      %v957 = vpop.permute.xlu0 %956
      %958 = vrot.lane.b32.xlu0 %v649, 109
      %v959 = vpop.permute.xlu0 %958
      %960 = vrot.lane.b32.xlu0 %v641, 109
      %v961 = vpop.permute.xlu0 %960
      %962 = vrot.lane.b32.xlu0 %v644, 109
      %v963 = vpop.permute.xlu0 %962
      %964 = vrot.lane.b32.xlu0 %v647, 109
      %v965 = vpop.permute.xlu0 %964
      %966 = vrot.lane.b32.xlu0 %v650, 109
      %v967 = vpop.permute.xlu0 %966
      %968 = vrot.lane.b32.xlu0 %v642, 109
      %v969 = vpop.permute.xlu0 %968
      %970 = vrot.lane.b32.xlu0 %v645, 109
      %v971 = vpop.permute.xlu0 %970
      %972 = vrot.lane.b32.xlu0 %v648, 109
      %v973 = vpop.permute.xlu0 %972
      %974 = vrot.lane.b32.xlu0 %v651, 109
      %v975 = vpop.permute.xlu0 %974
      %v976 = vsel %vm347, %v961, %v969
      %v977 = vsel %vm347, %v963, %v971
      %v978 = vsel %vm347, %v965, %v973
      %v979 = vsel %vm347, %v967, %v975
      %v980 = vsel %vm347, %v953, %v961
      %v981 = vsel %vm347, %v955, %v963
      %v982 = vsel %vm347, %v957, %v965
      %v983 = vsel %vm347, %v959, %v967
      %v984 = vsel %vm347, %v969, %v953
      %v985 = vsel %vm347, %v971, %v955
      %v986 = vsel %vm347, %v973, %v957
      %v987 = vsel %vm347, %v975, %v959
      %v988 = vpack.c.bf16 %v981, %v980
      %v989 = vpack.c.bf16 %v977, %v976
      %v990 = vpack.c.bf16 %v985, %v984
      %v991 = vpack.c.bf16 %v983, %v982
      %v992 = vpack.c.bf16 %v979, %v978
      %v993 = vpack.c.bf16 %v987, %v986
      %s994 = scalar_lea.vmem %s1, 48
      %v995 = vld [vmem:[%s994] sm:$0xff]
      %v996 = vld [vmem:[%s994 + $0x8] sm:$0xf]
      %v997 = vld [vmem:[%s994 + $0xc] sm:$0xff]
      %v998 = vld [vmem:[%s994 + $0x14] sm:$0xf]
      %v999 = vld [vmem:[%s994 + $0x18] sm:$0xff]
      %v1000 = vld [vmem:[%s994 + $0x20] sm:$0xf]
      %v1001 = vld [vmem:[%s994 + $0x24] sm:$0xff]
      %v1002 = vld [vmem:[%s994 + $0x2c] sm:$0xf]
      %s1003 = scalar_lea.vmem %s2, 32
      %v1004 = vld [vmem:[%s1003] sm:$0xff]
      %v1005 = vld [vmem:[%s1003 + $0x8] sm:$0xff]
      %v1006 = vld [vmem:[%s1003 + $0x10] sm:$0xff]
      %v1007 = vld [vmem:[%s1003 + $0x18] sm:$0xff]
      %1009 = vset.pattern.permute.xlu0 0
      %1010 = vperm.xlu0 %1009, %v1004
      %v1011 = vpop.permute.xlu0 %1010
      %1014 = vset.pattern.permute.xlu0 0
      %1015 = vperm.xlu0 %1014, %v1005
      %v1016 = vpop.permute.xlu0 %1015
      %1019 = vset.pattern.permute.xlu0 0
      %1020 = vperm.xlu0 %1019, %v1006
      %v1021 = vpop.permute.xlu0 %1020
      %1024 = vset.pattern.permute.xlu0 0
      %1025 = vperm.xlu0 %1024, %v1007
      %v1026 = vpop.permute.xlu0 %1025
      %v1036 = vunpack.c.l.b16 %v995
      %v1037 = vunpack.c.h.b16 %v995
      %v1038 = vunpack.c.l.b16 %v996
      %v1039 = vunpack.c.l.b16 %v997
      %v1040 = vunpack.c.h.b16 %v997
      %v1041 = vunpack.c.l.b16 %v998
      %v1042 = vunpack.c.l.b16 %v999
      %v1043 = vunpack.c.h.b16 %v999
      %v1044 = vunpack.c.l.b16 %v1000
      %v1045 = vunpack.c.l.b16 %v1001
      %v1046 = vunpack.c.h.b16 %v1001
      %v1047 = vunpack.c.l.b16 %v1002
      %v1048 = vpack.c.b16 %v1039, %v1036
      %v1049 = vpack.c.b16 %v1040, %v1037
      %v1050 = vpack.c.b16 %v1041, %v1038
      %v1051 = vpack.c.b16 %v1045, %v1042
      %v1052 = vpack.c.b16 %v1046, %v1043
      %v1053 = vpack.c.b16 %v1047, %v1044
      %v1059 = vsel %vm417, %v1050, 0
      %v1062 = vsel %vm417, %v1053, 0
      %1064 = vmatprep.subr.bf16.mxu0 %v689
      %1065 = vmatpush1.bf16.msra.mxu0 %v688
      %1066 = vmatprep.subr.bf16.mxu0 %v692
      %1067 = vmatpush1.bf16.msra.mxu0 %v691
      %1068 = vmatprep.subr.bf16.mxu0 %v731
      %1069 = vmatpush1.bf16.msra.mxu0 %v730
      %1070 = vmatprep.subr.bf16.mxu0 %v734
      %1071 = vmatpush1.bf16.msra.mxu0 %v733
      %1072 = vmatprep.subr.bf16.mxu0 %v773
      %1073 = vmatpush1.bf16.msra.mxu0 %v772
      %1074 = vmatprep.subr.bf16.mxu0 %v776
      %1075 = vmatpush1.bf16.msra.mxu0 %v775
      %1076 = vmatprep.subr.bf16.mxu0 %v815
      %1077 = vmatpush1.bf16.msra.mxu0 %v814
      %1078 = vmatprep.subr.bf16.mxu0 %v818
      %1079 = vmatpush1.bf16.msra.mxu0 %v817
      %1080 = vmatprep.subr.bf16.mxu0 %v821
      %1081 = vmatpush1.bf16.msra.mxu0 %v820
      %1082 = vmatprep.subr.bf16.mxu0 %v824
      %1083 = vmatpush1.bf16.msra.mxu0 %v823
      %1084 = vmatprep.subr.bf16.mxu0 %v863
      %1085 = vmatpush1.bf16.msra.mxu0 %v862
      %1086 = vmatprep.subr.bf16.mxu0 %v866
      %1087 = vmatpush1.bf16.msra.mxu0 %v865
      %1088 = vmatprep.subr.bf16.mxu0 %v905
      %1089 = vmatpush1.bf16.msra.mxu0 %v904
      %1090 = vmatprep.subr.bf16.mxu0 %v908
      %1091 = vmatpush1.bf16.msra.mxu0 %v907
      %1092 = vmatprep.subr.bf16.mxu0 %v947
      %1093 = vmatpush1.bf16.msra.mxu0 %v946
      %1094 = vmatprep.subr.bf16.mxu0 %v950
      %1095 = vmatpush1.bf16.msra.mxu0 %v949
      %1096 = vmatprep.mubr.bf16.mxu0 %v1049
      %1097 = vmatmul.mubr.bf16.gmra.mrb[0].mxu0 %v1048
      %v1098 = vpop.f32.mrb[0].mxu0
      %v1099 = vadd.f32 %v1011, %v1098
      %v1100 = vpop.f32.mrb[0].mxu0
      %v1101 = vadd.f32 %v1011, %v1100
      %v1102 = vpop.f32.mrb[0].mxu0
      %v1103 = vadd.f32 %v1016, %v1102
      %v1104 = vpop.f32.mrb[0].mxu0
      %v1105 = vadd.f32 %v1016, %v1104
      %1106 = vmatprep.mubr.bf16.mxu0 %v1052
      %1107 = vmatmul.mubr.bf16.gmra.mrb[0].mxu0 %v1051
      %v1108 = vpop.f32.mrb[0].mxu0
      %v1109 = vadd.f32 %v1021, %v1108
      %v1110 = vpop.f32.mrb[0].mxu0
      %v1111 = vadd.f32 %v1021, %v1110
      %v1112 = vpop.f32.mrb[0].mxu0
      %v1113 = vadd.f32 %v1026, %v1112
      %v1114 = vpop.f32.mrb[0].mxu0
      %v1115 = vadd.f32 %v1026, %v1114
      %1116 = vdwg.mxu0
      %1117 = vmatprep.subr.bf16.mxu0 %v989
      %1118 = vmatpush1.bf16.msra.mxu0 %v988
      %1119 = vmatprep.subr.bf16.mxu0 %v992
      %1120 = vmatpush1.bf16.msra.mxu0 %v991
      %1121 = vmatprep.subr.bf16.mxu0 0
      %1122 = vmatpush1.bf16.msra.mxu0 0
      %1123 = vmatprep.subr.bf16.mxu0 0
      %1124 = vmatpush1.bf16.msra.mxu0 0
      %1125 = vmatprep.subr.bf16.mxu0 0
      %1126 = vmatpush1.bf16.msra.mxu0 0
      %1127 = vmatprep.subr.bf16.mxu0 0
      %1128 = vmatpush1.bf16.msra.mxu0 0
      %1129 = vmatprep.subr.bf16.mxu0 0
      %1130 = vmatpush1.bf16.msra.mxu0 0
      %1131 = vmatprep.subr.bf16.mxu0 0
      %1132 = vmatpush1.bf16.msra.mxu0 0
      %1133 = vmatprep.subr.bf16.mxu0 0
      %1134 = vmatpush1.bf16.msra.mxu0 0
      %1135 = vmatprep.subr.bf16.mxu0 0
      %1136 = vmatpush1.bf16.msra.mxu0 0
      %1137 = vmatprep.subr.bf16.mxu0 0
      %1138 = vmatpush1.bf16.msra.mxu0 0
      %1139 = vmatprep.subr.bf16.mxu0 0
      %1140 = vmatpush1.bf16.msra.mxu0 0
      %1141 = vmatprep.subr.bf16.mxu0 0
      %1142 = vmatpush1.bf16.msra.mxu0 0
      %1143 = vmatprep.subr.bf16.mxu0 0
      %1144 = vmatpush1.bf16.msra.mxu0 0
      %1145 = vmatprep.subr.bf16.mxu0 0
      %1146 = vmatpush1.bf16.msra.mxu0 0
      %1147 = vmatprep.subr.bf16.mxu0 0
      %1148 = vmatpush1.bf16.msra.mxu0 0
      %1149 = vmatprep.mubr.bf16.mxu0 0
      %1150 = vmatmul.mubr.bf16.gmra.mrb[0].mxu0 %v1059
      %v1151 = vpop.f32.mrb[0].mxu0
      %v1152 = vadd.f32 %v1099, %v1151
      %v1153 = vpop.f32.mrb[0].mxu0
      %v1154 = vadd.f32 %v1101, %v1153
      %v1155 = vpop.f32.mrb[0].mxu0
      %v1156 = vadd.f32 %v1103, %v1155
      %v1157 = vpop.f32.mrb[0].mxu0
      %v1158 = vadd.f32 %v1105, %v1157
      %1159 = vmatprep.mubr.bf16.mxu0 0
      %1160 = vmatmul.mubr.bf16.gmra.mrb[0].mxu0 %v1062
      %v1161 = vpop.f32.mrb[0].mxu0
      %v1162 = vadd.f32 %v1109, %v1161
      %v1163 = vpop.f32.mrb[0].mxu0
      %v1164 = vadd.f32 %v1111, %v1163
      %v1165 = vpop.f32.mrb[0].mxu0
      %v1166 = vadd.f32 %v1113, %v1165
      %v1167 = vpop.f32.mrb[0].mxu0
      %v1168 = vadd.f32 %v1115, %v1167
      %1169 = vdwg.mxu0
      %1170 = vmatprep.subr.bf16.mxu0 0
      %1171 = vmatpush1.bf16.msra.mxu0 %v690
      %1172 = vmatprep.subr.bf16.mxu0 0
      %1173 = vmatpush1.bf16.msra.mxu0 %v693
      %1174 = vmatprep.subr.bf16.mxu0 0
      %1175 = vmatpush1.bf16.msra.mxu0 %v732
      %1176 = vmatprep.subr.bf16.mxu0 0
      %1177 = vmatpush1.bf16.msra.mxu0 %v735
      %1178 = vmatprep.subr.bf16.mxu0 0
      %1179 = vmatpush1.bf16.msra.mxu0 %v774
      %1180 = vmatprep.subr.bf16.mxu0 0
      %1181 = vmatpush1.bf16.msra.mxu0 %v777
      %1182 = vmatprep.subr.bf16.mxu0 0
      %1183 = vmatpush1.bf16.msra.mxu0 %v816
      %1184 = vmatprep.subr.bf16.mxu0 0
      %1185 = vmatpush1.bf16.msra.mxu0 %v819
      %1186 = vmatprep.subr.bf16.mxu0 0
      %1187 = vmatpush1.bf16.msra.mxu0 %v822
      %1188 = vmatprep.subr.bf16.mxu0 0
      %1189 = vmatpush1.bf16.msra.mxu0 %v825
      %1190 = vmatprep.subr.bf16.mxu0 0
      %1191 = vmatpush1.bf16.msra.mxu0 %v864
      %1192 = vmatprep.subr.bf16.mxu0 0
      %1193 = vmatpush1.bf16.msra.mxu0 %v867
      %1194 = vmatprep.subr.bf16.mxu0 0
      %1195 = vmatpush1.bf16.msra.mxu0 %v906
      %1196 = vmatprep.subr.bf16.mxu0 0
      %1197 = vmatpush1.bf16.msra.mxu0 %v909
      %1198 = vmatprep.subr.bf16.mxu0 0
      %1199 = vmatpush1.bf16.msra.mxu0 %v948
      %1200 = vmatprep.subr.bf16.mxu0 0
      %1201 = vmatpush1.bf16.msra.mxu0 %v951
      %1202 = vmatprep.mubr.bf16.mxu0 %v1049
      %1203 = vmatmul.mubr.bf16.gmra.mrb[0].mxu0 %v1048
      %v1204 = vpop.f32.mrb[0].mxu0
      %v1205 = vadd.f32 %v1011, %v1204
      %v1206 = vpop.f32.mrb[0].mxu0
      %v1207 = vpop.f32.mrb[0].mxu0
      %v1208 = vadd.f32 %v1016, %v1207
      %v1209 = vpop.f32.mrb[0].mxu0
      %1210 = vmatprep.mubr.bf16.mxu0 %v1052
      %1211 = vmatmul.mubr.bf16.gmra.mrb[0].mxu0 %v1051
      %v1212 = vpop.f32.mrb[0].mxu0
      %v1213 = vadd.f32 %v1021, %v1212
      %v1214 = vpop.f32.mrb[0].mxu0
      %v1215 = vpop.f32.mrb[0].mxu0
      %v1216 = vadd.f32 %v1026, %v1215
      %v1217 = vpop.f32.mrb[0].mxu0
      %1218 = vdwg.mxu0
      %1219 = vmatprep.subr.bf16.mxu0 0
      %1220 = vmatpush1.bf16.msra.mxu0 %v990
      %1221 = vmatprep.subr.bf16.mxu0 0
      %1222 = vmatpush1.bf16.msra.mxu0 %v993
      %1223 = vmatprep.subr.bf16.mxu0 0
      %1224 = vmatpush1.bf16.msra.mxu0 0
      %1225 = vmatprep.subr.bf16.mxu0 0
      %1226 = vmatpush1.bf16.msra.mxu0 0
      %1227 = vmatprep.subr.bf16.mxu0 0
      %1228 = vmatpush1.bf16.msra.mxu0 0
      %1229 = vmatprep.subr.bf16.mxu0 0
      %1230 = vmatpush1.bf16.msra.mxu0 0
      %1231 = vmatprep.subr.bf16.mxu0 0
      %1232 = vmatpush1.bf16.msra.mxu0 0
      %1233 = vmatprep.subr.bf16.mxu0 0
      %1234 = vmatpush1.bf16.msra.mxu0 0
      %1235 = vmatprep.subr.bf16.mxu0 0
      %1236 = vmatpush1.bf16.msra.mxu0 0
      %1237 = vmatprep.subr.bf16.mxu0 0
      %1238 = vmatpush1.bf16.msra.mxu0 0
      %1239 = vmatprep.subr.bf16.mxu0 0
      %1240 = vmatpush1.bf16.msra.mxu0 0
      %1241 = vmatprep.subr.bf16.mxu0 0
      %1242 = vmatpush1.bf16.msra.mxu0 0
      %1243 = vmatprep.subr.bf16.mxu0 0
      %1244 = vmatpush1.bf16.msra.mxu0 0
      %1245 = vmatprep.subr.bf16.mxu0 0
      %1246 = vmatpush1.bf16.msra.mxu0 0
      %1247 = vmatprep.subr.bf16.mxu0 0
      %1248 = vmatpush1.bf16.msra.mxu0 0
      %1249 = vmatprep.subr.bf16.mxu0 0
      %1250 = vmatpush1.bf16.msra.mxu0 0
      %1251 = vmatprep.mubr.bf16.mxu0 0
      %1252 = vmatmul.mubr.bf16.gmra.mrb[0].mxu0 %v1059
      %v1253 = vpop.f32.mrb[0].mxu0
      %v1254 = vadd.f32 %v1205, %v1253
      %v1255 = vpop.f32.mrb[0].mxu0
      %v1256 = vpop.f32.mrb[0].mxu0
      %v1257 = vadd.f32 %v1208, %v1256
      %v1258 = vpop.f32.mrb[0].mxu0
      %1259 = vmatprep.mubr.bf16.mxu0 0
      %1260 = vmatmul.mubr.bf16.gmra.mrb[0].mxu0 %v1062
      %v1261 = vpop.f32.mrb[0].mxu0
      %v1262 = vadd.f32 %v1213, %v1261
      %v1263 = vpop.f32.mrb[0].mxu0
      %v1264 = vpop.f32.mrb[0].mxu0
      %v1265 = vadd.f32 %v1216, %v1264
      %v1266 = vpop.f32.mrb[0].mxu0
      %1267 = vdwg.mxu0
      %v1268 = vmax.f32 %v1152, 0.0
      %v1269 = vmax.f32 %v1154, 0.0
      %v1270 = vmax.f32 %v1254, 0.0
      %v1271 = vmax.f32 %v1156, 0.0
      %v1272 = vmax.f32 %v1158, 0.0
      %v1273 = vmax.f32 %v1257, 0.0
      %v1274 = vmax.f32 %v1162, 0.0
      %v1275 = vmax.f32 %v1164, 0.0
      %v1276 = vmax.f32 %v1262, 0.0
      %v1277 = vmax.f32 %v1166, 0.0
      %v1278 = vmax.f32 %v1168, 0.0
      %v1279 = vmax.f32 %v1265, 0.0
      %v1280 = vmul.f32 %v1268, %v204
      %v1281 = vmul.f32 %v1269, %v208
      %v1282 = vmul.f32 %v1270, %v212
      %v1283 = vmul.f32 %v1271, %v204
      %v1284 = vmul.f32 %v1272, %v208
      %v1285 = vmul.f32 %v1273, %v212
      %v1286 = vmul.f32 %v1274, %v204
      %v1287 = vmul.f32 %v1275, %v208
      %v1288 = vmul.f32 %v1276, %v212
      %v1289 = vmul.f32 %v1277, %v204
      %v1290 = vmul.f32 %v1278, %v208
      %v1291 = vmul.f32 %v1279, %v212
      %1292 = vrot.lane.b32.xlu0 %v1280, 19
      %v1293 = vpop.permute.xlu0 %1292
      %1294 = vrot.lane.b32.xlu0 %v1283, 19
      %v1295 = vpop.permute.xlu0 %1294
      %1296 = vrot.lane.b32.xlu0 %v1286, 19
      %v1297 = vpop.permute.xlu0 %1296
      %1298 = vrot.lane.b32.xlu0 %v1289, 19
      %v1299 = vpop.permute.xlu0 %1298
      %1300 = vrot.lane.b32.xlu0 %v1281, 19
      %v1301 = vpop.permute.xlu0 %1300
      %1302 = vrot.lane.b32.xlu0 %v1284, 19
      %v1303 = vpop.permute.xlu0 %1302
      %1304 = vrot.lane.b32.xlu0 %v1287, 19
      %v1305 = vpop.permute.xlu0 %1304
      %1306 = vrot.lane.b32.xlu0 %v1290, 19
      %v1307 = vpop.permute.xlu0 %1306
      %1308 = vrot.lane.b32.xlu0 %v1282, 19
      %v1309 = vpop.permute.xlu0 %1308
      %1310 = vrot.lane.b32.xlu0 %v1285, 19
      %v1311 = vpop.permute.xlu0 %1310
      %1312 = vrot.lane.b32.xlu0 %v1288, 19
      %v1313 = vpop.permute.xlu0 %1312
      %1314 = vrot.lane.b32.xlu0 %v1291, 19
      %v1315 = vpop.permute.xlu0 %1314
      %v1316 = vsel %vm231, %v1301, %v1309
      %v1317 = vsel %vm231, %v1303, %v1311
      %v1318 = vsel %vm231, %v1305, %v1313
      %v1319 = vsel %vm231, %v1307, %v1315
      %v1320 = vsel %vm231, %v1293, %v1301
      %v1321 = vsel %vm231, %v1295, %v1303
      %v1322 = vsel %vm231, %v1297, %v1305
      %v1323 = vsel %vm231, %v1299, %v1307
      %v1324 = vsel %vm231, %v1309, %v1293
      %v1325 = vsel %vm231, %v1311, %v1295
      %v1326 = vsel %vm231, %v1313, %v1297
      %v1327 = vsel %vm231, %v1315, %v1299
      %v1328 = vpack.c.bf16 %v1325, %v1324
      %v1329 = vpack.c.bf16 %v1321, %v1320
      %v1330 = vpack.c.bf16 %v1317, %v1316
      %v1331 = vpack.c.bf16 %v1327, %v1326
      %v1332 = vpack.c.bf16 %v1323, %v1322
      %v1333 = vpack.c.bf16 %v1319, %v1318
      %1334 = vrot.lane.b32.xlu0 %v1280, 18
      %v1335 = vpop.permute.xlu0 %1334
      %1336 = vrot.lane.b32.xlu0 %v1283, 18
      %v1337 = vpop.permute.xlu0 %1336
      %1338 = vrot.lane.b32.xlu0 %v1286, 18
      %v1339 = vpop.permute.xlu0 %1338
      %1340 = vrot.lane.b32.xlu0 %v1289, 18
      %v1341 = vpop.permute.xlu0 %1340
      %1342 = vrot.lane.b32.xlu0 %v1281, 18
      %v1343 = vpop.permute.xlu0 %1342
      %1344 = vrot.lane.b32.xlu0 %v1284, 18
      %v1345 = vpop.permute.xlu0 %1344
      %1346 = vrot.lane.b32.xlu0 %v1287, 18
      %v1347 = vpop.permute.xlu0 %1346
      %1348 = vrot.lane.b32.xlu0 %v1290, 18
      %v1349 = vpop.permute.xlu0 %1348
      %1350 = vrot.lane.b32.xlu0 %v1282, 18
      %v1351 = vpop.permute.xlu0 %1350
      %1352 = vrot.lane.b32.xlu0 %v1285, 18
      %v1353 = vpop.permute.xlu0 %1352
      %1354 = vrot.lane.b32.xlu0 %v1288, 18
      %v1355 = vpop.permute.xlu0 %1354
      %1356 = vrot.lane.b32.xlu0 %v1291, 18
      %v1357 = vpop.permute.xlu0 %1356
      %v1358 = vsel %vm247, %v1343, %v1351
      %v1359 = vsel %vm247, %v1345, %v1353
      %v1360 = vsel %vm247, %v1347, %v1355
      %v1361 = vsel %vm247, %v1349, %v1357
      %v1362 = vsel %vm247, %v1335, %v1343
      %v1363 = vsel %vm247, %v1337, %v1345
      %v1364 = vsel %vm247, %v1339, %v1347
      %v1365 = vsel %vm247, %v1341, %v1349
      %v1366 = vsel %vm247, %v1351, %v1335
      %v1367 = vsel %vm247, %v1353, %v1337
      %v1368 = vsel %vm247, %v1355, %v1339
      %v1369 = vsel %vm247, %v1357, %v1341
      %v1370 = vpack.c.bf16 %v1367, %v1366
      %v1371 = vpack.c.bf16 %v1363, %v1362
      %v1372 = vpack.c.bf16 %v1359, %v1358
      %v1373 = vpack.c.bf16 %v1369, %v1368
      %v1374 = vpack.c.bf16 %v1365, %v1364
      %v1375 = vpack.c.bf16 %v1361, %v1360
      %1376 = vrot.lane.b32.xlu0 %v1280, 17
      %v1377 = vpop.permute.xlu0 %1376
      %1378 = vrot.lane.b32.xlu0 %v1283, 17
      %v1379 = vpop.permute.xlu0 %1378
      %1380 = vrot.lane.b32.xlu0 %v1286, 17
      %v1381 = vpop.permute.xlu0 %1380
      %1382 = vrot.lane.b32.xlu0 %v1289, 17
      %v1383 = vpop.permute.xlu0 %1382
      %1384 = vrot.lane.b32.xlu0 %v1281, 17
      %v1385 = vpop.permute.xlu0 %1384
      %1386 = vrot.lane.b32.xlu0 %v1284, 17
      %v1387 = vpop.permute.xlu0 %1386
      %1388 = vrot.lane.b32.xlu0 %v1287, 17
      %v1389 = vpop.permute.xlu0 %1388
      %1390 = vrot.lane.b32.xlu0 %v1290, 17
      %v1391 = vpop.permute.xlu0 %1390
      %1392 = vrot.lane.b32.xlu0 %v1282, 17
      %v1393 = vpop.permute.xlu0 %1392
      %1394 = vrot.lane.b32.xlu0 %v1285, 17
      %v1395 = vpop.permute.xlu0 %1394
      %1396 = vrot.lane.b32.xlu0 %v1288, 17
      %v1397 = vpop.permute.xlu0 %1396
      %1398 = vrot.lane.b32.xlu0 %v1291, 17
      %v1399 = vpop.permute.xlu0 %1398
      %v1400 = vsel %vm263, %v1385, %v1393
      %v1401 = vsel %vm263, %v1387, %v1395
      %v1402 = vsel %vm263, %v1389, %v1397
      %v1403 = vsel %vm263, %v1391, %v1399
      %v1404 = vsel %vm263, %v1377, %v1385
      %v1405 = vsel %vm263, %v1379, %v1387
      %v1406 = vsel %vm263, %v1381, %v1389
      %v1407 = vsel %vm263, %v1383, %v1391
      %v1408 = vsel %vm263, %v1393, %v1377
      %v1409 = vsel %vm263, %v1395, %v1379
      %v1410 = vsel %vm263, %v1397, %v1381
      %v1411 = vsel %vm263, %v1399, %v1383
      %v1412 = vpack.c.bf16 %v1409, %v1408
      %v1413 = vpack.c.bf16 %v1405, %v1404
      %v1414 = vpack.c.bf16 %v1401, %v1400
      %v1415 = vpack.c.bf16 %v1411, %v1410
      %v1416 = vpack.c.bf16 %v1407, %v1406
      %v1417 = vpack.c.bf16 %v1403, %v1402
      %1418 = vrot.lane.b32.xlu0 %v1280, 1
      %v1419 = vpop.permute.xlu0 %1418
      %1420 = vrot.lane.b32.xlu0 %v1283, 1
      %v1421 = vpop.permute.xlu0 %1420
      %1422 = vrot.lane.b32.xlu0 %v1286, 1
      %v1423 = vpop.permute.xlu0 %1422
      %1424 = vrot.lane.b32.xlu0 %v1289, 1
      %v1425 = vpop.permute.xlu0 %1424
      %1426 = vrot.lane.b32.xlu0 %v1281, 1
      %v1427 = vpop.permute.xlu0 %1426
      %1428 = vrot.lane.b32.xlu0 %v1284, 1
      %v1429 = vpop.permute.xlu0 %1428
      %1430 = vrot.lane.b32.xlu0 %v1287, 1
      %v1431 = vpop.permute.xlu0 %1430
      %1432 = vrot.lane.b32.xlu0 %v1290, 1
      %v1433 = vpop.permute.xlu0 %1432
      %1434 = vrot.lane.b32.xlu0 %v1282, 1
      %v1435 = vpop.permute.xlu0 %1434
      %1436 = vrot.lane.b32.xlu0 %v1285, 1
      %v1437 = vpop.permute.xlu0 %1436
      %1438 = vrot.lane.b32.xlu0 %v1288, 1
      %v1439 = vpop.permute.xlu0 %1438
      %1440 = vrot.lane.b32.xlu0 %v1291, 1
      %v1441 = vpop.permute.xlu0 %1440
      %v1442 = vsel %vm279, %v1427, %v1435
      %v1443 = vsel %vm279, %v1429, %v1437
      %v1444 = vsel %vm279, %v1431, %v1439
      %v1445 = vsel %vm279, %v1433, %v1441
      %v1446 = vsel %vm279, %v1419, %v1427
      %v1447 = vsel %vm279, %v1421, %v1429
      %v1448 = vsel %vm279, %v1423, %v1431
      %v1449 = vsel %vm279, %v1425, %v1433
      %v1450 = vsel %vm279, %v1435, %v1419
      %v1451 = vsel %vm279, %v1437, %v1421
      %v1452 = vsel %vm279, %v1439, %v1423
      %v1453 = vsel %vm279, %v1441, %v1425
      %v1454 = vpack.c.bf16 %v1451, %v1450
      %v1455 = vpack.c.bf16 %v1447, %v1446
      %v1456 = vpack.c.bf16 %v1443, %v1442
      %v1457 = vpack.c.bf16 %v1453, %v1452
      %v1458 = vpack.c.bf16 %v1449, %v1448
      %v1459 = vpack.c.bf16 %v1445, %v1444
      %v1460 = vpack.c.bf16 %v1283, %v1280
      %v1461 = vpack.c.bf16 %v1284, %v1281
      %v1462 = vpack.c.bf16 %v1285, %v1282
      %v1463 = vpack.c.bf16 %v1289, %v1286
      %v1464 = vpack.c.bf16 %v1290, %v1287
      %v1465 = vpack.c.bf16 %v1291, %v1288
      %1466 = vrot.lane.b32.xlu0 %v1280, 127
      %v1467 = vpop.permute.xlu0 %1466
      %1468 = vrot.lane.b32.xlu0 %v1283, 127
      %v1469 = vpop.permute.xlu0 %1468
      %1470 = vrot.lane.b32.xlu0 %v1286, 127
      %v1471 = vpop.permute.xlu0 %1470
      %1472 = vrot.lane.b32.xlu0 %v1289, 127
      %v1473 = vpop.permute.xlu0 %1472
      %1474 = vrot.lane.b32.xlu0 %v1281, 127
      %v1475 = vpop.permute.xlu0 %1474
      %1476 = vrot.lane.b32.xlu0 %v1284, 127
      %v1477 = vpop.permute.xlu0 %1476
      %1478 = vrot.lane.b32.xlu0 %v1287, 127
      %v1479 = vpop.permute.xlu0 %1478
      %1480 = vrot.lane.b32.xlu0 %v1290, 127
      %v1481 = vpop.permute.xlu0 %1480
      %1482 = vrot.lane.b32.xlu0 %v1282, 127
      %v1483 = vpop.permute.xlu0 %1482
      %1484 = vrot.lane.b32.xlu0 %v1285, 127
      %v1485 = vpop.permute.xlu0 %1484
      %1486 = vrot.lane.b32.xlu0 %v1288, 127
      %v1487 = vpop.permute.xlu0 %1486
      %1488 = vrot.lane.b32.xlu0 %v1291, 127
      %v1489 = vpop.permute.xlu0 %1488
      %v1490 = vsel %vm299, %v1475, %v1483
      %v1491 = vsel %vm299, %v1477, %v1485
      %v1492 = vsel %vm299, %v1479, %v1487
      %v1493 = vsel %vm299, %v1481, %v1489
      %v1494 = vsel %vm299, %v1467, %v1475
      %v1495 = vsel %vm299, %v1469, %v1477
      %v1496 = vsel %vm299, %v1471, %v1479
      %v1497 = vsel %vm299, %v1473, %v1481
      %v1498 = vsel %vm299, %v1483, %v1467
      %v1499 = vsel %vm299, %v1485, %v1469
      %v1500 = vsel %vm299, %v1487, %v1471
      %v1501 = vsel %vm299, %v1489, %v1473
      %v1502 = vpack.c.bf16 %v1495, %v1494
      %v1503 = vpack.c.bf16 %v1491, %v1490
      %v1504 = vpack.c.bf16 %v1499, %v1498
      %v1505 = vpack.c.bf16 %v1497, %v1496
      %v1506 = vpack.c.bf16 %v1493, %v1492
      %v1507 = vpack.c.bf16 %v1501, %v1500
      %1508 = vrot.lane.b32.xlu0 %v1280, 111
      %v1509 = vpop.permute.xlu0 %1508
      %1510 = vrot.lane.b32.xlu0 %v1283, 111
      %v1511 = vpop.permute.xlu0 %1510
      %1512 = vrot.lane.b32.xlu0 %v1286, 111
      %v1513 = vpop.permute.xlu0 %1512
      %1514 = vrot.lane.b32.xlu0 %v1289, 111
      %v1515 = vpop.permute.xlu0 %1514
      %1516 = vrot.lane.b32.xlu0 %v1281, 111
      %v1517 = vpop.permute.xlu0 %1516
      %1518 = vrot.lane.b32.xlu0 %v1284, 111
      %v1519 = vpop.permute.xlu0 %1518
      %1520 = vrot.lane.b32.xlu0 %v1287, 111
      %v1521 = vpop.permute.xlu0 %1520
      %1522 = vrot.lane.b32.xlu0 %v1290, 111
      %v1523 = vpop.permute.xlu0 %1522
      %1524 = vrot.lane.b32.xlu0 %v1282, 111
      %v1525 = vpop.permute.xlu0 %1524
      %1526 = vrot.lane.b32.xlu0 %v1285, 111
      %v1527 = vpop.permute.xlu0 %1526
      %1528 = vrot.lane.b32.xlu0 %v1288, 111
      %v1529 = vpop.permute.xlu0 %1528
      %1530 = vrot.lane.b32.xlu0 %v1291, 111
      %v1531 = vpop.permute.xlu0 %1530
      %v1532 = vsel %vm315, %v1517, %v1525
      %v1533 = vsel %vm315, %v1519, %v1527
      %v1534 = vsel %vm315, %v1521, %v1529
      %v1535 = vsel %vm315, %v1523, %v1531
      %v1536 = vsel %vm315, %v1509, %v1517
      %v1537 = vsel %vm315, %v1511, %v1519
      %v1538 = vsel %vm315, %v1513, %v1521
      %v1539 = vsel %vm315, %v1515, %v1523
      %v1540 = vsel %vm315, %v1525, %v1509
      %v1541 = vsel %vm315, %v1527, %v1511
      %v1542 = vsel %vm315, %v1529, %v1513
      %v1543 = vsel %vm315, %v1531, %v1515
      %v1544 = vpack.c.bf16 %v1537, %v1536
      %v1545 = vpack.c.bf16 %v1533, %v1532
      %v1546 = vpack.c.bf16 %v1541, %v1540
      %v1547 = vpack.c.bf16 %v1539, %v1538
      %v1548 = vpack.c.bf16 %v1535, %v1534
      %v1549 = vpack.c.bf16 %v1543, %v1542
      %1550 = vrot.lane.b32.xlu0 %v1280, 110
      %v1551 = vpop.permute.xlu0 %1550
      %1552 = vrot.lane.b32.xlu0 %v1283, 110
      %v1553 = vpop.permute.xlu0 %1552
      %1554 = vrot.lane.b32.xlu0 %v1286, 110
      %v1555 = vpop.permute.xlu0 %1554
      %1556 = vrot.lane.b32.xlu0 %v1289, 110
      %v1557 = vpop.permute.xlu0 %1556
      %1558 = vrot.lane.b32.xlu0 %v1281, 110
      %v1559 = vpop.permute.xlu0 %1558
      %1560 = vrot.lane.b32.xlu0 %v1284, 110
      %v1561 = vpop.permute.xlu0 %1560
      %1562 = vrot.lane.b32.xlu0 %v1287, 110
      %v1563 = vpop.permute.xlu0 %1562
      %1564 = vrot.lane.b32.xlu0 %v1290, 110
      %v1565 = vpop.permute.xlu0 %1564
      %1566 = vrot.lane.b32.xlu0 %v1282, 110
      %v1567 = vpop.permute.xlu0 %1566
      %1568 = vrot.lane.b32.xlu0 %v1285, 110
      %v1569 = vpop.permute.xlu0 %1568
      %1570 = vrot.lane.b32.xlu0 %v1288, 110
      %v1571 = vpop.permute.xlu0 %1570
      %1572 = vrot.lane.b32.xlu0 %v1291, 110
      %v1573 = vpop.permute.xlu0 %1572
      %v1574 = vsel %vm331, %v1559, %v1567
      %v1575 = vsel %vm331, %v1561, %v1569
      %v1576 = vsel %vm331, %v1563, %v1571
      %v1577 = vsel %vm331, %v1565, %v1573
      %v1578 = vsel %vm331, %v1551, %v1559
      %v1579 = vsel %vm331, %v1553, %v1561
      %v1580 = vsel %vm331, %v1555, %v1563
      %v1581 = vsel %vm331, %v1557, %v1565
      %v1582 = vsel %vm331, %v1567, %v1551
      %v1583 = vsel %vm331, %v1569, %v1553
      %v1584 = vsel %vm331, %v1571, %v1555
      %v1585 = vsel %vm331, %v1573, %v1557
      %v1586 = vpack.c.bf16 %v1579, %v1578
      %v1587 = vpack.c.bf16 %v1575, %v1574
      %v1588 = vpack.c.bf16 %v1583, %v1582
      %v1589 = vpack.c.bf16 %v1581, %v1580
      %v1590 = vpack.c.bf16 %v1577, %v1576
      %v1591 = vpack.c.bf16 %v1585, %v1584
      %1592 = vrot.lane.b32.xlu0 %v1280, 109
      %v1593 = vpop.permute.xlu0 %1592
      %1594 = vrot.lane.b32.xlu0 %v1283, 109
      %v1595 = vpop.permute.xlu0 %1594
      %1596 = vrot.lane.b32.xlu0 %v1286, 109
      %v1597 = vpop.permute.xlu0 %1596
      %1598 = vrot.lane.b32.xlu0 %v1289, 109
      %v1599 = vpop.permute.xlu0 %1598
      %1600 = vrot.lane.b32.xlu0 %v1281, 109
      %v1601 = vpop.permute.xlu0 %1600
      %1602 = vrot.lane.b32.xlu0 %v1284, 109
      %v1603 = vpop.permute.xlu0 %1602
      %1604 = vrot.lane.b32.xlu0 %v1287, 109
      %v1605 = vpop.permute.xlu0 %1604
      %1606 = vrot.lane.b32.xlu0 %v1290, 109
      %v1607 = vpop.permute.xlu0 %1606
      %1608 = vrot.lane.b32.xlu0 %v1282, 109
      %v1609 = vpop.permute.xlu0 %1608
      %1610 = vrot.lane.b32.xlu0 %v1285, 109
      %v1611 = vpop.permute.xlu0 %1610
      %1612 = vrot.lane.b32.xlu0 %v1288, 109
      %v1613 = vpop.permute.xlu0 %1612
      %1614 = vrot.lane.b32.xlu0 %v1291, 109
      %v1615 = vpop.permute.xlu0 %1614
      %v1616 = vsel %vm347, %v1601, %v1609
      %v1617 = vsel %vm347, %v1603, %v1611
      %v1618 = vsel %vm347, %v1605, %v1613
      %v1619 = vsel %vm347, %v1607, %v1615
      %v1620 = vsel %vm347, %v1593, %v1601
      %v1621 = vsel %vm347, %v1595, %v1603
      %v1622 = vsel %vm347, %v1597, %v1605
      %v1623 = vsel %vm347, %v1599, %v1607
      %v1624 = vsel %vm347, %v1609, %v1593
      %v1625 = vsel %vm347, %v1611, %v1595
      %v1626 = vsel %vm347, %v1613, %v1597
      %v1627 = vsel %vm347, %v1615, %v1599
      %v1628 = vpack.c.bf16 %v1621, %v1620
      %v1629 = vpack.c.bf16 %v1617, %v1616
      %v1630 = vpack.c.bf16 %v1625, %v1624
      %v1631 = vpack.c.bf16 %v1623, %v1622
      %v1632 = vpack.c.bf16 %v1619, %v1618
      %v1633 = vpack.c.bf16 %v1627, %v1626
      %s1634 = scalar_lea.vmem %s1, 96
      %v1635 = vld [vmem:[%s1634] sm:$0xff]
      %v1636 = vld [vmem:[%s1634 + $0x8] sm:$0xf]
      %v1637 = vld [vmem:[%s1634 + $0xc] sm:$0xff]
      %v1638 = vld [vmem:[%s1634 + $0x14] sm:$0xf]
      %v1639 = vld [vmem:[%s1634 + $0x18] sm:$0xff]
      %v1640 = vld [vmem:[%s1634 + $0x20] sm:$0xf]
      %v1641 = vld [vmem:[%s1634 + $0x24] sm:$0xff]
      %v1642 = vld [vmem:[%s1634 + $0x2c] sm:$0xf]
      %s1643 = scalar_lea.vmem %s2, 64
      %v1644 = vld [vmem:[%s1643] sm:$0xff]
      %v1645 = vld [vmem:[%s1643 + $0x8] sm:$0xff]
      %v1646 = vld [vmem:[%s1643 + $0x10] sm:$0xff]
      %v1647 = vld [vmem:[%s1643 + $0x18] sm:$0xff]
      %1649 = vset.pattern.permute.xlu0 0
      %1650 = vperm.xlu0 %1649, %v1644
      %v1651 = vpop.permute.xlu0 %1650
      %1654 = vset.pattern.permute.xlu0 0
      %1655 = vperm.xlu0 %1654, %v1645
      %v1656 = vpop.permute.xlu0 %1655
      %1659 = vset.pattern.permute.xlu0 0
      %1660 = vperm.xlu0 %1659, %v1646
      %v1661 = vpop.permute.xlu0 %1660
      %1664 = vset.pattern.permute.xlu0 0
      %1665 = vperm.xlu0 %1664, %v1647
      %v1666 = vpop.permute.xlu0 %1665
      %v1676 = vunpack.c.l.b16 %v1635
      %v1677 = vunpack.c.h.b16 %v1635
      %v1678 = vunpack.c.l.b16 %v1636
      %v1679 = vunpack.c.l.b16 %v1637
      %v1680 = vunpack.c.h.b16 %v1637
      %v1681 = vunpack.c.l.b16 %v1638
      %v1682 = vunpack.c.l.b16 %v1639
      %v1683 = vunpack.c.h.b16 %v1639
      %v1684 = vunpack.c.l.b16 %v1640
      %v1685 = vunpack.c.l.b16 %v1641
      %v1686 = vunpack.c.h.b16 %v1641
      %v1687 = vunpack.c.l.b16 %v1642
      %v1688 = vpack.c.b16 %v1679, %v1676
      %v1689 = vpack.c.b16 %v1680, %v1677
      %v1690 = vpack.c.b16 %v1681, %v1678
      %v1691 = vpack.c.b16 %v1685, %v1682
      %v1692 = vpack.c.b16 %v1686, %v1683
      %v1693 = vpack.c.b16 %v1687, %v1684
      %v1699 = vsel %vm417, %v1690, 0
      %v1702 = vsel %vm417, %v1693, 0
      %1704 = vmatprep.subr.bf16.mxu0 %v1329
      %1705 = vmatpush1.bf16.msra.mxu0 %v1328
      %1706 = vmatprep.subr.bf16.mxu0 %v1332
      %1707 = vmatpush1.bf16.msra.mxu0 %v1331
      %1708 = vmatprep.subr.bf16.mxu0 %v1371
      %1709 = vmatpush1.bf16.msra.mxu0 %v1370
      %1710 = vmatprep.subr.bf16.mxu0 %v1374
      %1711 = vmatpush1.bf16.msra.mxu0 %v1373
      %1712 = vmatprep.subr.bf16.mxu0 %v1413
      %1713 = vmatpush1.bf16.msra.mxu0 %v1412
      %1714 = vmatprep.subr.bf16.mxu0 %v1416
      %1715 = vmatpush1.bf16.msra.mxu0 %v1415
      %1716 = vmatprep.subr.bf16.mxu0 %v1455
      %1717 = vmatpush1.bf16.msra.mxu0 %v1454
      %1718 = vmatprep.subr.bf16.mxu0 %v1458
      %1719 = vmatpush1.bf16.msra.mxu0 %v1457
      %1720 = vmatprep.subr.bf16.mxu0 %v1461
      %1721 = vmatpush1.bf16.msra.mxu0 %v1460
      %1722 = vmatprep.subr.bf16.mxu0 %v1464
      %1723 = vmatpush1.bf16.msra.mxu0 %v1463
      %1724 = vmatprep.subr.bf16.mxu0 %v1503
      %1725 = vmatpush1.bf16.msra.mxu0 %v1502
      %1726 = vmatprep.subr.bf16.mxu0 %v1506
      %1727 = vmatpush1.bf16.msra.mxu0 %v1505
      %1728 = vmatprep.subr.bf16.mxu0 %v1545
      %1729 = vmatpush1.bf16.msra.mxu0 %v1544
      %1730 = vmatprep.subr.bf16.mxu0 %v1548
      %1731 = vmatpush1.bf16.msra.mxu0 %v1547
      %1732 = vmatprep.subr.bf16.mxu0 %v1587
      %1733 = vmatpush1.bf16.msra.mxu0 %v1586
      %1734 = vmatprep.subr.bf16.mxu0 %v1590
      %1735 = vmatpush1.bf16.msra.mxu0 %v1589
      %1736 = vmatprep.mubr.bf16.mxu0 %v1689
      %1737 = vmatmul.mubr.bf16.gmra.mrb[0].mxu0 %v1688
      %v1738 = vpop.f32.mrb[0].mxu0
      %v1739 = vadd.f32 %v1651, %v1738
      %v1740 = vpop.f32.mrb[0].mxu0
      %v1741 = vadd.f32 %v1651, %v1740
      %v1742 = vpop.f32.mrb[0].mxu0
      %v1743 = vadd.f32 %v1656, %v1742
      %v1744 = vpop.f32.mrb[0].mxu0
      %v1745 = vadd.f32 %v1656, %v1744
      %1746 = vmatprep.mubr.bf16.mxu0 %v1692
      %1747 = vmatmul.mubr.bf16.gmra.mrb[0].mxu0 %v1691
      %v1748 = vpop.f32.mrb[0].mxu0
      %v1749 = vadd.f32 %v1661, %v1748
      %v1750 = vpop.f32.mrb[0].mxu0
      %v1751 = vadd.f32 %v1661, %v1750
      %v1752 = vpop.f32.mrb[0].mxu0
      %v1753 = vadd.f32 %v1666, %v1752
      %v1754 = vpop.f32.mrb[0].mxu0
      %v1755 = vadd.f32 %v1666, %v1754
      %1756 = vdwg.mxu0
      %1757 = vmatprep.subr.bf16.mxu0 %v1629
      %1758 = vmatpush1.bf16.msra.mxu0 %v1628
      %1759 = vmatprep.subr.bf16.mxu0 %v1632
      %1760 = vmatpush1.bf16.msra.mxu0 %v1631
      %1761 = vmatprep.subr.bf16.mxu0 0
      %1762 = vmatpush1.bf16.msra.mxu0 0
      %1763 = vmatprep.subr.bf16.mxu0 0
      %1764 = vmatpush1.bf16.msra.mxu0 0
      %1765 = vmatprep.subr.bf16.mxu0 0
      %1766 = vmatpush1.bf16.msra.mxu0 0
      %1767 = vmatprep.subr.bf16.mxu0 0
      %1768 = vmatpush1.bf16.msra.mxu0 0
      %1769 = vmatprep.subr.bf16.mxu0 0
      %1770 = vmatpush1.bf16.msra.mxu0 0
      %1771 = vmatprep.subr.bf16.mxu0 0
      %1772 = vmatpush1.bf16.msra.mxu0 0
      %1773 = vmatprep.subr.bf16.mxu0 0
      %1774 = vmatpush1.bf16.msra.mxu0 0
      %1775 = vmatprep.subr.bf16.mxu0 0
      %1776 = vmatpush1.bf16.msra.mxu0 0
      %1777 = vmatprep.subr.bf16.mxu0 0
      %1778 = vmatpush1.bf16.msra.mxu0 0
      %1779 = vmatprep.subr.bf16.mxu0 0
      %1780 = vmatpush1.bf16.msra.mxu0 0
      %1781 = vmatprep.subr.bf16.mxu0 0
      %1782 = vmatpush1.bf16.msra.mxu0 0
      %1783 = vmatprep.subr.bf16.mxu0 0
      %1784 = vmatpush1.bf16.msra.mxu0 0
      %1785 = vmatprep.subr.bf16.mxu0 0
      %1786 = vmatpush1.bf16.msra.mxu0 0
      %1787 = vmatprep.subr.bf16.mxu0 0
      %1788 = vmatpush1.bf16.msra.mxu0 0
      %1789 = vmatprep.mubr.bf16.mxu0 0
      %1790 = vmatmul.mubr.bf16.gmra.mrb[0].mxu0 %v1699
      %v1791 = vpop.f32.mrb[0].mxu0
      %v1792 = vadd.f32 %v1739, %v1791
      %v1793 = vpop.f32.mrb[0].mxu0
      %v1794 = vadd.f32 %v1741, %v1793
      %v1795 = vpop.f32.mrb[0].mxu0
      %v1796 = vadd.f32 %v1743, %v1795
      %v1797 = vpop.f32.mrb[0].mxu0
      %v1798 = vadd.f32 %v1745, %v1797
      %1799 = vmatprep.mubr.bf16.mxu0 0
      %1800 = vmatmul.mubr.bf16.gmra.mrb[0].mxu0 %v1702
      %v1801 = vpop.f32.mrb[0].mxu0
      %v1802 = vadd.f32 %v1749, %v1801
      %v1803 = vpop.f32.mrb[0].mxu0
      %v1804 = vadd.f32 %v1751, %v1803
      %v1805 = vpop.f32.mrb[0].mxu0
      %v1806 = vadd.f32 %v1753, %v1805
      %v1807 = vpop.f32.mrb[0].mxu0
      %v1808 = vadd.f32 %v1755, %v1807
      %1809 = vdwg.mxu0
      %1810 = vmatprep.subr.bf16.mxu0 0
      %1811 = vmatpush1.bf16.msra.mxu0 %v1330
      %1812 = vmatprep.subr.bf16.mxu0 0
      %1813 = vmatpush1.bf16.msra.mxu0 %v1333
      %1814 = vmatprep.subr.bf16.mxu0 0
      %1815 = vmatpush1.bf16.msra.mxu0 %v1372
      %1816 = vmatprep.subr.bf16.mxu0 0
      %1817 = vmatpush1.bf16.msra.mxu0 %v1375
      %1818 = vmatprep.subr.bf16.mxu0 0
      %1819 = vmatpush1.bf16.msra.mxu0 %v1414
      %1820 = vmatprep.subr.bf16.mxu0 0
      %1821 = vmatpush1.bf16.msra.mxu0 %v1417
      %1822 = vmatprep.subr.bf16.mxu0 0
      %1823 = vmatpush1.bf16.msra.mxu0 %v1456
      %1824 = vmatprep.subr.bf16.mxu0 0
      %1825 = vmatpush1.bf16.msra.mxu0 %v1459
      %1826 = vmatprep.subr.bf16.mxu0 0
      %1827 = vmatpush1.bf16.msra.mxu0 %v1462
      %1828 = vmatprep.subr.bf16.mxu0 0
      %1829 = vmatpush1.bf16.msra.mxu0 %v1465
      %1830 = vmatprep.subr.bf16.mxu0 0
      %1831 = vmatpush1.bf16.msra.mxu0 %v1504
      %1832 = vmatprep.subr.bf16.mxu0 0
      %1833 = vmatpush1.bf16.msra.mxu0 %v1507
      %1834 = vmatprep.subr.bf16.mxu0 0
      %1835 = vmatpush1.bf16.msra.mxu0 %v1546
      %1836 = vmatprep.subr.bf16.mxu0 0
      %1837 = vmatpush1.bf16.msra.mxu0 %v1549
      %1838 = vmatprep.subr.bf16.mxu0 0
      %1839 = vmatpush1.bf16.msra.mxu0 %v1588
      %1840 = vmatprep.subr.bf16.mxu0 0
      %1841 = vmatpush1.bf16.msra.mxu0 %v1591
      %1842 = vmatprep.mubr.bf16.mxu0 %v1689
      %1843 = vmatmul.mubr.bf16.gmra.mrb[0].mxu0 %v1688
      %v1844 = vpop.f32.mrb[0].mxu0
      %v1845 = vadd.f32 %v1651, %v1844
      %v1846 = vpop.f32.mrb[0].mxu0
      %v1847 = vpop.f32.mrb[0].mxu0
      %v1848 = vadd.f32 %v1656, %v1847
      %v1849 = vpop.f32.mrb[0].mxu0
      %1850 = vmatprep.mubr.bf16.mxu0 %v1692
      %1851 = vmatmul.mubr.bf16.gmra.mrb[0].mxu0 %v1691
      %v1852 = vpop.f32.mrb[0].mxu0
      %v1853 = vadd.f32 %v1661, %v1852
      %v1854 = vpop.f32.mrb[0].mxu0
      %v1855 = vpop.f32.mrb[0].mxu0
      %v1856 = vadd.f32 %v1666, %v1855
      %v1857 = vpop.f32.mrb[0].mxu0
      %1858 = vdwg.mxu0
      %1859 = vmatprep.subr.bf16.mxu0 0
      %1860 = vmatpush1.bf16.msra.mxu0 %v1630
      %1861 = vmatprep.subr.bf16.mxu0 0
      %1862 = vmatpush1.bf16.msra.mxu0 %v1633
      %1863 = vmatprep.subr.bf16.mxu0 0
      %1864 = vmatpush1.bf16.msra.mxu0 0
      %1865 = vmatprep.subr.bf16.mxu0 0
      %1866 = vmatpush1.bf16.msra.mxu0 0
      %1867 = vmatprep.subr.bf16.mxu0 0
      %1868 = vmatpush1.bf16.msra.mxu0 0
      %1869 = vmatprep.subr.bf16.mxu0 0
      %1870 = vmatpush1.bf16.msra.mxu0 0
      %1871 = vmatprep.subr.bf16.mxu0 0
      %1872 = vmatpush1.bf16.msra.mxu0 0
      %1873 = vmatprep.subr.bf16.mxu0 0
      %1874 = vmatpush1.bf16.msra.mxu0 0
      %1875 = vmatprep.subr.bf16.mxu0 0
      %1876 = vmatpush1.bf16.msra.mxu0 0
      %1877 = vmatprep.subr.bf16.mxu0 0
      %1878 = vmatpush1.bf16.msra.mxu0 0
      %1879 = vmatprep.subr.bf16.mxu0 0
      %1880 = vmatpush1.bf16.msra.mxu0 0
      %1881 = vmatprep.subr.bf16.mxu0 0
      %1882 = vmatpush1.bf16.msra.mxu0 0
      %1883 = vmatprep.subr.bf16.mxu0 0
      %1884 = vmatpush1.bf16.msra.mxu0 0
      %1885 = vmatprep.subr.bf16.mxu0 0
      %1886 = vmatpush1.bf16.msra.mxu0 0
      %1887 = vmatprep.subr.bf16.mxu0 0
      %1888 = vmatpush1.bf16.msra.mxu0 0
      %1889 = vmatprep.subr.bf16.mxu0 0
      %1890 = vmatpush1.bf16.msra.mxu0 0
      %1891 = vmatprep.mubr.bf16.mxu0 0
      %1892 = vmatmul.mubr.bf16.gmra.mrb[0].mxu0 %v1699
      %v1893 = vpop.f32.mrb[0].mxu0
      %v1894 = vadd.f32 %v1845, %v1893
      %v1895 = vpop.f32.mrb[0].mxu0
      %v1896 = vpop.f32.mrb[0].mxu0
      %v1897 = vadd.f32 %v1848, %v1896
      %v1898 = vpop.f32.mrb[0].mxu0
      %1899 = vmatprep.mubr.bf16.mxu0 0
      %1900 = vmatmul.mubr.bf16.gmra.mrb[0].mxu0 %v1702
      %v1901 = vpop.f32.mrb[0].mxu0
      %v1902 = vadd.f32 %v1853, %v1901
      %v1903 = vpop.f32.mrb[0].mxu0
      %v1904 = vpop.f32.mrb[0].mxu0
      %v1905 = vadd.f32 %v1856, %v1904
      %v1906 = vpop.f32.mrb[0].mxu0
      %1907 = vdwg.mxu0
      %v1908 = vxor.u32 %v1792, 2147483648
      %v1909 = vxor.u32 %v1794, 2147483648
      %v1910 = vxor.u32 %v1894, 2147483648
      %v1911 = vxor.u32 %v1796, 2147483648
      %v1912 = vxor.u32 %v1798, 2147483648
      %v1913 = vxor.u32 %v1897, 2147483648
      %v1914 = vmul.f32 %v1908, 1.442695
      %v1915 = vpow.pop %v1914
      %v1916 = vmul.f32 %v1909, 1.442695
      %v1917 = vpow.pop %v1916
      %v1918 = vmul.f32 %v1910, 1.442695
      %v1919 = vpow.pop %v1918
      %v1920 = vmul.f32 %v1911, 1.442695
      %v1921 = vpow.pop %v1920
      %v1922 = vmul.f32 %v1912, 1.442695
      %v1923 = vpow.pop %v1922
      %v1924 = vmul.f32 %v1913, 1.442695
      %v1925 = vpow.pop %v1924
      %v1926 = vadd.f32 %v1915, 1.0
      %v1927 = vadd.f32 %v1917, 1.0
      %v1928 = vadd.f32 %v1919, 1.0
      %v1929 = vadd.f32 %v1921, 1.0
      %v1930 = vadd.f32 %v1923, 1.0
      %v1931 = vadd.f32 %v1925, 1.0
      %v1932 = vrcp.pop %v1926
      %v1933 = vmul.f32 1.0, %v1932
      %v1934 = vrcp.pop %v1927
      %v1935 = vmul.f32 1.0, %v1934
      %v1936 = vrcp.pop %v1928
      %v1937 = vmul.f32 1.0, %v1936
      %v1938 = vrcp.pop %v1929
      %v1939 = vmul.f32 1.0, %v1938
      %v1940 = vrcp.pop %v1930
      %v1941 = vmul.f32 1.0, %v1940
      %v1942 = vrcp.pop %v1931
      %v1943 = vmul.f32 1.0, %v1942
      %v1944 = vmul.f32 %v1933, 1.1
      %v1945 = vmul.f32 %v1935, 1.1
      %v1946 = vmul.f32 %v1937, 1.1
      %v1947 = vmul.f32 %v1939, 1.1
      %v1948 = vmul.f32 %v1941, 1.1
      %v1949 = vmul.f32 %v1943, 1.1
      %v1950 = vtanh.pop %v1802
      %v1951 = vtanh.pop %v1804
      %v1952 = vtanh.pop %v1902
      %v1953 = vtanh.pop %v1806
      %v1954 = vtanh.pop %v1808
      %v1955 = vtanh.pop %v1905
      %v1956 = vmul.f32 %v1950, 3.1415927
      %v1957 = vmul.f32 %v1951, 3.1415927
      %v1958 = vmul.f32 %v1952, 3.1415927
      %v1959 = vmul.f32 %v1953, 3.1415927
      %v1960 = vmul.f32 %v1954, 3.1415927
      %v1961 = vmul.f32 %v1955, 3.1415927
      %v1962 = vmul.f32 %v1944, %v204
      %v1963 = vmul.f32 %v1945, %v208
      %v1964 = vmul.f32 %v1946, %v212
      %v1965 = vmul.f32 %v1947, %v204
      %v1966 = vmul.f32 %v1948, %v208
      %v1967 = vmul.f32 %v1949, %v212
      %v1968 = vmul.f32 %v1956, %v204
      %v1969 = vmul.f32 %v1957, %v208
      %v1970 = vmul.f32 %v1958, %v212
      %v1971 = vmul.f32 %v1959, %v204
      %v1972 = vmul.f32 %v1960, %v208
      %v1973 = vmul.f32 %v1961, %v212
      %1974 = vrot.lane.b32.xlu0 %v1962, 19
      %v1975 = vpop.permute.xlu0 %1974
      %1976 = vrot.lane.b32.xlu0 %v1965, 19
      %v1977 = vpop.permute.xlu0 %1976
      %1978 = vrot.lane.b32.xlu0 %v1968, 19
      %v1979 = vpop.permute.xlu0 %1978
      %1980 = vrot.lane.b32.xlu0 %v1971, 19
      %v1981 = vpop.permute.xlu0 %1980
      %1982 = vrot.lane.b32.xlu0 %v1963, 19
      %v1983 = vpop.permute.xlu0 %1982
      %1984 = vrot.lane.b32.xlu0 %v1966, 19
      %v1985 = vpop.permute.xlu0 %1984
      %1986 = vrot.lane.b32.xlu0 %v1969, 19
      %v1987 = vpop.permute.xlu0 %1986
      %1988 = vrot.lane.b32.xlu0 %v1972, 19
      %v1989 = vpop.permute.xlu0 %1988
      %1990 = vrot.lane.b32.xlu0 %v1964, 19
      %v1991 = vpop.permute.xlu0 %1990
      %1992 = vrot.lane.b32.xlu0 %v1967, 19
      %v1993 = vpop.permute.xlu0 %1992
      %1994 = vrot.lane.b32.xlu0 %v1970, 19
      %v1995 = vpop.permute.xlu0 %1994
      %1996 = vrot.lane.b32.xlu0 %v1973, 19
      %v1997 = vpop.permute.xlu0 %1996
      %v1998 = vsel %vm231, %v1983, %v1991
      %v1999 = vsel %vm231, %v1985, %v1993
      %v2000 = vsel %vm231, %v1987, %v1995
      %v2001 = vsel %vm231, %v1989, %v1997
      %v2002 = vsel %vm231, %v1975, %v1983
      %v2003 = vsel %vm231, %v1977, %v1985
      %v2004 = vsel %vm231, %v1979, %v1987
      %v2005 = vsel %vm231, %v1981, %v1989
      %v2006 = vsel %vm231, %v1991, %v1975
      %v2007 = vsel %vm231, %v1993, %v1977
      %v2008 = vsel %vm231, %v1995, %v1979
      %v2009 = vsel %vm231, %v1997, %v1981
      %v2010 = vpack.c.bf16 %v2007, %v2006
      %v2011 = vpack.c.bf16 %v2003, %v2002
      %v2012 = vpack.c.bf16 %v1999, %v1998
      %v2013 = vpack.c.bf16 %v2009, %v2008
      %v2014 = vpack.c.bf16 %v2005, %v2004
      %v2015 = vpack.c.bf16 %v2001, %v2000
      %2016 = vrot.lane.b32.xlu0 %v1962, 18
      %v2017 = vpop.permute.xlu0 %2016
      %2018 = vrot.lane.b32.xlu0 %v1965, 18
      %v2019 = vpop.permute.xlu0 %2018
      %2020 = vrot.lane.b32.xlu0 %v1968, 18
      %v2021 = vpop.permute.xlu0 %2020
      %2022 = vrot.lane.b32.xlu0 %v1971, 18
      %v2023 = vpop.permute.xlu0 %2022
      %2024 = vrot.lane.b32.xlu0 %v1963, 18
      %v2025 = vpop.permute.xlu0 %2024
      %2026 = vrot.lane.b32.xlu0 %v1966, 18
      %v2027 = vpop.permute.xlu0 %2026
      %2028 = vrot.lane.b32.xlu0 %v1969, 18
      %v2029 = vpop.permute.xlu0 %2028
      %2030 = vrot.lane.b32.xlu0 %v1972, 18
      %v2031 = vpop.permute.xlu0 %2030
      %2032 = vrot.lane.b32.xlu0 %v1964, 18
      %v2033 = vpop.permute.xlu0 %2032
      %2034 = vrot.lane.b32.xlu0 %v1967, 18
      %v2035 = vpop.permute.xlu0 %2034
      %2036 = vrot.lane.b32.xlu0 %v1970, 18
      %v2037 = vpop.permute.xlu0 %2036
      %2038 = vrot.lane.b32.xlu0 %v1973, 18
      %v2039 = vpop.permute.xlu0 %2038
      %v2040 = vsel %vm247, %v2025, %v2033
      %v2041 = vsel %vm247, %v2027, %v2035
      %v2042 = vsel %vm247, %v2029, %v2037
      %v2043 = vsel %vm247, %v2031, %v2039
      %v2044 = vsel %vm247, %v2017, %v2025
      %v2045 = vsel %vm247, %v2019, %v2027
      %v2046 = vsel %vm247, %v2021, %v2029
      %v2047 = vsel %vm247, %v2023, %v2031
      %v2048 = vsel %vm247, %v2033, %v2017
      %v2049 = vsel %vm247, %v2035, %v2019
      %v2050 = vsel %vm247, %v2037, %v2021
      %v2051 = vsel %vm247, %v2039, %v2023
      %v2052 = vpack.c.bf16 %v2049, %v2048
      %v2053 = vpack.c.bf16 %v2045, %v2044
      %v2054 = vpack.c.bf16 %v2041, %v2040
      %v2055 = vpack.c.bf16 %v2051, %v2050
      %v2056 = vpack.c.bf16 %v2047, %v2046
      %v2057 = vpack.c.bf16 %v2043, %v2042
      %2058 = vrot.lane.b32.xlu0 %v1962, 17
      %v2059 = vpop.permute.xlu0 %2058
      %2060 = vrot.lane.b32.xlu0 %v1965, 17
      %v2061 = vpop.permute.xlu0 %2060
      %2062 = vrot.lane.b32.xlu0 %v1968, 17
      %v2063 = vpop.permute.xlu0 %2062
      %2064 = vrot.lane.b32.xlu0 %v1971, 17
      %v2065 = vpop.permute.xlu0 %2064
      %2066 = vrot.lane.b32.xlu0 %v1963, 17
      %v2067 = vpop.permute.xlu0 %2066
      %2068 = vrot.lane.b32.xlu0 %v1966, 17
      %v2069 = vpop.permute.xlu0 %2068
      %2070 = vrot.lane.b32.xlu0 %v1969, 17
      %v2071 = vpop.permute.xlu0 %2070
      %2072 = vrot.lane.b32.xlu0 %v1972, 17
      %v2073 = vpop.permute.xlu0 %2072
      %2074 = vrot.lane.b32.xlu0 %v1964, 17
      %v2075 = vpop.permute.xlu0 %2074
      %2076 = vrot.lane.b32.xlu0 %v1967, 17
      %v2077 = vpop.permute.xlu0 %2076
      %2078 = vrot.lane.b32.xlu0 %v1970, 17
      %v2079 = vpop.permute.xlu0 %2078
      %2080 = vrot.lane.b32.xlu0 %v1973, 17
      %v2081 = vpop.permute.xlu0 %2080
      %v2082 = vsel %vm263, %v2067, %v2075
      %v2083 = vsel %vm263, %v2069, %v2077
      %v2084 = vsel %vm263, %v2071, %v2079
      %v2085 = vsel %vm263, %v2073, %v2081
      %v2086 = vsel %vm263, %v2059, %v2067
      %v2087 = vsel %vm263, %v2061, %v2069
      %v2088 = vsel %vm263, %v2063, %v2071
      %v2089 = vsel %vm263, %v2065, %v2073
      %v2090 = vsel %vm263, %v2075, %v2059
      %v2091 = vsel %vm263, %v2077, %v2061
      %v2092 = vsel %vm263, %v2079, %v2063
      %v2093 = vsel %vm263, %v2081, %v2065
      %v2094 = vpack.c.bf16 %v2091, %v2090
      %v2095 = vpack.c.bf16 %v2087, %v2086
      %v2096 = vpack.c.bf16 %v2083, %v2082
      %v2097 = vpack.c.bf16 %v2093, %v2092
      %v2098 = vpack.c.bf16 %v2089, %v2088
      %v2099 = vpack.c.bf16 %v2085, %v2084
      %2100 = vrot.lane.b32.xlu0 %v1962, 1
      %v2101 = vpop.permute.xlu0 %2100
      %2102 = vrot.lane.b32.xlu0 %v1965, 1
      %v2103 = vpop.permute.xlu0 %2102
      %2104 = vrot.lane.b32.xlu0 %v1968, 1
      %v2105 = vpop.permute.xlu0 %2104
      %2106 = vrot.lane.b32.xlu0 %v1971, 1
      %v2107 = vpop.permute.xlu0 %2106
      %2108 = vrot.lane.b32.xlu0 %v1963, 1
      %v2109 = vpop.permute.xlu0 %2108
      %2110 = vrot.lane.b32.xlu0 %v1966, 1
      %v2111 = vpop.permute.xlu0 %2110
      %2112 = vrot.lane.b32.xlu0 %v1969, 1
      %v2113 = vpop.permute.xlu0 %2112
      %2114 = vrot.lane.b32.xlu0 %v1972, 1
      %v2115 = vpop.permute.xlu0 %2114
      %2116 = vrot.lane.b32.xlu0 %v1964, 1
      %v2117 = vpop.permute.xlu0 %2116
      %2118 = vrot.lane.b32.xlu0 %v1967, 1
      %v2119 = vpop.permute.xlu0 %2118
      %2120 = vrot.lane.b32.xlu0 %v1970, 1
      %v2121 = vpop.permute.xlu0 %2120
      %2122 = vrot.lane.b32.xlu0 %v1973, 1
      %v2123 = vpop.permute.xlu0 %2122
      %v2124 = vsel %vm279, %v2109, %v2117
      %v2125 = vsel %vm279, %v2111, %v2119
      %v2126 = vsel %vm279, %v2113, %v2121
      %v2127 = vsel %vm279, %v2115, %v2123
      %v2128 = vsel %vm279, %v2101, %v2109
      %v2129 = vsel %vm279, %v2103, %v2111
      %v2130 = vsel %vm279, %v2105, %v2113
      %v2131 = vsel %vm279, %v2107, %v2115
      %v2132 = vsel %vm279, %v2117, %v2101
      %v2133 = vsel %vm279, %v2119, %v2103
      %v2134 = vsel %vm279, %v2121, %v2105
      %v2135 = vsel %vm279, %v2123, %v2107
      %v2136 = vpack.c.bf16 %v2133, %v2132
      %v2137 = vpack.c.bf16 %v2129, %v2128
      %v2138 = vpack.c.bf16 %v2125, %v2124
      %v2139 = vpack.c.bf16 %v2135, %v2134
      %v2140 = vpack.c.bf16 %v2131, %v2130
      %v2141 = vpack.c.bf16 %v2127, %v2126
      %v2142 = vpack.c.bf16 %v1965, %v1962
      %v2143 = vpack.c.bf16 %v1966, %v1963
      %v2144 = vpack.c.bf16 %v1967, %v1964
      %v2145 = vpack.c.bf16 %v1971, %v1968
      %v2146 = vpack.c.bf16 %v1972, %v1969
      %v2147 = vpack.c.bf16 %v1973, %v1970
      %2148 = vrot.lane.b32.xlu0 %v1962, 127
      %v2149 = vpop.permute.xlu0 %2148
      %2150 = vrot.lane.b32.xlu0 %v1965, 127
      %v2151 = vpop.permute.xlu0 %2150
      %2152 = vrot.lane.b32.xlu0 %v1968, 127
      %v2153 = vpop.permute.xlu0 %2152
      %2154 = vrot.lane.b32.xlu0 %v1971, 127
      %v2155 = vpop.permute.xlu0 %2154
      %2156 = vrot.lane.b32.xlu0 %v1963, 127
      %v2157 = vpop.permute.xlu0 %2156
      %2158 = vrot.lane.b32.xlu0 %v1966, 127
      %v2159 = vpop.permute.xlu0 %2158
      %2160 = vrot.lane.b32.xlu0 %v1969, 127
      %v2161 = vpop.permute.xlu0 %2160
      %2162 = vrot.lane.b32.xlu0 %v1972, 127
      %v2163 = vpop.permute.xlu0 %2162
      %2164 = vrot.lane.b32.xlu0 %v1964, 127
      %v2165 = vpop.permute.xlu0 %2164
      %2166 = vrot.lane.b32.xlu0 %v1967, 127
      %v2167 = vpop.permute.xlu0 %2166
      %2168 = vrot.lane.b32.xlu0 %v1970, 127
      %v2169 = vpop.permute.xlu0 %2168
      %2170 = vrot.lane.b32.xlu0 %v1973, 127
      %v2171 = vpop.permute.xlu0 %2170
      %v2172 = vsel %vm299, %v2157, %v2165
      %v2173 = vsel %vm299, %v2159, %v2167
      %v2174 = vsel %vm299, %v2161, %v2169
      %v2175 = vsel %vm299, %v2163, %v2171
      %v2176 = vsel %vm299, %v2149, %v2157
      %v2177 = vsel %vm299, %v2151, %v2159
      %v2178 = vsel %vm299, %v2153, %v2161
      %v2179 = vsel %vm299, %v2155, %v2163
      %v2180 = vsel %vm299, %v2165, %v2149
      %v2181 = vsel %vm299, %v2167, %v2151
      %v2182 = vsel %vm299, %v2169, %v2153
      %v2183 = vsel %vm299, %v2171, %v2155
      %v2184 = vpack.c.bf16 %v2177, %v2176
      %v2185 = vpack.c.bf16 %v2173, %v2172
      %v2186 = vpack.c.bf16 %v2181, %v2180
      %v2187 = vpack.c.bf16 %v2179, %v2178
      %v2188 = vpack.c.bf16 %v2175, %v2174
      %v2189 = vpack.c.bf16 %v2183, %v2182
      %2190 = vrot.lane.b32.xlu0 %v1962, 111
      %v2191 = vpop.permute.xlu0 %2190
      %2192 = vrot.lane.b32.xlu0 %v1965, 111
      %v2193 = vpop.permute.xlu0 %2192
      %2194 = vrot.lane.b32.xlu0 %v1968, 111
      %v2195 = vpop.permute.xlu0 %2194
      %2196 = vrot.lane.b32.xlu0 %v1971, 111
      %v2197 = vpop.permute.xlu0 %2196
      %2198 = vrot.lane.b32.xlu0 %v1963, 111
      %v2199 = vpop.permute.xlu0 %2198
      %2200 = vrot.lane.b32.xlu0 %v1966, 111
      %v2201 = vpop.permute.xlu0 %2200
      %2202 = vrot.lane.b32.xlu0 %v1969, 111
      %v2203 = vpop.permute.xlu0 %2202
      %2204 = vrot.lane.b32.xlu0 %v1972, 111
      %v2205 = vpop.permute.xlu0 %2204
      %2206 = vrot.lane.b32.xlu0 %v1964, 111
      %v2207 = vpop.permute.xlu0 %2206
      %2208 = vrot.lane.b32.xlu0 %v1967, 111
      %v2209 = vpop.permute.xlu0 %2208
      %2210 = vrot.lane.b32.xlu0 %v1970, 111
      %v2211 = vpop.permute.xlu0 %2210
      %2212 = vrot.lane.b32.xlu0 %v1973, 111
      %v2213 = vpop.permute.xlu0 %2212
      %v2214 = vsel %vm315, %v2199, %v2207
      %v2215 = vsel %vm315, %v2201, %v2209
      %v2216 = vsel %vm315, %v2203, %v2211
      %v2217 = vsel %vm315, %v2205, %v2213
      %v2218 = vsel %vm315, %v2191, %v2199
      %v2219 = vsel %vm315, %v2193, %v2201
      %v2220 = vsel %vm315, %v2195, %v2203
      %v2221 = vsel %vm315, %v2197, %v2205
      %v2222 = vsel %vm315, %v2207, %v2191
      %v2223 = vsel %vm315, %v2209, %v2193
      %v2224 = vsel %vm315, %v2211, %v2195
      %v2225 = vsel %vm315, %v2213, %v2197
      %v2226 = vpack.c.bf16 %v2219, %v2218
      %v2227 = vpack.c.bf16 %v2215, %v2214
      %v2228 = vpack.c.bf16 %v2223, %v2222
      %v2229 = vpack.c.bf16 %v2221, %v2220
      %v2230 = vpack.c.bf16 %v2217, %v2216
      %v2231 = vpack.c.bf16 %v2225, %v2224
      %2232 = vrot.lane.b32.xlu0 %v1962, 110
      %v2233 = vpop.permute.xlu0 %2232
      %2234 = vrot.lane.b32.xlu0 %v1965, 110
      %v2235 = vpop.permute.xlu0 %2234
      %2236 = vrot.lane.b32.xlu0 %v1968, 110
      %v2237 = vpop.permute.xlu0 %2236
      %2238 = vrot.lane.b32.xlu0 %v1971, 110
      %v2239 = vpop.permute.xlu0 %2238
      %2240 = vrot.lane.b32.xlu0 %v1963, 110
      %v2241 = vpop.permute.xlu0 %2240
      %2242 = vrot.lane.b32.xlu0 %v1966, 110
      %v2243 = vpop.permute.xlu0 %2242
      %2244 = vrot.lane.b32.xlu0 %v1969, 110
      %v2245 = vpop.permute.xlu0 %2244
      %2246 = vrot.lane.b32.xlu0 %v1972, 110
      %v2247 = vpop.permute.xlu0 %2246
      %2248 = vrot.lane.b32.xlu0 %v1964, 110
      %v2249 = vpop.permute.xlu0 %2248
      %2250 = vrot.lane.b32.xlu0 %v1967, 110
      %v2251 = vpop.permute.xlu0 %2250
      %2252 = vrot.lane.b32.xlu0 %v1970, 110
      %v2253 = vpop.permute.xlu0 %2252
      %2254 = vrot.lane.b32.xlu0 %v1973, 110
      %v2255 = vpop.permute.xlu0 %2254
      %v2256 = vsel %vm331, %v2241, %v2249
      %v2257 = vsel %vm331, %v2243, %v2251
      %v2258 = vsel %vm331, %v2245, %v2253
      %v2259 = vsel %vm331, %v2247, %v2255
      %v2260 = vsel %vm331, %v2233, %v2241
      %v2261 = vsel %vm331, %v2235, %v2243
      %v2262 = vsel %vm331, %v2237, %v2245
      %v2263 = vsel %vm331, %v2239, %v2247
      %v2264 = vsel %vm331, %v2249, %v2233
      %v2265 = vsel %vm331, %v2251, %v2235
      %v2266 = vsel %vm331, %v2253, %v2237
      %v2267 = vsel %vm331, %v2255, %v2239
      %v2268 = vpack.c.bf16 %v2261, %v2260
      %v2269 = vpack.c.bf16 %v2257, %v2256
      %v2270 = vpack.c.bf16 %v2265, %v2264
      %v2271 = vpack.c.bf16 %v2263, %v2262
      %v2272 = vpack.c.bf16 %v2259, %v2258
      %v2273 = vpack.c.bf16 %v2267, %v2266
      %2274 = vrot.lane.b32.xlu0 %v1962, 109
      %v2275 = vpop.permute.xlu0 %2274
      %2276 = vrot.lane.b32.xlu0 %v1965, 109
      %v2277 = vpop.permute.xlu0 %2276
      %2278 = vrot.lane.b32.xlu0 %v1968, 109
      %v2279 = vpop.permute.xlu0 %2278
      %2280 = vrot.lane.b32.xlu0 %v1971, 109
      %v2281 = vpop.permute.xlu0 %2280
      %2282 = vrot.lane.b32.xlu0 %v1963, 109
      %v2283 = vpop.permute.xlu0 %2282
      %2284 = vrot.lane.b32.xlu0 %v1966, 109
      %v2285 = vpop.permute.xlu0 %2284
      %2286 = vrot.lane.b32.xlu0 %v1969, 109
      %v2287 = vpop.permute.xlu0 %2286
      %2288 = vrot.lane.b32.xlu0 %v1972, 109
      %v2289 = vpop.permute.xlu0 %2288
      %2290 = vrot.lane.b32.xlu0 %v1964, 109
      %v2291 = vpop.permute.xlu0 %2290
      %2292 = vrot.lane.b32.xlu0 %v1967, 109
      %v2293 = vpop.permute.xlu0 %2292
      %2294 = vrot.lane.b32.xlu0 %v1970, 109
      %v2295 = vpop.permute.xlu0 %2294
      %2296 = vrot.lane.b32.xlu0 %v1973, 109
      %v2297 = vpop.permute.xlu0 %2296
      %v2298 = vsel %vm347, %v2283, %v2291
      %v2299 = vsel %vm347, %v2285, %v2293
      %v2300 = vsel %vm347, %v2287, %v2295
      %v2301 = vsel %vm347, %v2289, %v2297
      %v2302 = vsel %vm347, %v2275, %v2283
      %v2303 = vsel %vm347, %v2277, %v2285
      %v2304 = vsel %vm347, %v2279, %v2287
      %v2305 = vsel %vm347, %v2281, %v2289
      %v2306 = vsel %vm347, %v2291, %v2275
      %v2307 = vsel %vm347, %v2293, %v2277
      %v2308 = vsel %vm347, %v2295, %v2279
      %v2309 = vsel %vm347, %v2297, %v2281
      %v2310 = vpack.c.bf16 %v2303, %v2302
      %v2311 = vpack.c.bf16 %v2299, %v2298
      %v2312 = vpack.c.bf16 %v2307, %v2306
      %v2313 = vpack.c.bf16 %v2305, %v2304
      %v2314 = vpack.c.bf16 %v2301, %v2300
      %v2315 = vpack.c.bf16 %v2309, %v2308
      %s2316 = scalar_lea.vmem %s1, 144
      %v2317 = vld [vmem:[%s2316] sm:$0xff]
      %v2318 = vld [vmem:[%s2316 + $0x8] sm:$0xf]
      %v2319 = vld [vmem:[%s2316 + $0xc] sm:$0xff]
      %v2320 = vld [vmem:[%s2316 + $0x14] sm:$0xf]
      %v2321 = vld [vmem:[%s2316 + $0x18] sm:$0xff]
      %v2322 = vld [vmem:[%s2316 + $0x20] sm:$0xf]
      %v2323 = vld [vmem:[%s2316 + $0x24] sm:$0xff]
      %v2324 = vld [vmem:[%s2316 + $0x2c] sm:$0xf]
      %s2325 = scalar_lea.vmem %s2, 96
      %v2326 = vld [vmem:[%s2325] sm:$0xff]
      %v2327 = vld [vmem:[%s2325 + $0x8] sm:$0xff]
      %v2328 = vld [vmem:[%s2325 + $0x10] sm:$0xff]
      %v2329 = vld [vmem:[%s2325 + $0x18] sm:$0xff]
      %2331 = vset.pattern.permute.xlu0 0
      %2332 = vperm.xlu0 %2331, %v2326
      %v2333 = vpop.permute.xlu0 %2332
      %2336 = vset.pattern.permute.xlu0 0
      %2337 = vperm.xlu0 %2336, %v2327
      %v2338 = vpop.permute.xlu0 %2337
      %2341 = vset.pattern.permute.xlu0 0
      %2342 = vperm.xlu0 %2341, %v2328
      %v2343 = vpop.permute.xlu0 %2342
      %2346 = vset.pattern.permute.xlu0 0
      %2347 = vperm.xlu0 %2346, %v2329
      %v2348 = vpop.permute.xlu0 %2347
      %v2358 = vunpack.c.l.b16 %v2317
      %v2359 = vunpack.c.h.b16 %v2317
      %v2360 = vunpack.c.l.b16 %v2318
      %v2361 = vunpack.c.l.b16 %v2319
      %v2362 = vunpack.c.h.b16 %v2319
      %v2363 = vunpack.c.l.b16 %v2320
      %v2364 = vunpack.c.l.b16 %v2321
      %v2365 = vunpack.c.h.b16 %v2321
      %v2366 = vunpack.c.l.b16 %v2322
      %v2367 = vunpack.c.l.b16 %v2323
      %v2368 = vunpack.c.h.b16 %v2323
      %v2369 = vunpack.c.l.b16 %v2324
      %v2370 = vpack.c.b16 %v2361, %v2358
      %v2371 = vpack.c.b16 %v2362, %v2359
      %v2372 = vpack.c.b16 %v2363, %v2360
      %v2373 = vpack.c.b16 %v2367, %v2364
      %v2374 = vpack.c.b16 %v2368, %v2365
      %v2375 = vpack.c.b16 %v2369, %v2366
      %v2381 = vsel %vm417, %v2372, 0
      %v2384 = vsel %vm417, %v2375, 0
      %2386 = vmatprep.subr.bf16.mxu0 %v2011
      %2387 = vmatpush1.bf16.msra.mxu0 %v2010
      %2388 = vmatprep.subr.bf16.mxu0 %v2014
      %2389 = vmatpush1.bf16.msra.mxu0 %v2013
      %2390 = vmatprep.subr.bf16.mxu0 %v2053
      %2391 = vmatpush1.bf16.msra.mxu0 %v2052
      %2392 = vmatprep.subr.bf16.mxu0 %v2056
      %2393 = vmatpush1.bf16.msra.mxu0 %v2055
      %2394 = vmatprep.subr.bf16.mxu0 %v2095
      %2395 = vmatpush1.bf16.msra.mxu0 %v2094
      %2396 = vmatprep.subr.bf16.mxu0 %v2098
      %2397 = vmatpush1.bf16.msra.mxu0 %v2097
      %2398 = vmatprep.subr.bf16.mxu0 %v2137
      %2399 = vmatpush1.bf16.msra.mxu0 %v2136
      %2400 = vmatprep.subr.bf16.mxu0 %v2140
      %2401 = vmatpush1.bf16.msra.mxu0 %v2139
      %2402 = vmatprep.subr.bf16.mxu0 %v2143
      %2403 = vmatpush1.bf16.msra.mxu0 %v2142
      %2404 = vmatprep.subr.bf16.mxu0 %v2146
      %2405 = vmatpush1.bf16.msra.mxu0 %v2145
      %2406 = vmatprep.subr.bf16.mxu0 %v2185
      %2407 = vmatpush1.bf16.msra.mxu0 %v2184
      %2408 = vmatprep.subr.bf16.mxu0 %v2188
      %2409 = vmatpush1.bf16.msra.mxu0 %v2187
      %2410 = vmatprep.subr.bf16.mxu0 %v2227
      %2411 = vmatpush1.bf16.msra.mxu0 %v2226
      %2412 = vmatprep.subr.bf16.mxu0 %v2230
      %2413 = vmatpush1.bf16.msra.mxu0 %v2229
      %2414 = vmatprep.subr.bf16.mxu0 %v2269
      %2415 = vmatpush1.bf16.msra.mxu0 %v2268
      %2416 = vmatprep.subr.bf16.mxu0 %v2272
      %2417 = vmatpush1.bf16.msra.mxu0 %v2271
      %2418 = vmatprep.mubr.bf16.mxu0 %v2371
      %2419 = vmatmul.mubr.bf16.gmra.mrb[0].mxu0 %v2370
      %v2420 = vpop.f32.mrb[0].mxu0
      %v2421 = vadd.f32 %v2333, %v2420
      %v2422 = vpop.f32.mrb[0].mxu0
      %v2423 = vadd.f32 %v2333, %v2422
      %v2424 = vpop.f32.mrb[0].mxu0
      %v2425 = vadd.f32 %v2338, %v2424
      %v2426 = vpop.f32.mrb[0].mxu0
      %v2427 = vadd.f32 %v2338, %v2426
      %2428 = vmatprep.mubr.bf16.mxu0 %v2374
      %2429 = vmatmul.mubr.bf16.gmra.mrb[0].mxu0 %v2373
      %v2430 = vpop.f32.mrb[0].mxu0
      %v2431 = vadd.f32 %v2343, %v2430
      %v2432 = vpop.f32.mrb[0].mxu0
      %v2433 = vadd.f32 %v2343, %v2432
      %v2434 = vpop.f32.mrb[0].mxu0
      %v2435 = vadd.f32 %v2348, %v2434
      %v2436 = vpop.f32.mrb[0].mxu0
      %v2437 = vadd.f32 %v2348, %v2436
      %2438 = vdwg.mxu0
      %2439 = vmatprep.subr.bf16.mxu0 %v2311
      %2440 = vmatpush1.bf16.msra.mxu0 %v2310
      %2441 = vmatprep.subr.bf16.mxu0 %v2314
      %2442 = vmatpush1.bf16.msra.mxu0 %v2313
      %2443 = vmatprep.subr.bf16.mxu0 0
      %2444 = vmatpush1.bf16.msra.mxu0 0
      %2445 = vmatprep.subr.bf16.mxu0 0
      %2446 = vmatpush1.bf16.msra.mxu0 0
      %2447 = vmatprep.subr.bf16.mxu0 0
      %2448 = vmatpush1.bf16.msra.mxu0 0
      %2449 = vmatprep.subr.bf16.mxu0 0
      %2450 = vmatpush1.bf16.msra.mxu0 0
      %2451 = vmatprep.subr.bf16.mxu0 0
      %2452 = vmatpush1.bf16.msra.mxu0 0
      %2453 = vmatprep.subr.bf16.mxu0 0
      %2454 = vmatpush1.bf16.msra.mxu0 0
      %2455 = vmatprep.subr.bf16.mxu0 0
      %2456 = vmatpush1.bf16.msra.mxu0 0
      %2457 = vmatprep.subr.bf16.mxu0 0
      %2458 = vmatpush1.bf16.msra.mxu0 0
      %2459 = vmatprep.subr.bf16.mxu0 0
      %2460 = vmatpush1.bf16.msra.mxu0 0
      %2461 = vmatprep.subr.bf16.mxu0 0
      %2462 = vmatpush1.bf16.msra.mxu0 0
      %2463 = vmatprep.subr.bf16.mxu0 0
      %2464 = vmatpush1.bf16.msra.mxu0 0
      %2465 = vmatprep.subr.bf16.mxu0 0
      %2466 = vmatpush1.bf16.msra.mxu0 0
      %2467 = vmatprep.subr.bf16.mxu0 0
      %2468 = vmatpush1.bf16.msra.mxu0 0
      %2469 = vmatprep.subr.bf16.mxu0 0
      %2470 = vmatpush1.bf16.msra.mxu0 0
      %2471 = vmatprep.mubr.bf16.mxu0 0
      %2472 = vmatmul.mubr.bf16.gmra.mrb[0].mxu0 %v2381
      %v2473 = vpop.f32.mrb[0].mxu0
      %v2474 = vadd.f32 %v2421, %v2473
      %v2475 = vpop.f32.mrb[0].mxu0
      %v2476 = vadd.f32 %v2423, %v2475
      %v2477 = vpop.f32.mrb[0].mxu0
      %v2478 = vadd.f32 %v2425, %v2477
      %v2479 = vpop.f32.mrb[0].mxu0
      %v2480 = vadd.f32 %v2427, %v2479
      %2481 = vmatprep.mubr.bf16.mxu0 0
      %2482 = vmatmul.mubr.bf16.gmra.mrb[0].mxu0 %v2384
      %v2483 = vpop.f32.mrb[0].mxu0
      %v2484 = vadd.f32 %v2431, %v2483
      %v2485 = vpop.f32.mrb[0].mxu0
      %v2486 = vadd.f32 %v2433, %v2485
      %v2487 = vpop.f32.mrb[0].mxu0
      %v2488 = vadd.f32 %v2435, %v2487
      %v2489 = vpop.f32.mrb[0].mxu0
      %v2490 = vadd.f32 %v2437, %v2489
      %2491 = vdwg.mxu0
      %2492 = vmatprep.subr.bf16.mxu0 0
      %2493 = vmatpush1.bf16.msra.mxu0 %v2012
      %2494 = vmatprep.subr.bf16.mxu0 0
      %2495 = vmatpush1.bf16.msra.mxu0 %v2015
      %2496 = vmatprep.subr.bf16.mxu0 0
      %2497 = vmatpush1.bf16.msra.mxu0 %v2054
      %2498 = vmatprep.subr.bf16.mxu0 0
      %2499 = vmatpush1.bf16.msra.mxu0 %v2057
      %2500 = vmatprep.subr.bf16.mxu0 0
      %2501 = vmatpush1.bf16.msra.mxu0 %v2096
      %2502 = vmatprep.subr.bf16.mxu0 0
      %2503 = vmatpush1.bf16.msra.mxu0 %v2099
      %2504 = vmatprep.subr.bf16.mxu0 0
      %2505 = vmatpush1.bf16.msra.mxu0 %v2138
      %2506 = vmatprep.subr.bf16.mxu0 0
      %2507 = vmatpush1.bf16.msra.mxu0 %v2141
      %2508 = vmatprep.subr.bf16.mxu0 0
      %2509 = vmatpush1.bf16.msra.mxu0 %v2144
      %2510 = vmatprep.subr.bf16.mxu0 0
      %2511 = vmatpush1.bf16.msra.mxu0 %v2147
      %2512 = vmatprep.subr.bf16.mxu0 0
      %2513 = vmatpush1.bf16.msra.mxu0 %v2186
      %2514 = vmatprep.subr.bf16.mxu0 0
      %2515 = vmatpush1.bf16.msra.mxu0 %v2189
      %2516 = vmatprep.subr.bf16.mxu0 0
      %2517 = vmatpush1.bf16.msra.mxu0 %v2228
      %2518 = vmatprep.subr.bf16.mxu0 0
      %2519 = vmatpush1.bf16.msra.mxu0 %v2231
      %2520 = vmatprep.subr.bf16.mxu0 0
      %2521 = vmatpush1.bf16.msra.mxu0 %v2270
      %2522 = vmatprep.subr.bf16.mxu0 0
      %2523 = vmatpush1.bf16.msra.mxu0 %v2273
      %2524 = vmatprep.mubr.bf16.mxu0 %v2371
      %2525 = vmatmul.mubr.bf16.gmra.mrb[0].mxu0 %v2370
      %v2526 = vpop.f32.mrb[0].mxu0
      %v2527 = vadd.f32 %v2333, %v2526
      %v2528 = vpop.f32.mrb[0].mxu0
      %v2529 = vpop.f32.mrb[0].mxu0
      %v2530 = vadd.f32 %v2338, %v2529
      %v2531 = vpop.f32.mrb[0].mxu0
      %2532 = vmatprep.mubr.bf16.mxu0 %v2374
      %2533 = vmatmul.mubr.bf16.gmra.mrb[0].mxu0 %v2373
      %v2534 = vpop.f32.mrb[0].mxu0
      %v2535 = vadd.f32 %v2343, %v2534
      %v2536 = vpop.f32.mrb[0].mxu0
      %v2537 = vpop.f32.mrb[0].mxu0
      %v2538 = vadd.f32 %v2348, %v2537
      %v2539 = vpop.f32.mrb[0].mxu0
      %2540 = vdwg.mxu0
      %2541 = vmatprep.subr.bf16.mxu0 0
      %2542 = vmatpush1.bf16.msra.mxu0 %v2312
      %2543 = vmatprep.subr.bf16.mxu0 0
      %2544 = vmatpush1.bf16.msra.mxu0 %v2315
      %2545 = vmatprep.subr.bf16.mxu0 0
      %2546 = vmatpush1.bf16.msra.mxu0 0
      %2547 = vmatprep.subr.bf16.mxu0 0
      %2548 = vmatpush1.bf16.msra.mxu0 0
      %2549 = vmatprep.subr.bf16.mxu0 0
      %2550 = vmatpush1.bf16.msra.mxu0 0
      %2551 = vmatprep.subr.bf16.mxu0 0
      %2552 = vmatpush1.bf16.msra.mxu0 0
      %2553 = vmatprep.subr.bf16.mxu0 0
      %2554 = vmatpush1.bf16.msra.mxu0 0
      %2555 = vmatprep.subr.bf16.mxu0 0
      %2556 = vmatpush1.bf16.msra.mxu0 0
      %2557 = vmatprep.subr.bf16.mxu0 0
      %2558 = vmatpush1.bf16.msra.mxu0 0
      %2559 = vmatprep.subr.bf16.mxu0 0
      %2560 = vmatpush1.bf16.msra.mxu0 0
      %2561 = vmatprep.subr.bf16.mxu0 0
      %2562 = vmatpush1.bf16.msra.mxu0 0
      %2563 = vmatprep.subr.bf16.mxu0 0
      %2564 = vmatpush1.bf16.msra.mxu0 0
      %2565 = vmatprep.subr.bf16.mxu0 0
      %2566 = vmatpush1.bf16.msra.mxu0 0
      %2567 = vmatprep.subr.bf16.mxu0 0
      %2568 = vmatpush1.bf16.msra.mxu0 0
      %2569 = vmatprep.subr.bf16.mxu0 0
      %2570 = vmatpush1.bf16.msra.mxu0 0
      %2571 = vmatprep.subr.bf16.mxu0 0
      %2572 = vmatpush1.bf16.msra.mxu0 0
      %2573 = vmatprep.mubr.bf16.mxu0 0
      %2574 = vmatmul.mubr.bf16.gmra.mrb[0].mxu0 %v2381
      %v2575 = vpop.f32.mrb[0].mxu0
      %v2576 = vadd.f32 %v2527, %v2575
      %v2577 = vpop.f32.mrb[0].mxu0
      %v2578 = vpop.f32.mrb[0].mxu0
      %v2579 = vadd.f32 %v2530, %v2578
      %v2580 = vpop.f32.mrb[0].mxu0
      %2581 = vmatprep.mubr.bf16.mxu0 0
      %2582 = vmatmul.mubr.bf16.gmra.mrb[0].mxu0 %v2384
      %v2583 = vpop.f32.mrb[0].mxu0
      %v2584 = vadd.f32 %v2535, %v2583
      %v2585 = vpop.f32.mrb[0].mxu0
      %v2586 = vpop.f32.mrb[0].mxu0
      %v2587 = vadd.f32 %v2538, %v2586
      %v2588 = vpop.f32.mrb[0].mxu0
      %2589 = vdwg.mxu0
      %v2590 = vmax.f32 %v2474, 0.0
      %v2591 = vmax.f32 %v2476, 0.0
      %v2592 = vmax.f32 %v2576, 0.0
      %v2593 = vmax.f32 %v2478, 0.0
      %v2594 = vmax.f32 %v2480, 0.0
      %v2595 = vmax.f32 %v2579, 0.0
      %v2596 = vmax.f32 %v2484, 0.0
      %v2597 = vmax.f32 %v2486, 0.0
      %v2598 = vmax.f32 %v2584, 0.0
      %v2599 = vmax.f32 %v2488, 0.0
      %v2600 = vmax.f32 %v2490, 0.0
      %v2601 = vmax.f32 %v2587, 0.0
      %v2602 = vmul.f32 %v2590, %v204
      %v2603 = vmul.f32 %v2591, %v208
      %v2604 = vmul.f32 %v2592, %v212
      %v2605 = vmul.f32 %v2593, %v204
      %v2606 = vmul.f32 %v2594, %v208
      %v2607 = vmul.f32 %v2595, %v212
      %v2608 = vmul.f32 %v2596, %v204
      %v2609 = vmul.f32 %v2597, %v208
      %v2610 = vmul.f32 %v2598, %v212
      %v2611 = vmul.f32 %v2599, %v204
      %v2612 = vmul.f32 %v2600, %v208
      %v2613 = vmul.f32 %v2601, %v212
      %2614 = vrot.lane.b32.xlu0 %v2602, 19
      %v2615 = vpop.permute.xlu0 %2614
      %2616 = vrot.lane.b32.xlu0 %v2605, 19
      %v2617 = vpop.permute.xlu0 %2616
      %2618 = vrot.lane.b32.xlu0 %v2608, 19
      %v2619 = vpop.permute.xlu0 %2618
      %2620 = vrot.lane.b32.xlu0 %v2611, 19
      %v2621 = vpop.permute.xlu0 %2620
      %2622 = vrot.lane.b32.xlu0 %v2603, 19
      %v2623 = vpop.permute.xlu0 %2622
      %2624 = vrot.lane.b32.xlu0 %v2606, 19
      %v2625 = vpop.permute.xlu0 %2624
      %2626 = vrot.lane.b32.xlu0 %v2609, 19
      %v2627 = vpop.permute.xlu0 %2626
      %2628 = vrot.lane.b32.xlu0 %v2612, 19
      %v2629 = vpop.permute.xlu0 %2628
      %2630 = vrot.lane.b32.xlu0 %v2604, 19
      %v2631 = vpop.permute.xlu0 %2630
      %2632 = vrot.lane.b32.xlu0 %v2607, 19
      %v2633 = vpop.permute.xlu0 %2632
      %2634 = vrot.lane.b32.xlu0 %v2610, 19
      %v2635 = vpop.permute.xlu0 %2634
      %2636 = vrot.lane.b32.xlu0 %v2613, 19
      %v2637 = vpop.permute.xlu0 %2636
      %v2638 = vsel %vm231, %v2623, %v2631
      %v2639 = vsel %vm231, %v2625, %v2633
      %v2640 = vsel %vm231, %v2627, %v2635
      %v2641 = vsel %vm231, %v2629, %v2637
      %v2642 = vsel %vm231, %v2615, %v2623
      %v2643 = vsel %vm231, %v2617, %v2625
      %v2644 = vsel %vm231, %v2619, %v2627
      %v2645 = vsel %vm231, %v2621, %v2629
      %v2646 = vsel %vm231, %v2631, %v2615
      %v2647 = vsel %vm231, %v2633, %v2617
      %v2648 = vsel %vm231, %v2635, %v2619
      %v2649 = vsel %vm231, %v2637, %v2621
      %v2650 = vpack.c.bf16 %v2647, %v2646
      %v2651 = vpack.c.bf16 %v2643, %v2642
      %v2652 = vpack.c.bf16 %v2639, %v2638
      %v2653 = vpack.c.bf16 %v2649, %v2648
      %v2654 = vpack.c.bf16 %v2645, %v2644
      %v2655 = vpack.c.bf16 %v2641, %v2640
      %2656 = vrot.lane.b32.xlu0 %v2602, 18
      %v2657 = vpop.permute.xlu0 %2656
      %2658 = vrot.lane.b32.xlu0 %v2605, 18
      %v2659 = vpop.permute.xlu0 %2658
      %2660 = vrot.lane.b32.xlu0 %v2608, 18
      %v2661 = vpop.permute.xlu0 %2660
      %2662 = vrot.lane.b32.xlu0 %v2611, 18
      %v2663 = vpop.permute.xlu0 %2662
      %2664 = vrot.lane.b32.xlu0 %v2603, 18
      %v2665 = vpop.permute.xlu0 %2664
      %2666 = vrot.lane.b32.xlu0 %v2606, 18
      %v2667 = vpop.permute.xlu0 %2666
      %2668 = vrot.lane.b32.xlu0 %v2609, 18
      %v2669 = vpop.permute.xlu0 %2668
      %2670 = vrot.lane.b32.xlu0 %v2612, 18
      %v2671 = vpop.permute.xlu0 %2670
      %2672 = vrot.lane.b32.xlu0 %v2604, 18
      %v2673 = vpop.permute.xlu0 %2672
      %2674 = vrot.lane.b32.xlu0 %v2607, 18
      %v2675 = vpop.permute.xlu0 %2674
      %2676 = vrot.lane.b32.xlu0 %v2610, 18
      %v2677 = vpop.permute.xlu0 %2676
      %2678 = vrot.lane.b32.xlu0 %v2613, 18
      %v2679 = vpop.permute.xlu0 %2678
      %v2680 = vsel %vm247, %v2665, %v2673
      %v2681 = vsel %vm247, %v2667, %v2675
      %v2682 = vsel %vm247, %v2669, %v2677
      %v2683 = vsel %vm247, %v2671, %v2679
      %v2684 = vsel %vm247, %v2657, %v2665
      %v2685 = vsel %vm247, %v2659, %v2667
      %v2686 = vsel %vm247, %v2661, %v2669
      %v2687 = vsel %vm247, %v2663, %v2671
      %v2688 = vsel %vm247, %v2673, %v2657
      %v2689 = vsel %vm247, %v2675, %v2659
      %v2690 = vsel %vm247, %v2677, %v2661
      %v2691 = vsel %vm247, %v2679, %v2663
      %v2692 = vpack.c.bf16 %v2689, %v2688
      %v2693 = vpack.c.bf16 %v2685, %v2684
      %v2694 = vpack.c.bf16 %v2681, %v2680
      %v2695 = vpack.c.bf16 %v2691, %v2690
      %v2696 = vpack.c.bf16 %v2687, %v2686
      %v2697 = vpack.c.bf16 %v2683, %v2682
      %2698 = vrot.lane.b32.xlu0 %v2602, 17
      %v2699 = vpop.permute.xlu0 %2698
      %2700 = vrot.lane.b32.xlu0 %v2605, 17
      %v2701 = vpop.permute.xlu0 %2700
      %2702 = vrot.lane.b32.xlu0 %v2608, 17
      %v2703 = vpop.permute.xlu0 %2702
      %2704 = vrot.lane.b32.xlu0 %v2611, 17
      %v2705 = vpop.permute.xlu0 %2704
      %2706 = vrot.lane.b32.xlu0 %v2603, 17
      %v2707 = vpop.permute.xlu0 %2706
      %2708 = vrot.lane.b32.xlu0 %v2606, 17
      %v2709 = vpop.permute.xlu0 %2708
      %2710 = vrot.lane.b32.xlu0 %v2609, 17
      %v2711 = vpop.permute.xlu0 %2710
      %2712 = vrot.lane.b32.xlu0 %v2612, 17
      %v2713 = vpop.permute.xlu0 %2712
      %2714 = vrot.lane.b32.xlu0 %v2604, 17
      %v2715 = vpop.permute.xlu0 %2714
      %2716 = vrot.lane.b32.xlu0 %v2607, 17
      %v2717 = vpop.permute.xlu0 %2716
      %2718 = vrot.lane.b32.xlu0 %v2610, 17
      %v2719 = vpop.permute.xlu0 %2718
      %2720 = vrot.lane.b32.xlu0 %v2613, 17
      %v2721 = vpop.permute.xlu0 %2720
      %v2722 = vsel %vm263, %v2707, %v2715
      %v2723 = vsel %vm263, %v2709, %v2717
      %v2724 = vsel %vm263, %v2711, %v2719
      %v2725 = vsel %vm263, %v2713, %v2721
      %v2726 = vsel %vm263, %v2699, %v2707
      %v2727 = vsel %vm263, %v2701, %v2709
      %v2728 = vsel %vm263, %v2703, %v2711
      %v2729 = vsel %vm263, %v2705, %v2713
      %v2730 = vsel %vm263, %v2715, %v2699
      %v2731 = vsel %vm263, %v2717, %v2701
      %v2732 = vsel %vm263, %v2719, %v2703
      %v2733 = vsel %vm263, %v2721, %v2705
      %v2734 = vpack.c.bf16 %v2731, %v2730
      %v2735 = vpack.c.bf16 %v2727, %v2726
      %v2736 = vpack.c.bf16 %v2723, %v2722
      %v2737 = vpack.c.bf16 %v2733, %v2732
      %v2738 = vpack.c.bf16 %v2729, %v2728
      %v2739 = vpack.c.bf16 %v2725, %v2724
      %2740 = vrot.lane.b32.xlu0 %v2602, 1
      %v2741 = vpop.permute.xlu0 %2740
      %2742 = vrot.lane.b32.xlu0 %v2605, 1
      %v2743 = vpop.permute.xlu0 %2742
      %2744 = vrot.lane.b32.xlu0 %v2608, 1
      %v2745 = vpop.permute.xlu0 %2744
      %2746 = vrot.lane.b32.xlu0 %v2611, 1
      %v2747 = vpop.permute.xlu0 %2746
      %2748 = vrot.lane.b32.xlu0 %v2603, 1
      %v2749 = vpop.permute.xlu0 %2748
      %2750 = vrot.lane.b32.xlu0 %v2606, 1
      %v2751 = vpop.permute.xlu0 %2750
      %2752 = vrot.lane.b32.xlu0 %v2609, 1
      %v2753 = vpop.permute.xlu0 %2752
      %2754 = vrot.lane.b32.xlu0 %v2612, 1
      %v2755 = vpop.permute.xlu0 %2754
      %2756 = vrot.lane.b32.xlu0 %v2604, 1
      %v2757 = vpop.permute.xlu0 %2756
      %2758 = vrot.lane.b32.xlu0 %v2607, 1
      %v2759 = vpop.permute.xlu0 %2758
      %2760 = vrot.lane.b32.xlu0 %v2610, 1
      %v2761 = vpop.permute.xlu0 %2760
      %2762 = vrot.lane.b32.xlu0 %v2613, 1
      %v2763 = vpop.permute.xlu0 %2762
      %v2764 = vsel %vm279, %v2749, %v2757
      %v2765 = vsel %vm279, %v2751, %v2759
      %v2766 = vsel %vm279, %v2753, %v2761
      %v2767 = vsel %vm279, %v2755, %v2763
      %v2768 = vsel %vm279, %v2741, %v2749
      %v2769 = vsel %vm279, %v2743, %v2751
      %v2770 = vsel %vm279, %v2745, %v2753
      %v2771 = vsel %vm279, %v2747, %v2755
      %v2772 = vsel %vm279, %v2757, %v2741
      %v2773 = vsel %vm279, %v2759, %v2743
      %v2774 = vsel %vm279, %v2761, %v2745
      %v2775 = vsel %vm279, %v2763, %v2747
      %v2776 = vpack.c.bf16 %v2773, %v2772
      %v2777 = vpack.c.bf16 %v2769, %v2768
      %v2778 = vpack.c.bf16 %v2765, %v2764
      %v2779 = vpack.c.bf16 %v2775, %v2774
      %v2780 = vpack.c.bf16 %v2771, %v2770
      %v2781 = vpack.c.bf16 %v2767, %v2766
      %v2782 = vpack.c.bf16 %v2605, %v2602
      %v2783 = vpack.c.bf16 %v2606, %v2603
      %v2784 = vpack.c.bf16 %v2607, %v2604
      %v2785 = vpack.c.bf16 %v2611, %v2608
      %v2786 = vpack.c.bf16 %v2612, %v2609
      %v2787 = vpack.c.bf16 %v2613, %v2610
      %2788 = vrot.lane.b32.xlu0 %v2602, 127
      %v2789 = vpop.permute.xlu0 %2788
      %2790 = vrot.lane.b32.xlu0 %v2605, 127
      %v2791 = vpop.permute.xlu0 %2790
      %2792 = vrot.lane.b32.xlu0 %v2608, 127
      %v2793 = vpop.permute.xlu0 %2792
      %2794 = vrot.lane.b32.xlu0 %v2611, 127
      %v2795 = vpop.permute.xlu0 %2794
      %2796 = vrot.lane.b32.xlu0 %v2603, 127
      %v2797 = vpop.permute.xlu0 %2796
      %2798 = vrot.lane.b32.xlu0 %v2606, 127
      %v2799 = vpop.permute.xlu0 %2798
      %2800 = vrot.lane.b32.xlu0 %v2609, 127
      %v2801 = vpop.permute.xlu0 %2800
      %2802 = vrot.lane.b32.xlu0 %v2612, 127
      %v2803 = vpop.permute.xlu0 %2802
      %2804 = vrot.lane.b32.xlu0 %v2604, 127
      %v2805 = vpop.permute.xlu0 %2804
      %2806 = vrot.lane.b32.xlu0 %v2607, 127
      %v2807 = vpop.permute.xlu0 %2806
      %2808 = vrot.lane.b32.xlu0 %v2610, 127
      %v2809 = vpop.permute.xlu0 %2808
      %2810 = vrot.lane.b32.xlu0 %v2613, 127
      %v2811 = vpop.permute.xlu0 %2810
      %v2812 = vsel %vm299, %v2797, %v2805
      %v2813 = vsel %vm299, %v2799, %v2807
      %v2814 = vsel %vm299, %v2801, %v2809
      %v2815 = vsel %vm299, %v2803, %v2811
      %v2816 = vsel %vm299, %v2789, %v2797
      %v2817 = vsel %vm299, %v2791, %v2799
      %v2818 = vsel %vm299, %v2793, %v2801
      %v2819 = vsel %vm299, %v2795, %v2803
      %v2820 = vsel %vm299, %v2805, %v2789
      %v2821 = vsel %vm299, %v2807, %v2791
      %v2822 = vsel %vm299, %v2809, %v2793
      %v2823 = vsel %vm299, %v2811, %v2795
      %v2824 = vpack.c.bf16 %v2817, %v2816
      %v2825 = vpack.c.bf16 %v2813, %v2812
      %v2826 = vpack.c.bf16 %v2821, %v2820
      %v2827 = vpack.c.bf16 %v2819, %v2818
      %v2828 = vpack.c.bf16 %v2815, %v2814
      %v2829 = vpack.c.bf16 %v2823, %v2822
      %2830 = vrot.lane.b32.xlu0 %v2602, 111
      %v2831 = vpop.permute.xlu0 %2830
      %2832 = vrot.lane.b32.xlu0 %v2605, 111
      %v2833 = vpop.permute.xlu0 %2832
      %2834 = vrot.lane.b32.xlu0 %v2608, 111
      %v2835 = vpop.permute.xlu0 %2834
      %2836 = vrot.lane.b32.xlu0 %v2611, 111
      %v2837 = vpop.permute.xlu0 %2836
      %2838 = vrot.lane.b32.xlu0 %v2603, 111
      %v2839 = vpop.permute.xlu0 %2838
      %2840 = vrot.lane.b32.xlu0 %v2606, 111
      %v2841 = vpop.permute.xlu0 %2840
      %2842 = vrot.lane.b32.xlu0 %v2609, 111
      %v2843 = vpop.permute.xlu0 %2842
      %2844 = vrot.lane.b32.xlu0 %v2612, 111
      %v2845 = vpop.permute.xlu0 %2844
      %2846 = vrot.lane.b32.xlu0 %v2604, 111
      %v2847 = vpop.permute.xlu0 %2846
      %2848 = vrot.lane.b32.xlu0 %v2607, 111
      %v2849 = vpop.permute.xlu0 %2848
      %2850 = vrot.lane.b32.xlu0 %v2610, 111
      %v2851 = vpop.permute.xlu0 %2850
      %2852 = vrot.lane.b32.xlu0 %v2613, 111
      %v2853 = vpop.permute.xlu0 %2852
      %v2854 = vsel %vm315, %v2839, %v2847
      %v2855 = vsel %vm315, %v2841, %v2849
      %v2856 = vsel %vm315, %v2843, %v2851
      %v2857 = vsel %vm315, %v2845, %v2853
      %v2858 = vsel %vm315, %v2831, %v2839
      %v2859 = vsel %vm315, %v2833, %v2841
      %v2860 = vsel %vm315, %v2835, %v2843
      %v2861 = vsel %vm315, %v2837, %v2845
      %v2862 = vsel %vm315, %v2847, %v2831
      %v2863 = vsel %vm315, %v2849, %v2833
      %v2864 = vsel %vm315, %v2851, %v2835
      %v2865 = vsel %vm315, %v2853, %v2837
      %v2866 = vpack.c.bf16 %v2859, %v2858
      %v2867 = vpack.c.bf16 %v2855, %v2854
      %v2868 = vpack.c.bf16 %v2863, %v2862
      %v2869 = vpack.c.bf16 %v2861, %v2860
      %v2870 = vpack.c.bf16 %v2857, %v2856
      %v2871 = vpack.c.bf16 %v2865, %v2864
      %2872 = vrot.lane.b32.xlu0 %v2602, 110
      %v2873 = vpop.permute.xlu0 %2872
      %2874 = vrot.lane.b32.xlu0 %v2605, 110
      %v2875 = vpop.permute.xlu0 %2874
      %2876 = vrot.lane.b32.xlu0 %v2608, 110
      %v2877 = vpop.permute.xlu0 %2876
      %2878 = vrot.lane.b32.xlu0 %v2611, 110
      %v2879 = vpop.permute.xlu0 %2878
      %2880 = vrot.lane.b32.xlu0 %v2603, 110
      %v2881 = vpop.permute.xlu0 %2880
      %2882 = vrot.lane.b32.xlu0 %v2606, 110
      %v2883 = vpop.permute.xlu0 %2882
      %2884 = vrot.lane.b32.xlu0 %v2609, 110
      %v2885 = vpop.permute.xlu0 %2884
      %2886 = vrot.lane.b32.xlu0 %v2612, 110
      %v2887 = vpop.permute.xlu0 %2886
      %2888 = vrot.lane.b32.xlu0 %v2604, 110
      %v2889 = vpop.permute.xlu0 %2888
      %2890 = vrot.lane.b32.xlu0 %v2607, 110
      %v2891 = vpop.permute.xlu0 %2890
      %2892 = vrot.lane.b32.xlu0 %v2610, 110
      %v2893 = vpop.permute.xlu0 %2892
      %2894 = vrot.lane.b32.xlu0 %v2613, 110
      %v2895 = vpop.permute.xlu0 %2894
      %v2896 = vsel %vm331, %v2881, %v2889
      %v2897 = vsel %vm331, %v2883, %v2891
      %v2898 = vsel %vm331, %v2885, %v2893
      %v2899 = vsel %vm331, %v2887, %v2895
      %v2900 = vsel %vm331, %v2873, %v2881
      %v2901 = vsel %vm331, %v2875, %v2883
      %v2902 = vsel %vm331, %v2877, %v2885
      %v2903 = vsel %vm331, %v2879, %v2887
      %v2904 = vsel %vm331, %v2889, %v2873
      %v2905 = vsel %vm331, %v2891, %v2875
      %v2906 = vsel %vm331, %v2893, %v2877
      %v2907 = vsel %vm331, %v2895, %v2879
      %v2908 = vpack.c.bf16 %v2901, %v2900
      %v2909 = vpack.c.bf16 %v2897, %v2896
      %v2910 = vpack.c.bf16 %v2905, %v2904
      %v2911 = vpack.c.bf16 %v2903, %v2902
      %v2912 = vpack.c.bf16 %v2899, %v2898
      %v2913 = vpack.c.bf16 %v2907, %v2906
      %2914 = vrot.lane.b32.xlu0 %v2602, 109
      %v2915 = vpop.permute.xlu0 %2914
      %2916 = vrot.lane.b32.xlu0 %v2605, 109
      %v2917 = vpop.permute.xlu0 %2916
      %2918 = vrot.lane.b32.xlu0 %v2608, 109
      %v2919 = vpop.permute.xlu0 %2918
      %2920 = vrot.lane.b32.xlu0 %v2611, 109
      %v2921 = vpop.permute.xlu0 %2920
      %2922 = vrot.lane.b32.xlu0 %v2603, 109
      %v2923 = vpop.permute.xlu0 %2922
      %2924 = vrot.lane.b32.xlu0 %v2606, 109
      %v2925 = vpop.permute.xlu0 %2924
      %2926 = vrot.lane.b32.xlu0 %v2609, 109
      %v2927 = vpop.permute.xlu0 %2926
      %2928 = vrot.lane.b32.xlu0 %v2612, 109
      %v2929 = vpop.permute.xlu0 %2928
      %2930 = vrot.lane.b32.xlu0 %v2604, 109
      %v2931 = vpop.permute.xlu0 %2930
      %2932 = vrot.lane.b32.xlu0 %v2607, 109
      %v2933 = vpop.permute.xlu0 %2932
      %2934 = vrot.lane.b32.xlu0 %v2610, 109
      %v2935 = vpop.permute.xlu0 %2934
      %2936 = vrot.lane.b32.xlu0 %v2613, 109
      %v2937 = vpop.permute.xlu0 %2936
      %v2938 = vsel %vm347, %v2923, %v2931
      %v2939 = vsel %vm347, %v2925, %v2933
      %v2940 = vsel %vm347, %v2927, %v2935
      %v2941 = vsel %vm347, %v2929, %v2937
      %v2942 = vsel %vm347, %v2915, %v2923
      %v2943 = vsel %vm347, %v2917, %v2925
      %v2944 = vsel %vm347, %v2919, %v2927
      %v2945 = vsel %vm347, %v2921, %v2929
      %v2946 = vsel %vm347, %v2931, %v2915
      %v2947 = vsel %vm347, %v2933, %v2917
      %v2948 = vsel %vm347, %v2935, %v2919
      %v2949 = vsel %vm347, %v2937, %v2921
      %v2950 = vpack.c.bf16 %v2943, %v2942
      %v2951 = vpack.c.bf16 %v2939, %v2938
      %v2952 = vpack.c.bf16 %v2947, %v2946
      %v2953 = vpack.c.bf16 %v2945, %v2944
      %v2954 = vpack.c.bf16 %v2941, %v2940
      %v2955 = vpack.c.bf16 %v2949, %v2948
      %s2956 = scalar_lea.vmem %s1, 192
      %v2957 = vld [vmem:[%s2956] sm:$0xff]
      %v2958 = vld [vmem:[%s2956 + $0x8] sm:$0xf]
      %v2959 = vld [vmem:[%s2956 + $0xc] sm:$0xff]
      %v2960 = vld [vmem:[%s2956 + $0x14] sm:$0xf]
      %v2961 = vld [vmem:[%s2956 + $0x18] sm:$0xff]
      %v2962 = vld [vmem:[%s2956 + $0x20] sm:$0xf]
      %v2963 = vld [vmem:[%s2956 + $0x24] sm:$0xff]
      %v2964 = vld [vmem:[%s2956 + $0x2c] sm:$0xf]
      %s2965 = scalar_lea.vmem %s2, 128
      %v2966 = vld [vmem:[%s2965] sm:$0xff]
      %v2967 = vld [vmem:[%s2965 + $0x8] sm:$0xff]
      %v2968 = vld [vmem:[%s2965 + $0x10] sm:$0xff]
      %v2969 = vld [vmem:[%s2965 + $0x18] sm:$0xff]
      %2971 = vset.pattern.permute.xlu0 0
      %2972 = vperm.xlu0 %2971, %v2966
      %v2973 = vpop.permute.xlu0 %2972
      %2976 = vset.pattern.permute.xlu0 0
      %2977 = vperm.xlu0 %2976, %v2967
      %v2978 = vpop.permute.xlu0 %2977
      %2981 = vset.pattern.permute.xlu0 0
      %2982 = vperm.xlu0 %2981, %v2968
      %v2983 = vpop.permute.xlu0 %2982
      %2986 = vset.pattern.permute.xlu0 0
      %2987 = vperm.xlu0 %2986, %v2969
      %v2988 = vpop.permute.xlu0 %2987
      %v2998 = vunpack.c.l.b16 %v2957
      %v2999 = vunpack.c.h.b16 %v2957
      %v3000 = vunpack.c.l.b16 %v2958
      %v3001 = vunpack.c.l.b16 %v2959
      %v3002 = vunpack.c.h.b16 %v2959
      %v3003 = vunpack.c.l.b16 %v2960
      %v3004 = vunpack.c.l.b16 %v2961
      %v3005 = vunpack.c.h.b16 %v2961
      %v3006 = vunpack.c.l.b16 %v2962
      %v3007 = vunpack.c.l.b16 %v2963
      %v3008 = vunpack.c.h.b16 %v2963
      %v3009 = vunpack.c.l.b16 %v2964
      %v3010 = vpack.c.b16 %v3001, %v2998
      %v3011 = vpack.c.b16 %v3002, %v2999
      %v3012 = vpack.c.b16 %v3003, %v3000
      %v3013 = vpack.c.b16 %v3007, %v3004
      %v3014 = vpack.c.b16 %v3008, %v3005
      %v3015 = vpack.c.b16 %v3009, %v3006
      %v3021 = vsel %vm417, %v3012, 0
      %v3024 = vsel %vm417, %v3015, 0
      %3026 = vmatprep.subr.bf16.mxu0 %v2651
      %3027 = vmatpush1.bf16.msra.mxu0 %v2650
      %3028 = vmatprep.subr.bf16.mxu0 %v2654
      %3029 = vmatpush1.bf16.msra.mxu0 %v2653
      %3030 = vmatprep.subr.bf16.mxu0 %v2693
      %3031 = vmatpush1.bf16.msra.mxu0 %v2692
      %3032 = vmatprep.subr.bf16.mxu0 %v2696
      %3033 = vmatpush1.bf16.msra.mxu0 %v2695
      %3034 = vmatprep.subr.bf16.mxu0 %v2735
      %3035 = vmatpush1.bf16.msra.mxu0 %v2734
      %3036 = vmatprep.subr.bf16.mxu0 %v2738
      %3037 = vmatpush1.bf16.msra.mxu0 %v2737
      %3038 = vmatprep.subr.bf16.mxu0 %v2777
      %3039 = vmatpush1.bf16.msra.mxu0 %v2776
      %3040 = vmatprep.subr.bf16.mxu0 %v2780
      %3041 = vmatpush1.bf16.msra.mxu0 %v2779
      %3042 = vmatprep.subr.bf16.mxu0 %v2783
      %3043 = vmatpush1.bf16.msra.mxu0 %v2782
      %3044 = vmatprep.subr.bf16.mxu0 %v2786
      %3045 = vmatpush1.bf16.msra.mxu0 %v2785
      %3046 = vmatprep.subr.bf16.mxu0 %v2825
      %3047 = vmatpush1.bf16.msra.mxu0 %v2824
      %3048 = vmatprep.subr.bf16.mxu0 %v2828
      %3049 = vmatpush1.bf16.msra.mxu0 %v2827
      %3050 = vmatprep.subr.bf16.mxu0 %v2867
      %3051 = vmatpush1.bf16.msra.mxu0 %v2866
      %3052 = vmatprep.subr.bf16.mxu0 %v2870
      %3053 = vmatpush1.bf16.msra.mxu0 %v2869
      %3054 = vmatprep.subr.bf16.mxu0 %v2909
      %3055 = vmatpush1.bf16.msra.mxu0 %v2908
      %3056 = vmatprep.subr.bf16.mxu0 %v2912
      %3057 = vmatpush1.bf16.msra.mxu0 %v2911
      %3058 = vmatprep.mubr.bf16.mxu0 %v3011
      %3059 = vmatmul.mubr.bf16.gmra.mrb[0].mxu0 %v3010
      %v3060 = vpop.f32.mrb[0].mxu0
      %v3061 = vadd.f32 %v2973, %v3060
      %v3062 = vpop.f32.mrb[0].mxu0
      %v3063 = vadd.f32 %v2973, %v3062
      %v3064 = vpop.f32.mrb[0].mxu0
      %v3065 = vadd.f32 %v2978, %v3064
      %v3066 = vpop.f32.mrb[0].mxu0
      %v3067 = vadd.f32 %v2978, %v3066
      %3068 = vmatprep.mubr.bf16.mxu0 %v3014
      %3069 = vmatmul.mubr.bf16.gmra.mrb[0].mxu0 %v3013
      %v3070 = vpop.f32.mrb[0].mxu0
      %v3071 = vadd.f32 %v2983, %v3070
      %v3072 = vpop.f32.mrb[0].mxu0
      %v3073 = vadd.f32 %v2983, %v3072
      %v3074 = vpop.f32.mrb[0].mxu0
      %v3075 = vadd.f32 %v2988, %v3074
      %v3076 = vpop.f32.mrb[0].mxu0
      %v3077 = vadd.f32 %v2988, %v3076
      %3078 = vdwg.mxu0
      %3079 = vmatprep.subr.bf16.mxu0 %v2951
      %3080 = vmatpush1.bf16.msra.mxu0 %v2950
      %3081 = vmatprep.subr.bf16.mxu0 %v2954
      %3082 = vmatpush1.bf16.msra.mxu0 %v2953
      %3083 = vmatprep.subr.bf16.mxu0 0
      %3084 = vmatpush1.bf16.msra.mxu0 0
      %3085 = vmatprep.subr.bf16.mxu0 0
      %3086 = vmatpush1.bf16.msra.mxu0 0
      %3087 = vmatprep.subr.bf16.mxu0 0
      %3088 = vmatpush1.bf16.msra.mxu0 0
      %3089 = vmatprep.subr.bf16.mxu0 0
      %3090 = vmatpush1.bf16.msra.mxu0 0
      %3091 = vmatprep.subr.bf16.mxu0 0
      %3092 = vmatpush1.bf16.msra.mxu0 0
      %3093 = vmatprep.subr.bf16.mxu0 0
      %3094 = vmatpush1.bf16.msra.mxu0 0
      %3095 = vmatprep.subr.bf16.mxu0 0
      %3096 = vmatpush1.bf16.msra.mxu0 0
      %3097 = vmatprep.subr.bf16.mxu0 0
      %3098 = vmatpush1.bf16.msra.mxu0 0
      %3099 = vmatprep.subr.bf16.mxu0 0
      %3100 = vmatpush1.bf16.msra.mxu0 0
      %3101 = vmatprep.subr.bf16.mxu0 0
      %3102 = vmatpush1.bf16.msra.mxu0 0
      %3103 = vmatprep.subr.bf16.mxu0 0
      %3104 = vmatpush1.bf16.msra.mxu0 0
      %3105 = vmatprep.subr.bf16.mxu0 0
      %3106 = vmatpush1.bf16.msra.mxu0 0
      %3107 = vmatprep.subr.bf16.mxu0 0
      %3108 = vmatpush1.bf16.msra.mxu0 0
      %3109 = vmatprep.subr.bf16.mxu0 0
      %3110 = vmatpush1.bf16.msra.mxu0 0
      %3111 = vmatprep.mubr.bf16.mxu0 0
      %3112 = vmatmul.mubr.bf16.gmra.mrb[0].mxu0 %v3021
      %v3113 = vpop.f32.mrb[0].mxu0
      %v3114 = vadd.f32 %v3061, %v3113
      %v3115 = vpop.f32.mrb[0].mxu0
      %v3116 = vadd.f32 %v3063, %v3115
      %v3117 = vpop.f32.mrb[0].mxu0
      %v3118 = vadd.f32 %v3065, %v3117
      %v3119 = vpop.f32.mrb[0].mxu0
      %v3120 = vadd.f32 %v3067, %v3119
      %3121 = vmatprep.mubr.bf16.mxu0 0
      %3122 = vmatmul.mubr.bf16.gmra.mrb[0].mxu0 %v3024
      %v3123 = vpop.f32.mrb[0].mxu0
      %v3124 = vadd.f32 %v3071, %v3123
      %v3125 = vpop.f32.mrb[0].mxu0
      %v3126 = vadd.f32 %v3073, %v3125
      %v3127 = vpop.f32.mrb[0].mxu0
      %v3128 = vadd.f32 %v3075, %v3127
      %v3129 = vpop.f32.mrb[0].mxu0
      %v3130 = vadd.f32 %v3077, %v3129
      %3131 = vdwg.mxu0
      %3132 = vmatprep.subr.bf16.mxu0 0
      %3133 = vmatpush1.bf16.msra.mxu0 %v2652
      %3134 = vmatprep.subr.bf16.mxu0 0
      %3135 = vmatpush1.bf16.msra.mxu0 %v2655
      %3136 = vmatprep.subr.bf16.mxu0 0
      %3137 = vmatpush1.bf16.msra.mxu0 %v2694
      %3138 = vmatprep.subr.bf16.mxu0 0
      %3139 = vmatpush1.bf16.msra.mxu0 %v2697
      %3140 = vmatprep.subr.bf16.mxu0 0
      %3141 = vmatpush1.bf16.msra.mxu0 %v2736
      %3142 = vmatprep.subr.bf16.mxu0 0
      %3143 = vmatpush1.bf16.msra.mxu0 %v2739
      %3144 = vmatprep.subr.bf16.mxu0 0
      %3145 = vmatpush1.bf16.msra.mxu0 %v2778
      %3146 = vmatprep.subr.bf16.mxu0 0
      %3147 = vmatpush1.bf16.msra.mxu0 %v2781
      %3148 = vmatprep.subr.bf16.mxu0 0
      %3149 = vmatpush1.bf16.msra.mxu0 %v2784
      %3150 = vmatprep.subr.bf16.mxu0 0
      %3151 = vmatpush1.bf16.msra.mxu0 %v2787
      %3152 = vmatprep.subr.bf16.mxu0 0
      %3153 = vmatpush1.bf16.msra.mxu0 %v2826
      %3154 = vmatprep.subr.bf16.mxu0 0
      %3155 = vmatpush1.bf16.msra.mxu0 %v2829
      %3156 = vmatprep.subr.bf16.mxu0 0
      %3157 = vmatpush1.bf16.msra.mxu0 %v2868
      %3158 = vmatprep.subr.bf16.mxu0 0
      %3159 = vmatpush1.bf16.msra.mxu0 %v2871
      %3160 = vmatprep.subr.bf16.mxu0 0
      %3161 = vmatpush1.bf16.msra.mxu0 %v2910
      %3162 = vmatprep.subr.bf16.mxu0 0
      %3163 = vmatpush1.bf16.msra.mxu0 %v2913
      %3164 = vmatprep.mubr.bf16.mxu0 %v3011
      %3165 = vmatmul.mubr.bf16.gmra.mrb[0].mxu0 %v3010
      %v3166 = vpop.f32.mrb[0].mxu0
      %v3167 = vadd.f32 %v2973, %v3166
      %v3168 = vpop.f32.mrb[0].mxu0
      %v3169 = vpop.f32.mrb[0].mxu0
      %v3170 = vadd.f32 %v2978, %v3169
      %v3171 = vpop.f32.mrb[0].mxu0
      %3172 = vmatprep.mubr.bf16.mxu0 %v3014
      %3173 = vmatmul.mubr.bf16.gmra.mrb[0].mxu0 %v3013
      %v3174 = vpop.f32.mrb[0].mxu0
      %v3175 = vadd.f32 %v2983, %v3174
      %v3176 = vpop.f32.mrb[0].mxu0
      %v3177 = vpop.f32.mrb[0].mxu0
      %v3178 = vadd.f32 %v2988, %v3177
      %v3179 = vpop.f32.mrb[0].mxu0
      %3180 = vdwg.mxu0
      %3181 = vmatprep.subr.bf16.mxu0 0
      %3182 = vmatpush1.bf16.msra.mxu0 %v2952
      %3183 = vmatprep.subr.bf16.mxu0 0
      %3184 = vmatpush1.bf16.msra.mxu0 %v2955
      %3185 = vmatprep.subr.bf16.mxu0 0
      %3186 = vmatpush1.bf16.msra.mxu0 0
      %3187 = vmatprep.subr.bf16.mxu0 0
      %3188 = vmatpush1.bf16.msra.mxu0 0
      %3189 = vmatprep.subr.bf16.mxu0 0
      %3190 = vmatpush1.bf16.msra.mxu0 0
      %3191 = vmatprep.subr.bf16.mxu0 0
      %3192 = vmatpush1.bf16.msra.mxu0 0
      %3193 = vmatprep.subr.bf16.mxu0 0
      %3194 = vmatpush1.bf16.msra.mxu0 0
      %3195 = vmatprep.subr.bf16.mxu0 0
      %3196 = vmatpush1.bf16.msra.mxu0 0
      %3197 = vmatprep.subr.bf16.mxu0 0
      %3198 = vmatpush1.bf16.msra.mxu0 0
      %3199 = vmatprep.subr.bf16.mxu0 0
      %3200 = vmatpush1.bf16.msra.mxu0 0
      %3201 = vmatprep.subr.bf16.mxu0 0
      %3202 = vmatpush1.bf16.msra.mxu0 0
      %3203 = vmatprep.subr.bf16.mxu0 0
      %3204 = vmatpush1.bf16.msra.mxu0 0
      %3205 = vmatprep.subr.bf16.mxu0 0
      %3206 = vmatpush1.bf16.msra.mxu0 0
      %3207 = vmatprep.subr.bf16.mxu0 0
      %3208 = vmatpush1.bf16.msra.mxu0 0
      %3209 = vmatprep.subr.bf16.mxu0 0
      %3210 = vmatpush1.bf16.msra.mxu0 0
      %3211 = vmatprep.subr.bf16.mxu0 0
      %3212 = vmatpush1.bf16.msra.mxu0 0
      %3213 = vmatprep.mubr.bf16.mxu0 0
      %3214 = vmatmul.mubr.bf16.gmra.mrb[0].mxu0 %v3021
      %v3215 = vpop.f32.mrb[0].mxu0
      %v3216 = vadd.f32 %v3167, %v3215
      %v3217 = vpop.f32.mrb[0].mxu0
      %v3218 = vpop.f32.mrb[0].mxu0
      %v3219 = vadd.f32 %v3170, %v3218
      %v3220 = vpop.f32.mrb[0].mxu0
      %3221 = vmatprep.mubr.bf16.mxu0 0
      %3222 = vmatmul.mubr.bf16.gmra.mrb[0].mxu0 %v3024
      %v3223 = vpop.f32.mrb[0].mxu0
      %v3224 = vadd.f32 %v3175, %v3223
      %v3225 = vpop.f32.mrb[0].mxu0
      %v3226 = vpop.f32.mrb[0].mxu0
      %v3227 = vadd.f32 %v3178, %v3226
      %v3228 = vpop.f32.mrb[0].mxu0
      %3229 = vdwg.mxu0
      %v3230 = vmax.f32 %v3114, 0.0
      %v3231 = vmax.f32 %v3116, 0.0
      %v3232 = vmax.f32 %v3216, 0.0
      %v3233 = vmax.f32 %v3118, 0.0
      %v3234 = vmax.f32 %v3120, 0.0
      %v3235 = vmax.f32 %v3219, 0.0
      %v3236 = vmax.f32 %v3124, 0.0
      %v3237 = vmax.f32 %v3126, 0.0
      %v3238 = vmax.f32 %v3224, 0.0
      %v3239 = vmax.f32 %v3128, 0.0
      %v3240 = vmax.f32 %v3130, 0.0
      %v3241 = vmax.f32 %v3227, 0.0
      %v3242 = vmul.f32 %v3230, %v204
      %v3243 = vmul.f32 %v3231, %v208
      %v3244 = vmul.f32 %v3232, %v212
      %v3245 = vmul.f32 %v3233, %v204
      %v3246 = vmul.f32 %v3234, %v208
      %v3247 = vmul.f32 %v3235, %v212
      %v3248 = vmul.f32 %v3236, %v204
      %v3249 = vmul.f32 %v3237, %v208
      %v3250 = vmul.f32 %v3238, %v212
      %v3251 = vmul.f32 %v3239, %v204
      %v3252 = vmul.f32 %v3240, %v208
      %v3253 = vmul.f32 %v3241, %v212
      %3254 = vrot.lane.b32.xlu0 %v3242, 19
      %v3255 = vpop.permute.xlu0 %3254
      %3256 = vrot.lane.b32.xlu0 %v3245, 19
      %v3257 = vpop.permute.xlu0 %3256
      %3258 = vrot.lane.b32.xlu0 %v3248, 19
      %v3259 = vpop.permute.xlu0 %3258
      %3260 = vrot.lane.b32.xlu0 %v3251, 19
      %v3261 = vpop.permute.xlu0 %3260
      %3262 = vrot.lane.b32.xlu0 %v3243, 19
      %v3263 = vpop.permute.xlu0 %3262
      %3264 = vrot.lane.b32.xlu0 %v3246, 19
      %v3265 = vpop.permute.xlu0 %3264
      %3266 = vrot.lane.b32.xlu0 %v3249, 19
      %v3267 = vpop.permute.xlu0 %3266
      %3268 = vrot.lane.b32.xlu0 %v3252, 19
      %v3269 = vpop.permute.xlu0 %3268
      %3270 = vrot.lane.b32.xlu0 %v3244, 19
      %v3271 = vpop.permute.xlu0 %3270
      %3272 = vrot.lane.b32.xlu0 %v3247, 19
      %v3273 = vpop.permute.xlu0 %3272
      %3274 = vrot.lane.b32.xlu0 %v3250, 19
      %v3275 = vpop.permute.xlu0 %3274
      %3276 = vrot.lane.b32.xlu0 %v3253, 19
      %v3277 = vpop.permute.xlu0 %3276
      %v3278 = vsel %vm231, %v3263, %v3271
      %v3279 = vsel %vm231, %v3265, %v3273
      %v3280 = vsel %vm231, %v3267, %v3275
      %v3281 = vsel %vm231, %v3269, %v3277
      %v3282 = vsel %vm231, %v3255, %v3263
      %v3283 = vsel %vm231, %v3257, %v3265
      %v3284 = vsel %vm231, %v3259, %v3267
      %v3285 = vsel %vm231, %v3261, %v3269
      %v3286 = vsel %vm231, %v3271, %v3255
      %v3287 = vsel %vm231, %v3273, %v3257
      %v3288 = vsel %vm231, %v3275, %v3259
      %v3289 = vsel %vm231, %v3277, %v3261
      %v3290 = vpack.c.bf16 %v3287, %v3286
      %v3291 = vpack.c.bf16 %v3283, %v3282
      %v3292 = vpack.c.bf16 %v3279, %v3278
      %v3293 = vpack.c.bf16 %v3289, %v3288
      %v3294 = vpack.c.bf16 %v3285, %v3284
      %v3295 = vpack.c.bf16 %v3281, %v3280
      %3296 = vrot.lane.b32.xlu0 %v3242, 18
      %v3297 = vpop.permute.xlu0 %3296
      %3298 = vrot.lane.b32.xlu0 %v3245, 18
      %v3299 = vpop.permute.xlu0 %3298
      %3300 = vrot.lane.b32.xlu0 %v3248, 18
      %v3301 = vpop.permute.xlu0 %3300
      %3302 = vrot.lane.b32.xlu0 %v3251, 18
      %v3303 = vpop.permute.xlu0 %3302
      %3304 = vrot.lane.b32.xlu0 %v3243, 18
      %v3305 = vpop.permute.xlu0 %3304
      %3306 = vrot.lane.b32.xlu0 %v3246, 18
      %v3307 = vpop.permute.xlu0 %3306
      %3308 = vrot.lane.b32.xlu0 %v3249, 18
      %v3309 = vpop.permute.xlu0 %3308
      %3310 = vrot.lane.b32.xlu0 %v3252, 18
      %v3311 = vpop.permute.xlu0 %3310
      %3312 = vrot.lane.b32.xlu0 %v3244, 18
      %v3313 = vpop.permute.xlu0 %3312
      %3314 = vrot.lane.b32.xlu0 %v3247, 18
      %v3315 = vpop.permute.xlu0 %3314
      %3316 = vrot.lane.b32.xlu0 %v3250, 18
      %v3317 = vpop.permute.xlu0 %3316
      %3318 = vrot.lane.b32.xlu0 %v3253, 18
      %v3319 = vpop.permute.xlu0 %3318
      %v3320 = vsel %vm247, %v3305, %v3313
      %v3321 = vsel %vm247, %v3307, %v3315
      %v3322 = vsel %vm247, %v3309, %v3317
      %v3323 = vsel %vm247, %v3311, %v3319
      %v3324 = vsel %vm247, %v3297, %v3305
      %v3325 = vsel %vm247, %v3299, %v3307
      %v3326 = vsel %vm247, %v3301, %v3309
      %v3327 = vsel %vm247, %v3303, %v3311
      %v3328 = vsel %vm247, %v3313, %v3297
      %v3329 = vsel %vm247, %v3315, %v3299
      %v3330 = vsel %vm247, %v3317, %v3301
      %v3331 = vsel %vm247, %v3319, %v3303
      %v3332 = vpack.c.bf16 %v3329, %v3328
      %v3333 = vpack.c.bf16 %v3325, %v3324
      %v3334 = vpack.c.bf16 %v3321, %v3320
      %v3335 = vpack.c.bf16 %v3331, %v3330
      %v3336 = vpack.c.bf16 %v3327, %v3326
      %v3337 = vpack.c.bf16 %v3323, %v3322
      %3338 = vrot.lane.b32.xlu0 %v3242, 17
      %v3339 = vpop.permute.xlu0 %3338
      %3340 = vrot.lane.b32.xlu0 %v3245, 17
      %v3341 = vpop.permute.xlu0 %3340
      %3342 = vrot.lane.b32.xlu0 %v3248, 17
      %v3343 = vpop.permute.xlu0 %3342
      %3344 = vrot.lane.b32.xlu0 %v3251, 17
      %v3345 = vpop.permute.xlu0 %3344
      %3346 = vrot.lane.b32.xlu0 %v3243, 17
      %v3347 = vpop.permute.xlu0 %3346
      %3348 = vrot.lane.b32.xlu0 %v3246, 17
      %v3349 = vpop.permute.xlu0 %3348
      %3350 = vrot.lane.b32.xlu0 %v3249, 17
      %v3351 = vpop.permute.xlu0 %3350
      %3352 = vrot.lane.b32.xlu0 %v3252, 17
      %v3353 = vpop.permute.xlu0 %3352
      %3354 = vrot.lane.b32.xlu0 %v3244, 17
      %v3355 = vpop.permute.xlu0 %3354
      %3356 = vrot.lane.b32.xlu0 %v3247, 17
      %v3357 = vpop.permute.xlu0 %3356
      %3358 = vrot.lane.b32.xlu0 %v3250, 17
      %v3359 = vpop.permute.xlu0 %3358
      %3360 = vrot.lane.b32.xlu0 %v3253, 17
      %v3361 = vpop.permute.xlu0 %3360
      %v3362 = vsel %vm263, %v3347, %v3355
      %v3363 = vsel %vm263, %v3349, %v3357
      %v3364 = vsel %vm263, %v3351, %v3359
      %v3365 = vsel %vm263, %v3353, %v3361
      %v3366 = vsel %vm263, %v3339, %v3347
      %v3367 = vsel %vm263, %v3341, %v3349
      %v3368 = vsel %vm263, %v3343, %v3351
      %v3369 = vsel %vm263, %v3345, %v3353
      %v3370 = vsel %vm263, %v3355, %v3339
      %v3371 = vsel %vm263, %v3357, %v3341
      %v3372 = vsel %vm263, %v3359, %v3343
      %v3373 = vsel %vm263, %v3361, %v3345
      %v3374 = vpack.c.bf16 %v3371, %v3370
      %v3375 = vpack.c.bf16 %v3367, %v3366
      %v3376 = vpack.c.bf16 %v3363, %v3362
      %v3377 = vpack.c.bf16 %v3373, %v3372
      %v3378 = vpack.c.bf16 %v3369, %v3368
      %v3379 = vpack.c.bf16 %v3365, %v3364
      %3380 = vrot.lane.b32.xlu0 %v3242, 1
      %v3381 = vpop.permute.xlu0 %3380
      %3382 = vrot.lane.b32.xlu0 %v3245, 1
      %v3383 = vpop.permute.xlu0 %3382
      %3384 = vrot.lane.b32.xlu0 %v3248, 1
      %v3385 = vpop.permute.xlu0 %3384
      %3386 = vrot.lane.b32.xlu0 %v3251, 1
      %v3387 = vpop.permute.xlu0 %3386
      %3388 = vrot.lane.b32.xlu0 %v3243, 1
      %v3389 = vpop.permute.xlu0 %3388
      %3390 = vrot.lane.b32.xlu0 %v3246, 1
      %v3391 = vpop.permute.xlu0 %3390
      %3392 = vrot.lane.b32.xlu0 %v3249, 1
      %v3393 = vpop.permute.xlu0 %3392
      %3394 = vrot.lane.b32.xlu0 %v3252, 1
      %v3395 = vpop.permute.xlu0 %3394
      %3396 = vrot.lane.b32.xlu0 %v3244, 1
      %v3397 = vpop.permute.xlu0 %3396
      %3398 = vrot.lane.b32.xlu0 %v3247, 1
      %v3399 = vpop.permute.xlu0 %3398
      %3400 = vrot.lane.b32.xlu0 %v3250, 1
      %v3401 = vpop.permute.xlu0 %3400
      %3402 = vrot.lane.b32.xlu0 %v3253, 1
      %v3403 = vpop.permute.xlu0 %3402
      %v3404 = vsel %vm279, %v3389, %v3397
      %v3405 = vsel %vm279, %v3391, %v3399
      %v3406 = vsel %vm279, %v3393, %v3401
      %v3407 = vsel %vm279, %v3395, %v3403
      %v3408 = vsel %vm279, %v3381, %v3389
      %v3409 = vsel %vm279, %v3383, %v3391
      %v3410 = vsel %vm279, %v3385, %v3393
      %v3411 = vsel %vm279, %v3387, %v3395
      %v3412 = vsel %vm279, %v3397, %v3381
      %v3413 = vsel %vm279, %v3399, %v3383
      %v3414 = vsel %vm279, %v3401, %v3385
      %v3415 = vsel %vm279, %v3403, %v3387
      %v3416 = vpack.c.bf16 %v3413, %v3412
      %v3417 = vpack.c.bf16 %v3409, %v3408
      %v3418 = vpack.c.bf16 %v3405, %v3404
      %v3419 = vpack.c.bf16 %v3415, %v3414
      %v3420 = vpack.c.bf16 %v3411, %v3410
      %v3421 = vpack.c.bf16 %v3407, %v3406
      %v3422 = vpack.c.bf16 %v3245, %v3242
      %v3423 = vpack.c.bf16 %v3246, %v3243
      %v3424 = vpack.c.bf16 %v3247, %v3244
      %v3425 = vpack.c.bf16 %v3251, %v3248
      %v3426 = vpack.c.bf16 %v3252, %v3249
      %v3427 = vpack.c.bf16 %v3253, %v3250
      %3428 = vrot.lane.b32.xlu0 %v3242, 127
      %v3429 = vpop.permute.xlu0 %3428
      %3430 = vrot.lane.b32.xlu0 %v3245, 127
      %v3431 = vpop.permute.xlu0 %3430
      %3432 = vrot.lane.b32.xlu0 %v3248, 127
      %v3433 = vpop.permute.xlu0 %3432
      %3434 = vrot.lane.b32.xlu0 %v3251, 127
      %v3435 = vpop.permute.xlu0 %3434
      %3436 = vrot.lane.b32.xlu0 %v3243, 127
      %v3437 = vpop.permute.xlu0 %3436
      %3438 = vrot.lane.b32.xlu0 %v3246, 127
      %v3439 = vpop.permute.xlu0 %3438
      %3440 = vrot.lane.b32.xlu0 %v3249, 127
      %v3441 = vpop.permute.xlu0 %3440
      %3442 = vrot.lane.b32.xlu0 %v3252, 127
      %v3443 = vpop.permute.xlu0 %3442
      %3444 = vrot.lane.b32.xlu0 %v3244, 127
      %v3445 = vpop.permute.xlu0 %3444
      %3446 = vrot.lane.b32.xlu0 %v3247, 127
      %v3447 = vpop.permute.xlu0 %3446
      %3448 = vrot.lane.b32.xlu0 %v3250, 127
      %v3449 = vpop.permute.xlu0 %3448
      %3450 = vrot.lane.b32.xlu0 %v3253, 127
      %v3451 = vpop.permute.xlu0 %3450
      %v3452 = vsel %vm299, %v3437, %v3445
      %v3453 = vsel %vm299, %v3439, %v3447
      %v3454 = vsel %vm299, %v3441, %v3449
      %v3455 = vsel %vm299, %v3443, %v3451
      %v3456 = vsel %vm299, %v3429, %v3437
      %v3457 = vsel %vm299, %v3431, %v3439
      %v3458 = vsel %vm299, %v3433, %v3441
      %v3459 = vsel %vm299, %v3435, %v3443
      %v3460 = vsel %vm299, %v3445, %v3429
      %v3461 = vsel %vm299, %v3447, %v3431
      %v3462 = vsel %vm299, %v3449, %v3433
      %v3463 = vsel %vm299, %v3451, %v3435
      %v3464 = vpack.c.bf16 %v3457, %v3456
      %v3465 = vpack.c.bf16 %v3453, %v3452
      %v3466 = vpack.c.bf16 %v3461, %v3460
      %v3467 = vpack.c.bf16 %v3459, %v3458
      %v3468 = vpack.c.bf16 %v3455, %v3454
      %v3469 = vpack.c.bf16 %v3463, %v3462
      %3470 = vrot.lane.b32.xlu0 %v3242, 111
      %v3471 = vpop.permute.xlu0 %3470
      %3472 = vrot.lane.b32.xlu0 %v3245, 111
      %v3473 = vpop.permute.xlu0 %3472
      %3474 = vrot.lane.b32.xlu0 %v3248, 111
      %v3475 = vpop.permute.xlu0 %3474
      %3476 = vrot.lane.b32.xlu0 %v3251, 111
      %v3477 = vpop.permute.xlu0 %3476
      %3478 = vrot.lane.b32.xlu0 %v3243, 111
      %v3479 = vpop.permute.xlu0 %3478
      %3480 = vrot.lane.b32.xlu0 %v3246, 111
      %v3481 = vpop.permute.xlu0 %3480
      %3482 = vrot.lane.b32.xlu0 %v3249, 111
      %v3483 = vpop.permute.xlu0 %3482
      %3484 = vrot.lane.b32.xlu0 %v3252, 111
      %v3485 = vpop.permute.xlu0 %3484
      %3486 = vrot.lane.b32.xlu0 %v3244, 111
      %v3487 = vpop.permute.xlu0 %3486
      %3488 = vrot.lane.b32.xlu0 %v3247, 111
      %v3489 = vpop.permute.xlu0 %3488
      %3490 = vrot.lane.b32.xlu0 %v3250, 111
      %v3491 = vpop.permute.xlu0 %3490
      %3492 = vrot.lane.b32.xlu0 %v3253, 111
      %v3493 = vpop.permute.xlu0 %3492
      %v3494 = vsel %vm315, %v3479, %v3487
      %v3495 = vsel %vm315, %v3481, %v3489
      %v3496 = vsel %vm315, %v3483, %v3491
      %v3497 = vsel %vm315, %v3485, %v3493
      %v3498 = vsel %vm315, %v3471, %v3479
      %v3499 = vsel %vm315, %v3473, %v3481
      %v3500 = vsel %vm315, %v3475, %v3483
      %v3501 = vsel %vm315, %v3477, %v3485
      %v3502 = vsel %vm315, %v3487, %v3471
      %v3503 = vsel %vm315, %v3489, %v3473
      %v3504 = vsel %vm315, %v3491, %v3475
      %v3505 = vsel %vm315, %v3493, %v3477
      %v3506 = vpack.c.bf16 %v3499, %v3498
      %v3507 = vpack.c.bf16 %v3495, %v3494
      %v3508 = vpack.c.bf16 %v3503, %v3502
      %v3509 = vpack.c.bf16 %v3501, %v3500
      %v3510 = vpack.c.bf16 %v3497, %v3496
      %v3511 = vpack.c.bf16 %v3505, %v3504
      %3512 = vrot.lane.b32.xlu0 %v3242, 110
      %v3513 = vpop.permute.xlu0 %3512
      %3514 = vrot.lane.b32.xlu0 %v3245, 110
      %v3515 = vpop.permute.xlu0 %3514
      %3516 = vrot.lane.b32.xlu0 %v3248, 110
      %v3517 = vpop.permute.xlu0 %3516
      %3518 = vrot.lane.b32.xlu0 %v3251, 110
      %v3519 = vpop.permute.xlu0 %3518
      %3520 = vrot.lane.b32.xlu0 %v3243, 110
      %v3521 = vpop.permute.xlu0 %3520
      %3522 = vrot.lane.b32.xlu0 %v3246, 110
      %v3523 = vpop.permute.xlu0 %3522
      %3524 = vrot.lane.b32.xlu0 %v3249, 110
      %v3525 = vpop.permute.xlu0 %3524
      %3526 = vrot.lane.b32.xlu0 %v3252, 110
      %v3527 = vpop.permute.xlu0 %3526
      %3528 = vrot.lane.b32.xlu0 %v3244, 110
      %v3529 = vpop.permute.xlu0 %3528
      %3530 = vrot.lane.b32.xlu0 %v3247, 110
      %v3531 = vpop.permute.xlu0 %3530
      %3532 = vrot.lane.b32.xlu0 %v3250, 110
      %v3533 = vpop.permute.xlu0 %3532
      %3534 = vrot.lane.b32.xlu0 %v3253, 110
      %v3535 = vpop.permute.xlu0 %3534
      %v3536 = vsel %vm331, %v3521, %v3529
      %v3537 = vsel %vm331, %v3523, %v3531
      %v3538 = vsel %vm331, %v3525, %v3533
      %v3539 = vsel %vm331, %v3527, %v3535
      %v3540 = vsel %vm331, %v3513, %v3521
      %v3541 = vsel %vm331, %v3515, %v3523
      %v3542 = vsel %vm331, %v3517, %v3525
      %v3543 = vsel %vm331, %v3519, %v3527
      %v3544 = vsel %vm331, %v3529, %v3513
      %v3545 = vsel %vm331, %v3531, %v3515
      %v3546 = vsel %vm331, %v3533, %v3517
      %v3547 = vsel %vm331, %v3535, %v3519
      %v3548 = vpack.c.bf16 %v3541, %v3540
      %v3549 = vpack.c.bf16 %v3537, %v3536
      %v3550 = vpack.c.bf16 %v3545, %v3544
      %v3551 = vpack.c.bf16 %v3543, %v3542
      %v3552 = vpack.c.bf16 %v3539, %v3538
      %v3553 = vpack.c.bf16 %v3547, %v3546
      %3554 = vrot.lane.b32.xlu0 %v3242, 109
      %v3555 = vpop.permute.xlu0 %3554
      %3556 = vrot.lane.b32.xlu0 %v3245, 109
      %v3557 = vpop.permute.xlu0 %3556
      %3558 = vrot.lane.b32.xlu0 %v3248, 109
      %v3559 = vpop.permute.xlu0 %3558
      %3560 = vrot.lane.b32.xlu0 %v3251, 109
      %v3561 = vpop.permute.xlu0 %3560
      %3562 = vrot.lane.b32.xlu0 %v3243, 109
      %v3563 = vpop.permute.xlu0 %3562
      %3564 = vrot.lane.b32.xlu0 %v3246, 109
      %v3565 = vpop.permute.xlu0 %3564
      %3566 = vrot.lane.b32.xlu0 %v3249, 109
      %v3567 = vpop.permute.xlu0 %3566
      %3568 = vrot.lane.b32.xlu0 %v3252, 109
      %v3569 = vpop.permute.xlu0 %3568
      %3570 = vrot.lane.b32.xlu0 %v3244, 109
      %v3571 = vpop.permute.xlu0 %3570
      %3572 = vrot.lane.b32.xlu0 %v3247, 109
      %v3573 = vpop.permute.xlu0 %3572
      %3574 = vrot.lane.b32.xlu0 %v3250, 109
      %v3575 = vpop.permute.xlu0 %3574
      %3576 = vrot.lane.b32.xlu0 %v3253, 109
      %v3577 = vpop.permute.xlu0 %3576
      %v3578 = vsel %vm347, %v3563, %v3571
      %v3579 = vsel %vm347, %v3565, %v3573
      %v3580 = vsel %vm347, %v3567, %v3575
      %v3581 = vsel %vm347, %v3569, %v3577
      %v3582 = vsel %vm347, %v3555, %v3563
      %v3583 = vsel %vm347, %v3557, %v3565
      %v3584 = vsel %vm347, %v3559, %v3567
      %v3585 = vsel %vm347, %v3561, %v3569
      %v3586 = vsel %vm347, %v3571, %v3555
      %v3587 = vsel %vm347, %v3573, %v3557
      %v3588 = vsel %vm347, %v3575, %v3559
      %v3589 = vsel %vm347, %v3577, %v3561
      %v3590 = vpack.c.bf16 %v3583, %v3582
      %v3591 = vpack.c.bf16 %v3579, %v3578
      %v3592 = vpack.c.bf16 %v3587, %v3586
      %v3593 = vpack.c.bf16 %v3585, %v3584
      %v3594 = vpack.c.bf16 %v3581, %v3580
      %v3595 = vpack.c.bf16 %v3589, %v3588
      %s3596 = scalar_lea.vmem %s1, 240
      %v3597 = vld [vmem:[%s3596] sm:$0xff]
      %v3598 = vld [vmem:[%s3596 + $0x8] sm:$0xf]
      %v3599 = vld [vmem:[%s3596 + $0xc] sm:$0xff]
      %v3600 = vld [vmem:[%s3596 + $0x14] sm:$0xf]
      %v3601 = vld [vmem:[%s3596 + $0x18] sm:$0xff]
      %v3602 = vld [vmem:[%s3596 + $0x20] sm:$0xf]
      %v3603 = vld [vmem:[%s3596 + $0x24] sm:$0xff]
      %v3604 = vld [vmem:[%s3596 + $0x2c] sm:$0xf]
      %s3605 = scalar_lea.vmem %s2, 160
      %v3606 = vld [vmem:[%s3605] sm:$0xff]
      %v3607 = vld [vmem:[%s3605 + $0x8] sm:$0xff]
      %v3608 = vld [vmem:[%s3605 + $0x10] sm:$0xff]
      %v3609 = vld [vmem:[%s3605 + $0x18] sm:$0xff]
      %3611 = vset.pattern.permute.xlu0 0
      %3612 = vperm.xlu0 %3611, %v3606
      %v3613 = vpop.permute.xlu0 %3612
      %3616 = vset.pattern.permute.xlu0 0
      %3617 = vperm.xlu0 %3616, %v3607
      %v3618 = vpop.permute.xlu0 %3617
      %3620 = vset.pattern.permute.xlu0 0
      %3621 = vperm.xlu0 %3620, %v3608
      %v3622 = vpop.permute.xlu0 %3621
      %3624 = vset.pattern.permute.xlu0 0
      %3625 = vperm.xlu0 %3624, %v3609
      %v3626 = vpop.permute.xlu0 %3625
      %v3635 = vunpack.c.l.b16 %v3597
      %v3636 = vunpack.c.h.b16 %v3597
      %v3637 = vunpack.c.l.b16 %v3598
      %v3638 = vunpack.c.l.b16 %v3599
      %v3639 = vunpack.c.h.b16 %v3599
      %v3640 = vunpack.c.l.b16 %v3600
      %v3641 = vunpack.c.l.b16 %v3601
      %v3642 = vunpack.c.h.b16 %v3601
      %v3643 = vunpack.c.l.b16 %v3602
      %v3644 = vunpack.c.l.b16 %v3603
      %v3645 = vunpack.c.h.b16 %v3603
      %v3646 = vunpack.c.l.b16 %v3604
      %v3647 = vpack.c.b16 %v3638, %v3635
      %v3648 = vpack.c.b16 %v3639, %v3636
      %v3649 = vpack.c.b16 %v3640, %v3637
      %v3650 = vpack.c.b16 %v3644, %v3641
      %v3651 = vpack.c.b16 %v3645, %v3642
      %v3652 = vpack.c.b16 %v3646, %v3643
      %v3658 = vsel %vm417, %v3649, 0
      %v3661 = vsel %vm417, %v3652, 0
      %3663 = vmatprep.subr.bf16.mxu0 %v3291
      %3664 = vmatpush1.bf16.msra.mxu0 %v3290
      %3665 = vmatprep.subr.bf16.mxu0 %v3294
      %3666 = vmatpush1.bf16.msra.mxu0 %v3293
      %3667 = vmatprep.subr.bf16.mxu0 %v3333
      %3668 = vmatpush1.bf16.msra.mxu0 %v3332
      %3669 = vmatprep.subr.bf16.mxu0 %v3336
      %3670 = vmatpush1.bf16.msra.mxu0 %v3335
      %3671 = vmatprep.subr.bf16.mxu0 %v3375
      %3672 = vmatpush1.bf16.msra.mxu0 %v3374
      %3673 = vmatprep.subr.bf16.mxu0 %v3378
      %3674 = vmatpush1.bf16.msra.mxu0 %v3377
      %3675 = vmatprep.subr.bf16.mxu0 %v3417
      %3676 = vmatpush1.bf16.msra.mxu0 %v3416
      %3677 = vmatprep.subr.bf16.mxu0 %v3420
      %3678 = vmatpush1.bf16.msra.mxu0 %v3419
      %3679 = vmatprep.subr.bf16.mxu0 %v3423
      %3680 = vmatpush1.bf16.msra.mxu0 %v3422
      %3681 = vmatprep.subr.bf16.mxu0 %v3426
      %3682 = vmatpush1.bf16.msra.mxu0 %v3425
      %3683 = vmatprep.subr.bf16.mxu0 %v3465
      %3684 = vmatpush1.bf16.msra.mxu0 %v3464
      %3685 = vmatprep.subr.bf16.mxu0 %v3468
      %3686 = vmatpush1.bf16.msra.mxu0 %v3467
      %3687 = vmatprep.subr.bf16.mxu0 %v3507
      %3688 = vmatpush1.bf16.msra.mxu0 %v3506
      %3689 = vmatprep.subr.bf16.mxu0 %v3510
      %3690 = vmatpush1.bf16.msra.mxu0 %v3509
      %3691 = vmatprep.subr.bf16.mxu0 %v3549
      %3692 = vmatpush1.bf16.msra.mxu0 %v3548
      %3693 = vmatprep.subr.bf16.mxu0 %v3552
      %3694 = vmatpush1.bf16.msra.mxu0 %v3551
      %3695 = vmatprep.mubr.bf16.mxu0 %v3648
      %3696 = vmatmul.mubr.bf16.gmra.mrb[0].mxu0 %v3647
      %v3697 = vpop.f32.mrb[0].mxu0
      %v3698 = vadd.f32 %v3613, %v3697
      %v3699 = vpop.f32.mrb[0].mxu0
      %v3700 = vadd.f32 %v3613, %v3699
      %v3701 = vpop.f32.mrb[0].mxu0
      %v3702 = vpop.f32.mrb[0].mxu0
      %3703 = vmatprep.mubr.bf16.mxu0 %v3651
      %3704 = vmatmul.mubr.bf16.gmra.mrb[0].mxu0 %v3650
      %v3705 = vpop.f32.mrb[0].mxu0
      %v3706 = vpop.f32.mrb[0].mxu0
      %v3707 = vpop.f32.mrb[0].mxu0
      %v3708 = vpop.f32.mrb[0].mxu0
      %3709 = vdwg.mxu0
      %3710 = vmatprep.subr.bf16.mxu0 %v3591
      %3711 = vmatpush1.bf16.msra.mxu0 %v3590
      %3712 = vmatprep.subr.bf16.mxu0 %v3594
      %3713 = vmatpush1.bf16.msra.mxu0 %v3593
      %3714 = vmatprep.subr.bf16.mxu0 0
      %3715 = vmatpush1.bf16.msra.mxu0 0
      %3716 = vmatprep.subr.bf16.mxu0 0
      %3717 = vmatpush1.bf16.msra.mxu0 0
      %3718 = vmatprep.subr.bf16.mxu0 0
      %3719 = vmatpush1.bf16.msra.mxu0 0
      %3720 = vmatprep.subr.bf16.mxu0 0
      %3721 = vmatpush1.bf16.msra.mxu0 0
      %3722 = vmatprep.subr.bf16.mxu0 0
      %3723 = vmatpush1.bf16.msra.mxu0 0
      %3724 = vmatprep.subr.bf16.mxu0 0
      %3725 = vmatpush1.bf16.msra.mxu0 0
      %3726 = vmatprep.subr.bf16.mxu0 0
      %3727 = vmatpush1.bf16.msra.mxu0 0
      %3728 = vmatprep.subr.bf16.mxu0 0
      %3729 = vmatpush1.bf16.msra.mxu0 0
      %3730 = vmatprep.subr.bf16.mxu0 0
      %3731 = vmatpush1.bf16.msra.mxu0 0
      %3732 = vmatprep.subr.bf16.mxu0 0
      %3733 = vmatpush1.bf16.msra.mxu0 0
      %3734 = vmatprep.subr.bf16.mxu0 0
      %3735 = vmatpush1.bf16.msra.mxu0 0
      %3736 = vmatprep.subr.bf16.mxu0 0
      %3737 = vmatpush1.bf16.msra.mxu0 0
      %3738 = vmatprep.subr.bf16.mxu0 0
      %3739 = vmatpush1.bf16.msra.mxu0 0
      %3740 = vmatprep.subr.bf16.mxu0 0
      %3741 = vmatpush1.bf16.msra.mxu0 0
      %3742 = vmatprep.mubr.bf16.mxu0 0
      %3743 = vmatmul.mubr.bf16.gmra.mrb[0].mxu0 %v3658
      %v3744 = vpop.f32.mrb[0].mxu0
      %v3745 = vadd.f32 %v3698, %v3744
      %v3746 = vpop.f32.mrb[0].mxu0
      %v3747 = vadd.f32 %v3700, %v3746
      %v3748 = vpop.f32.mrb[0].mxu0
      %v3749 = vpop.f32.mrb[0].mxu0
      %3750 = vmatprep.mubr.bf16.mxu0 0
      %3751 = vmatmul.mubr.bf16.gmra.mrb[0].mxu0 %v3661
      %v3752 = vpop.f32.mrb[0].mxu0
      %v3753 = vpop.f32.mrb[0].mxu0
      %v3754 = vpop.f32.mrb[0].mxu0
      %v3755 = vpop.f32.mrb[0].mxu0
      %3756 = vdwg.mxu0
      %3757 = vmatprep.subr.bf16.mxu0 0
      %3758 = vmatpush1.bf16.msra.mxu0 %v3292
      %3759 = vmatprep.subr.bf16.mxu0 0
      %3760 = vmatpush1.bf16.msra.mxu0 %v3295
      %3761 = vmatprep.subr.bf16.mxu0 0
      %3762 = vmatpush1.bf16.msra.mxu0 %v3334
      %3763 = vmatprep.subr.bf16.mxu0 0
      %3764 = vmatpush1.bf16.msra.mxu0 %v3337
      %3765 = vmatprep.subr.bf16.mxu0 0
      %3766 = vmatpush1.bf16.msra.mxu0 %v3376
      %3767 = vmatprep.subr.bf16.mxu0 0
      %3768 = vmatpush1.bf16.msra.mxu0 %v3379
      %3769 = vmatprep.subr.bf16.mxu0 0
      %3770 = vmatpush1.bf16.msra.mxu0 %v3418
      %3771 = vmatprep.subr.bf16.mxu0 0
      %3772 = vmatpush1.bf16.msra.mxu0 %v3421
      %3773 = vmatprep.subr.bf16.mxu0 0
      %3774 = vmatpush1.bf16.msra.mxu0 %v3424
      %3775 = vmatprep.subr.bf16.mxu0 0
      %3776 = vmatpush1.bf16.msra.mxu0 %v3427
      %3777 = vmatprep.subr.bf16.mxu0 0
      %3778 = vmatpush1.bf16.msra.mxu0 %v3466
      %3779 = vmatprep.subr.bf16.mxu0 0
      %3780 = vmatpush1.bf16.msra.mxu0 %v3469
      %3781 = vmatprep.subr.bf16.mxu0 0
      %3782 = vmatpush1.bf16.msra.mxu0 %v3508
      %3783 = vmatprep.subr.bf16.mxu0 0
      %3784 = vmatpush1.bf16.msra.mxu0 %v3511
      %3785 = vmatprep.subr.bf16.mxu0 0
      %3786 = vmatpush1.bf16.msra.mxu0 %v3550
      %3787 = vmatprep.subr.bf16.mxu0 0
      %3788 = vmatpush1.bf16.msra.mxu0 %v3553
      %3789 = vmatprep.mubr.bf16.mxu0 %v3648
      %3790 = vmatmul.mubr.bf16.gmra.mrb[0].mxu0 %v3647
      %v3791 = vpop.f32.mrb[0].mxu0
      %v3792 = vadd.f32 %v3613, %v3791
      %v3793 = vpop.f32.mrb[0].mxu0
      %v3794 = vpop.f32.mrb[0].mxu0
      %v3795 = vpop.f32.mrb[0].mxu0
      %3796 = vmatprep.mubr.bf16.mxu0 %v3651
      %3797 = vmatmul.mubr.bf16.gmra.mrb[0].mxu0 %v3650
      %v3798 = vpop.f32.mrb[0].mxu0
      %v3799 = vpop.f32.mrb[0].mxu0
      %v3800 = vpop.f32.mrb[0].mxu0
      %v3801 = vpop.f32.mrb[0].mxu0
      %3802 = vdwg.mxu0
      %3803 = vmatprep.subr.bf16.mxu0 0
      %3804 = vmatpush1.bf16.msra.mxu0 %v3592
      %3805 = vmatprep.subr.bf16.mxu0 0
      %3806 = vmatpush1.bf16.msra.mxu0 %v3595
      %3807 = vmatprep.subr.bf16.mxu0 0
      %3808 = vmatpush1.bf16.msra.mxu0 0
      %3809 = vmatprep.subr.bf16.mxu0 0
      %3810 = vmatpush1.bf16.msra.mxu0 0
      %3811 = vmatprep.subr.bf16.mxu0 0
      %3812 = vmatpush1.bf16.msra.mxu0 0
      %3813 = vmatprep.subr.bf16.mxu0 0
      %3814 = vmatpush1.bf16.msra.mxu0 0
      %3815 = vmatprep.subr.bf16.mxu0 0
      %3816 = vmatpush1.bf16.msra.mxu0 0
      %3817 = vmatprep.subr.bf16.mxu0 0
      %3818 = vmatpush1.bf16.msra.mxu0 0
      %3819 = vmatprep.subr.bf16.mxu0 0
      %3820 = vmatpush1.bf16.msra.mxu0 0
      %3821 = vmatprep.subr.bf16.mxu0 0
      %3822 = vmatpush1.bf16.msra.mxu0 0
      %3823 = vmatprep.subr.bf16.mxu0 0
      %3824 = vmatpush1.bf16.msra.mxu0 0
      %3825 = vmatprep.subr.bf16.mxu0 0
      %3826 = vmatpush1.bf16.msra.mxu0 0
      %3827 = vmatprep.subr.bf16.mxu0 0
      %3828 = vmatpush1.bf16.msra.mxu0 0
      %3829 = vmatprep.subr.bf16.mxu0 0
      %3830 = vmatpush1.bf16.msra.mxu0 0
      %3831 = vmatprep.subr.bf16.mxu0 0
      %3832 = vmatpush1.bf16.msra.mxu0 0
      %3833 = vmatprep.subr.bf16.mxu0 0
      %3834 = vmatpush1.bf16.msra.mxu0 0
      %3835 = vmatprep.mubr.bf16.mxu0 0
      %3836 = vmatmul.mubr.bf16.gmra.mrb[0].mxu0 %v3658
      %v3837 = vpop.f32.mrb[0].mxu0
      %v3838 = vadd.f32 %v3792, %v3837
      %v3839 = vpop.f32.mrb[0].mxu0
      %v3840 = vpop.f32.mrb[0].mxu0
      %v3841 = vpop.f32.mrb[0].mxu0
      %3842 = vmatprep.mubr.bf16.mxu0 0
      %3843 = vmatmul.mubr.bf16.gmra.mrb[0].mxu0 %v3661
      %v3844 = vpop.f32.mrb[0].mxu0
      %v3845 = vpop.f32.mrb[0].mxu0
      %v3846 = vpop.f32.mrb[0].mxu0
      %v3847 = vpop.f32.mrb[0].mxu0
      %3848 = vdwg.mxu0
      %v3849 = vtanh.pop %v3745
      %v3850 = vtanh.pop %v3747
      %v3851 = vtanh.pop %v3838
      %v3852 = vmul.f32 %v3849, 3.1415927
      %v3853 = vmul.f32 %v3850, 3.1415927
      %v3854 = vmul.f32 %v3851, 3.1415927
      %v3855 = vmul.f32 %v3852, %v204
      %v3856 = vmul.f32 %v3853, %v208
      %v3857 = vmul.f32 %v3854, %v212
      %3858 = vst [vmem:[%s197] sm:$0xff] %v3855
      %3859 = vst [vmem:[%s197 + $0x8] sm:$0xff] %v3856
      %3860 = vst [vmem:[%s197 + $0x10] sm:$0xff] %v3857
      %p3861 = scmp.lt.s32.totalorder %s15, 1
      %s3862 = scalar_select %p3861, %s15, 1
      %s3863 = smul.addr %s3862, 3
      %s3864 = smul.addr %s3863, 8
      %s3865 = scalar_lea.vmem %s4, %s3864
      // Predicated region
      $region37: #{generator_forward.1} parent=35 // pred_check
        %p3866 = pneg %p122
      $region38: #{generator_forward.1} parent=35 // pred_check_branch
        %3868 = sbr.rel (%p3866) target = $region40
      $region39: #{generator_forward.1} parent=35 // pred_region
        _
      $region40: #{generator_forward.1} parent=35 // pred_fallthru
        _
    $region36: #{generator_forward.1} parent=5 // pred_fallthru
      _
    %p3869 = scmp.le.s32.totalorder 2, %s10
    // Predicated region
    $region41: #{generator_forward.1} parent=5 // pred_check
      %p3870 = pneg %p3869
    $region42: #{generator_forward.1} parent=5 // pred_check_branch
      %3872 = sbr.rel (%p3870) target = $region44
    $region43: #{generator_forward.1} parent=5 // pred_region
      %s3873 = ssub.s32 %s10, 2
      // Predicated region
      $region45: #{generator_forward.1} parent=43 // pred_check
        %p3874 = pneg %p128
      $region46: #{generator_forward.1} parent=43 // pred_check_branch
        %3876 = sbr.rel (%p3874) target = $region48
      $region47: #{generator_forward.1} parent=43 // pred_region
        %p3877 = scmp.lt.s32.totalorder %s16, 1
        %s3878 = scalar_select %p3877, %s16, 1
        %s3879 = smul.addr %s3878, 3
        %s3880 = smul.addr %s3879, 8
        %s3881 = scalar_lea.vmem %s4, %s3880
      $region48: #{generator_forward.1} parent=43 // pred_fallthru
        _
    $region44: #{generator_forward.1} parent=5 // pred_fallthru
      _
  $region6: #{generator_forward.1} parent=0 // loop_footer
    %s14 = sadd.s32 1, %s10
  $region7: #{generator_forward.1} parent=0 // loop_footer_branch
    %9 = sbr.rel target = $region3
  $region8: #{generator_forward.1} parent=0 // loop_exit
    _

</llo_original>
